<compile_context>
chip_gen: v7x
topology: tpu7x:2x2x1
jax: 0.10.0
libtpu: 0.0.40
codegen_flags: <defaults>
</compile_context>

<pallas_src>
import functools
import math

import jax
import jax.numpy as jnp
from jax.experimental import pallas as pl
from jax.experimental.pallas import tpu as pltpu


# ----------------------------------------------------------------------------
# In-kernel helpers (traced inside the Pallas kernel bodies).
# ----------------------------------------------------------------------------
def _layer_norm(v, g, b):
    # v: (rows, D) f32; g, b: (1, D) f32.  Biased variance + eps=1e-5 (PyTorch default).
    mu = jnp.mean(v, axis=-1, keepdims=True)
    var = jnp.mean(jnp.square(v - mu), axis=-1, keepdims=True)
    return (v - mu) * jax.lax.rsqrt(var + 1e-5) * g + b


def _attn_heads(q, k, v, num_heads, head_dim):
    """Multi-head attention core for ONE batch row.

    q: (Lq, H*hd) f32 (softmax scale pre-folded), k/v: (Lk, H*hd) f32.
    Returns the per-head contexts stacked on the lane axis, (Lq, H*hd) f32, so the
    caller can apply a single full-depth output-projection matmul for all heads
    (and all batch rows) at once.
    """
    dn = (((1,), (1,)), ((), ()))          # q @ k^T without an explicit transpose
    ctxs = []
    for h in range(num_heads):             # static unroll; heads only mix in out-proj
        sl = slice(h * head_dim, (h + 1) * head_dim)
        qh = q[:, sl].astype(jnp.bfloat16)
        kh = k[:, sl].astype(jnp.bfloat16)
        vh = v[:, sl].astype(jnp.bfloat16)
        s = jax.lax.dot_general(qh, kh, dn, preferred_element_type=jnp.float32)
        s = s - jnp.max(s, axis=-1, keepdims=True)
        e = jnp.exp(s)
        # approx reciprocal runs on the EUP slot; probabilities are normalized to
        # ~1e-4 relative error (deliberate, eval-only deviation from exact softmax).
        p = e * pl.reciprocal(jnp.sum(e, axis=-1, keepdims=True), approx=True)
        ctxs.append(jnp.dot(p.astype(jnp.bfloat16), vh,
                            preferred_element_type=jnp.float32))
    return ctxs[0] if num_heads == 1 else jnp.concatenate(ctxs, axis=-1)


# ----------------------------------------------------------------------------
# Luna encoder block kernel: one batch TILE per grid step ("parallel").
# ----------------------------------------------------------------------------
def luna_block_kernel(x_ref, mem_ref,
                      w_qp, b_qp, w_kp, b_kp, w_vp, b_vp, w_op, b_op,
                      w_qu, b_qu, w_ku, b_ku, w_vu, b_vu, w_ou, b_ou,
                      g_mem, be_mem, g1, be1,
                      w_ff1, b_ff1, w_ff2, b_ff2, g2, be2,
                      xo_ref, memo_ref,
                      *, num_heads, head_dim, seq_len, mem_len, batch_tile,
                      ffn_row_chunk):
    bt, S, M = batch_tile, seq_len, mem_len
    D = x_ref.shape[1]
    scale = 1.0 / math.sqrt(head_dim)

    x2 = x_ref[...]                      # (bt*S, D) bf16, batch folded into rows
    m2 = mem_ref[...]                    # (M, D) shared (first block) or (bt*M, D)
    shared_mem = (m2.shape[0] != bt * M)

    # --- projections: batch-folded rows -> one MXU matmul each -------------------
    # qkv_dim is not a multiple of 128 at this config, so K/V/Q projections stay
    # separate (a fused wide matmul would force intra-vreg lane slices on the
    # 32-wide segments); fuse again once qkv_dim % 128 == 0.
    k_p = jnp.dot(x2, w_kp[...], preferred_element_type=jnp.float32) + b_kp[...]
    v_p = jnp.dot(x2, w_vp[...], preferred_element_type=jnp.float32) + b_vp[...]
    q_u = (jnp.dot(x2, w_qu[...], preferred_element_type=jnp.float32) + b_qu[...]) * scale
    q_p = (jnp.dot(m2, w_qp[...], preferred_element_type=jnp.float32) + b_qp[...]) * scale

    # --- pack attention: memory queries attend over the sequence ------------------
    ctx_p = []
    for b in range(bt):                  # attention is per batch row (static loop)
        qb = q_p if shared_mem else q_p[b * M:(b + 1) * M]
        ctx_p.append(_attn_heads(qb, k_p[b * S:(b + 1) * S], v_p[b * S:(b + 1) * S],
                                 num_heads, head_dim))
    ctx_p = ctx_p[0] if bt == 1 else jnp.concatenate(ctx_p, axis=0)       # (bt*M, H*hd)
    packed = jnp.dot(ctx_p.astype(jnp.bfloat16), w_op[...],
                     preferred_element_type=jnp.float32) + b_op[...]      # (bt*M, D)

    mem_res = m2.astype(jnp.float32)
    if shared_mem:                       # broadcast the shared memory across batch rows
        mem_res = jnp.concatenate([mem_res] * bt, axis=0)
    mem_out = _layer_norm(mem_res + packed, g_mem[...], be_mem[...])      # (bt*M, D)

    # --- unpack attention: sequence queries attend over the packed context --------
    # TODO(synk): K/V come from the pre-LayerNorm `packed` (Luna-paper semantics);
    #             verify against the original LunaBlock if its source becomes available.
    pk = packed.astype(jnp.bfloat16)
    k_u = jnp.dot(pk, w_ku[...], preferred_element_type=jnp.float32) + b_ku[...]
    v_u = jnp.dot(pk, w_vu[...], preferred_element_type=jnp.float32) + b_vu[...]
    ctx_u = []
    for b in range(bt):
        ctx_u.append(_attn_heads(q_u[b * S:(b + 1) * S],
                                 k_u[b * M:(b + 1) * M], v_u[b * M:(b + 1) * M],
                                 num_heads, head_dim))
    ctx_u = ctx_u[0] if bt == 1 else jnp.concatenate(ctx_u, axis=0)       # (bt*S, H*hd)
    attended = jnp.dot(ctx_u.astype(jnp.bfloat16), w_ou[...],
                       preferred_element_type=jnp.float32) + b_ou[...]    # (bt*S, D)

    x1 = _layer_norm(x2.astype(jnp.float32) + attended, g1[...], be1[...])

    # --- FFN, chunked over folded rows so the (rows, mlp) f32 hidden stays bounded
    #     (single chunk at this toy size; matters for VMEM at real LRA sizes on v7x).
    n_rows = bt * S
    out_rows = []
    for r0 in range(0, n_rows, ffn_row_chunk):
        x1c = x1[r0:r0 + ffn_row_chunk]
        h = jnp.maximum(
            jnp.dot(x1c.astype(jnp.bfloat16), w_ff1[...],
                    preferred_element_type=jnp.float32) + b_ff1[...], 0.0)
        ff = jnp.dot(h.astype(jnp.bfloat16), w_ff2[...],
                     preferred_element_type=jnp.float32) + b_ff2[...]
        out_rows.append(_layer_norm(x1c + ff, g2[...], be2[...]))
    x_out = out_rows[0] if len(out_rows) == 1 else jnp.concatenate(out_rows, axis=0)

    xo_ref[...] = x_out.astype(xo_ref.dtype)      # bf16 writeback (halves store traffic)
    memo_ref[...] = mem_out.astype(memo_ref.dtype)


def luna_block(x_rows, mem_rows, params, num_heads, seq_len, mem_len, batch_tile=None):
    BS, D = x_rows.shape
    B = BS // seq_len
    qkv_dim = params[0].shape[1]          # w_qp: (D, qkv)
    head_dim = qkv_dim // num_heads
    mlp_dim = params[20].shape[1]         # w_ff1: (D, mlp)

    # Batch tile: fold as many batch rows as reasonable into one grid step (per review).
    # For v7x at larger B, choose batch_tile <= B // 4 so both TensorCores get >=2 steps.
    if batch_tile is None:
        batch_tile = min(B, 8)
        while B % batch_tile:
            batch_tile -= 1
    bt = batch_tile
    nb = B // bt
    ffn_row_chunk = min(bt * seq_len, 512)

    mem_is_per_batch = (mem_rows.shape[0] == B * mem_len)
    if mem_is_per_batch:
        mem_spec = pl.BlockSpec((bt * mem_len, D), lambda b: (b, 0))
    else:
        # shared memory: (M, D) parameter read via a constant index_map (no broadcast in HBM)
        mem_spec = pl.BlockSpec((mem_len, D), lambda b: (0, 0))

    # Weight blocks use a constant index_map -> DMA'd once, no re-fetch across steps.
    weight_specs = [pl.BlockSpec(p.shape, lambda b, n=p.ndim: (0,) * n) for p in params]

    # VMEM budget derived from the actual block footprint (double-buffered I/O blocks +
    # weights + f32 intermediates), with headroom; capped below v7x's 64 MiB physical VMEM.
    weight_bytes = sum(int(p.size) * p.dtype.itemsize for p in params)
    mem_block_rows = bt * mem_len if mem_is_per_batch else mem_len
    in_block_bytes = 2 * (bt * seq_len + mem_block_rows) * D
    out_block_bytes = 2 * (bt * seq_len + bt * mem_len) * D
    rows = bt * (seq_len + mem_len)
    inter_bytes = (4 * rows * 6 * max(D, qkv_dim)
                   + 4 * ffn_row_chunk * mlp_dim
                   + 4 * 2 * num_heads * seq_len * mem_len)
    vmem_limit = int(min(40 << 20,
                         max(16 << 20,
                             2 * (weight_bytes + in_block_bytes + out_block_bytes)
                             + inter_bytes + (2 << 20))))

    kernel = functools.partial(luna_block_kernel, num_heads=num_heads, head_dim=head_dim,
                               seq_len=seq_len, mem_len=mem_len, batch_tile=bt,
                               ffn_row_chunk=ffn_row_chunk)

    x_out, mem_out = pl.pallas_call(
        kernel,
        grid=(nb,),
        in_specs=[pl.BlockSpec((bt * seq_len, D), lambda b: (b, 0)), mem_spec] + weight_specs,
        out_specs=[pl.BlockSpec((bt * seq_len, D), lambda b: (b, 0)),
                   pl.BlockSpec((bt * mem_len, D), lambda b: (b, 0))],
        out_shape=[jax.ShapeDtypeStruct((B * seq_len, D), jnp.bfloat16),
                   jax.ShapeDtypeStruct((B * mem_len, D), jnp.bfloat16)],
        compiler_params=pltpu.CompilerParams(
            dimension_semantics=("parallel",),
            vmem_limit_bytes=vmem_limit),
    )(x_rows, mem_rows, *params)
    return x_out, mem_out


# ----------------------------------------------------------------------------
# Classifier: ONE pallas_call over the whole batch (weights DMA'd once, B-row matmuls).
# ----------------------------------------------------------------------------
def classifier_kernel(x_ref, w1, b1, w2, b2, out_ref, *, seq_len):
    BS, D = x_ref.shape
    B = BS // seq_len
    x = x_ref[...].astype(jnp.float32)                    # (B*S, D)
    pooled = jnp.concatenate(
        [jnp.mean(x[b * seq_len:(b + 1) * seq_len], axis=0, keepdims=True)
         for b in range(B)], axis=0)                      # (B, D) mean-pool per batch row
    h = jnp.maximum(
        jnp.dot(pooled.astype(jnp.bfloat16), w1[...],
                preferred_element_type=jnp.float32) + b1[...], 0.0)
    logits = jnp.dot(h.astype(jnp.bfloat16), w2[...],
                     preferred_element_type=jnp.float32) + b2[...]   # (B, Cpad) lane-dense
    out_ref[...] = logits.astype(out_ref.dtype)


def classifier(x_rows, cls_params, classes, seq_len):
    BS, _ = x_rows.shape
    B = BS // seq_len
    w1, b1, w2p, b2p = cls_params        # pre-padded / pre-cast once at param-prep time
    cpad = w2p.shape[1]
    out = pl.pallas_call(
        functools.partial(classifier_kernel, seq_len=seq_len),
        out_shape=jax.ShapeDtypeStruct((B, cpad), jnp.float32),
    )(x_rows, w1, b1, w2p, b2p)
    return out[:, :classes]


# ----------------------------------------------------------------------------
# Parameter initialization (deterministic, synthetic weights) + kernel packing.
# ----------------------------------------------------------------------------
def _dense(key, din, dout):
    w = jax.random.normal(key, (din, dout), jnp.float32) * (1.0 / math.sqrt(din))
    b = jnp.zeros((1, dout), jnp.float32)
    return w, b


def init_block_params(key, hidden_dim, qkv_dim, mlp_dim):
    keys = jax.random.split(key, 10)
    wqp, bqp = _dense(keys[0], hidden_dim, qkv_dim)
    wkp, bkp = _dense(keys[1], hidden_dim, qkv_dim)
    wvp, bvp = _dense(keys[2], hidden_dim, qkv_dim)
    wop, bop = _dense(keys[3], qkv_dim, hidden_dim)
    wqu, bqu = _dense(keys[4], hidden_dim, qkv_dim)
    wku, bku = _dense(keys[5], hidden_dim, qkv_dim)
    wvu, bvu = _dense(keys[6], hidden_dim, qkv_dim)
    wou, bou = _dense(keys[7], qkv_dim, hidden_dim)
    w_ff1, b_ff1 = _dense(keys[8], hidden_dim, mlp_dim)
    w_ff2, b_ff2 = _dense(keys[9], mlp_dim, hidden_dim)
    ones = jnp.ones((1, hidden_dim), jnp.float32)
    zeros = jnp.zeros((1, hidden_dim), jnp.float32)
    return (wqp, bqp, wkp, bkp, wvp, bvp, wop, bop,
            wqu, bqu, wku, bku, wvu, bvu, wou, bou,
            ones, zeros, ones, zeros,
            w_ff1, b_ff1, w_ff2, b_ff2, ones, zeros)


def prepare_block_params(raw):
    """One-time packing: cast matmul weights to bf16 (biases / LayerNorm stay f32)."""
    (wqp, bqp, wkp, bkp, wvp, bvp, wop, bop,
     wqu, bqu, wku, bku, wvu, bvu, wou, bou,
     g_mem, be_mem, g1, be1,
     w_ff1, b_ff1, w_ff2, b_ff2, g2, be2) = raw
    bf = jnp.bfloat16
    return (wqp.astype(bf), bqp, wkp.astype(bf), bkp, wvp.astype(bf), bvp,
            wop.astype(bf), bop,
            wqu.astype(bf), bqu, wku.astype(bf), bku, wvu.astype(bf), bvu,
            wou.astype(bf), bou,
            g_mem, be_mem, g1, be1,
            w_ff1.astype(bf), b_ff1, w_ff2.astype(bf), b_ff2, g2, be2)


def prepare_classifier_params(w1, b1, w2, b2, classes):
    """One-time packing: bf16 matmul weights, logits padded to a lane-dense 128 multiple."""
    mlp = w1.shape[1]
    cpad = pl.cdiv(classes, 128) * 128
    w2p = jnp.zeros((mlp, cpad), jnp.float32).at[:, :classes].set(w2)
    b2p = jnp.zeros((1, cpad), jnp.float32).at[:, :classes].set(b2)
    return (w1.astype(jnp.bfloat16), b1, w2p.astype(jnp.bfloat16), b2p)


# ----------------------------------------------------------------------------
# Full model forward.
# ----------------------------------------------------------------------------
def luna_classifier_forward(ids, model_params, num_heads):
    emb_table = model_params["emb_table"]      # (vocab, D)
    pos_emb = model_params["pos_emb"]          # (S, D)
    B, S = ids.shape
    D = emb_table.shape[1]
    M = model_params["mem"].shape[1]

    # TEmbedding: token lookup + learned positional embedding (gather kept as XLA glue).
    # TODO(synk): exact TEmbedding source not provided; lookup + pos-emb assumed.
    x = (jnp.take(emb_table, ids, axis=0) + pos_emb[None]).astype(jnp.bfloat16)
    x_rows = x.reshape(B * S, D)               # fold batch into rows (free HBM reshape)

    # Shared Luna memory is NOT broadcast to (B, M, D) in HBM: the first block reads the
    # (M, D) parameter via a constant index_map (torch broadcasting semantics).
    mem_rows = model_params["mem"][0].astype(jnp.bfloat16)   # (M, D)

    for blk_params in model_params["blocks"]:
        x_rows, mem_rows = luna_block(x_rows, mem_rows, blk_params, num_heads,
                                      seq_len=S, mem_len=M)

    logits = classifier(x_rows, model_params["cls"], model_params["classes"], seq_len=S)
    losses, artifacts = [], []                 # dropout / aux losses: identity at eval
    return logits, losses, artifacts


if __name__ == "__main__":
    # small config consistent with the module's constructor
    classes = 4
    num_embeddings = 16     # vocab
    seq_len = 8
    hidden_dim = 32
    qkv_dim = 32
    mlp_dim = 64
    num_heads = 2
    num_blocks = 2
    mem_size = 8
    batch = 2

    root = jax.random.PRNGKey(0)
    k_ids, k_emb, k_pos, k_mem, k_blocks, k_c1, k_c2 = jax.random.split(root, 7)

    ids = jax.random.randint(k_ids, (batch, seq_len), 0, num_embeddings, jnp.int32)

    block_keys = jax.random.split(k_blocks, num_blocks)
    cls_w1, cls_b1 = _dense(k_c1, hidden_dim, mlp_dim)
    cls_w2, cls_b2 = _dense(k_c2, mlp_dim, classes)   # explicit mlp_dim (review fix)

    model_params = {
        "emb_table": jax.random.normal(k_emb, (num_embeddings, hidden_dim), jnp.float32) * 0.02,
        "pos_emb": jax.random.normal(k_pos, (seq_len, hidden_dim), jnp.float32) * 0.02,
        "mem": jax.random.normal(k_mem, (1, mem_size, hidden_dim), jnp.float32),  # nn.init.normal_
        "blocks": [prepare_block_params(init_block_params(bk, hidden_dim, qkv_dim, mlp_dim))
                   for bk in block_keys],
        "cls": prepare_classifier_params(cls_w1, cls_b1, cls_w2, cls_b2, classes),
        "classes": classes,
    }

    logits, losses, artifacts = luna_classifier_forward(ids, model_params, num_heads)
    logits = jax.block_until_ready(logits)
    assert logits.shape == (batch, classes)
    assert bool(jnp.all(jnp.isfinite(logits)))
    print("KERNEL_OK")
</pallas_src>

<mosaic_0001>
module attributes {stable_mosaic.version = 11 : i64} {
  func.func @luna_block_kernel(%arg0: i32, %arg1: memref<16x32xbf16, #tpu.memory_space<vmem>>, %arg2: memref<8x32xbf16, #tpu.memory_space<vmem>>, %arg3: memref<32x32xbf16, #tpu.memory_space<vmem>>, %arg4: memref<1x32xf32, #tpu.memory_space<vmem>>, %arg5: memref<32x32xbf16, #tpu.memory_space<vmem>>, %arg6: memref<1x32xf32, #tpu.memory_space<vmem>>, %arg7: memref<32x32xbf16, #tpu.memory_space<vmem>>, %arg8: memref<1x32xf32, #tpu.memory_space<vmem>>, %arg9: memref<32x32xbf16, #tpu.memory_space<vmem>>, %arg10: memref<1x32xf32, #tpu.memory_space<vmem>>, %arg11: memref<32x32xbf16, #tpu.memory_space<vmem>>, %arg12: memref<1x32xf32, #tpu.memory_space<vmem>>, %arg13: memref<32x32xbf16, #tpu.memory_space<vmem>>, %arg14: memref<1x32xf32, #tpu.memory_space<vmem>>, %arg15: memref<32x32xbf16, #tpu.memory_space<vmem>>, %arg16: memref<1x32xf32, #tpu.memory_space<vmem>>, %arg17: memref<32x32xbf16, #tpu.memory_space<vmem>>, %arg18: memref<1x32xf32, #tpu.memory_space<vmem>>, %arg19: memref<1x32xf32, #tpu.memory_space<vmem>>, %arg20: memref<1x32xf32, #tpu.memory_space<vmem>>, %arg21: memref<1x32xf32, #tpu.memory_space<vmem>>, %arg22: memref<1x32xf32, #tpu.memory_space<vmem>>, %arg23: memref<32x64xbf16, #tpu.memory_space<vmem>>, %arg24: memref<1x64xf32, #tpu.memory_space<vmem>>, %arg25: memref<64x32xbf16, #tpu.memory_space<vmem>>, %arg26: memref<1x32xf32, #tpu.memory_space<vmem>>, %arg27: memref<1x32xf32, #tpu.memory_space<vmem>>, %arg28: memref<1x32xf32, #tpu.memory_space<vmem>>, %arg29: memref<16x32xbf16, #tpu.memory_space<vmem>>, %arg30: memref<16x32xbf16, #tpu.memory_space<vmem>>) attributes {dimension_semantics = [#tpu.dimension_semantics<parallel>], iteration_bounds = array<i64: 1>, scalar_prefetch = 0 : i64, scratch_operands = 0 : i64, tpu.core_type = #tpu.core_type<tc>, window_params = [{transform_indices = @transform_0, window_bounds = array<i64: 16, 32>}, {pipeline_mode = #tpu.pipeline_mode<synchronous>, transform_indices = @transform_1, window_bounds = array<i64: 8, 32>}, {pipeline_mode = #tpu.pipeline_mode<synchronous>, transform_indices = @transform_2, window_bounds = array<i64: 32, 32>}, {pipeline_mode = #tpu.pipeline_mode<synchronous>, transform_indices = @transform_3, window_bounds = array<i64: 1, 32>}, {pipeline_mode = #tpu.pipeline_mode<synchronous>, transform_indices = @transform_4, window_bounds = array<i64: 32, 32>}, {pipeline_mode = #tpu.pipeline_mode<synchronous>, transform_indices = @transform_5, window_bounds = array<i64: 1, 32>}, {pipeline_mode = #tpu.pipeline_mode<synchronous>, transform_indices = @transform_6, window_bounds = array<i64: 32, 32>}, {pipeline_mode = #tpu.pipeline_mode<synchronous>, transform_indices = @transform_7, window_bounds = array<i64: 1, 32>}, {pipeline_mode = #tpu.pipeline_mode<synchronous>, transform_indices = @transform_8, window_bounds = array<i64: 32, 32>}, {pipeline_mode = #tpu.pipeline_mode<synchronous>, transform_indices = @transform_9, window_bounds = array<i64: 1, 32>}, {pipeline_mode = #tpu.pipeline_mode<synchronous>, transform_indices = @transform_10, window_bounds = array<i64: 32, 32>}, {pipeline_mode = #tpu.pipeline_mode<synchronous>, transform_indices = @transform_11, window_bounds = array<i64: 1, 32>}, {pipeline_mode = #tpu.pipeline_mode<synchronous>, transform_indices = @transform_12, window_bounds = array<i64: 32, 32>}, {pipeline_mode = #tpu.pipeline_mode<synchronous>, transform_indices = @transform_13, window_bounds = array<i64: 1, 32>}, {pipeline_mode = #tpu.pipeline_mode<synchronous>, transform_indices = @transform_14, window_bounds = array<i64: 32, 32>}, {pipeline_mode = #tpu.pipeline_mode<synchronous>, transform_indices = @transform_15, window_bounds = array<i64: 1, 32>}, {pipeline_mode = #tpu.pipeline_mode<synchronous>, transform_indices = @transform_16, window_bounds = array<i64: 32, 32>}, {pipeline_mode = #tpu.pipeline_mode<synchronous>, transform_indices = @transform_17, window_bounds = array<i64: 1, 32>}, {pipeline_mode = #tpu.pipeline_mode<synchronous>, transform_indices = @transform_18, window_bounds = array<i64: 1, 32>}, {pipeline_mode = #tpu.pipeline_mode<synchronous>, transform_indices = @transform_19, window_bounds = array<i64: 1, 32>}, {pipeline_mode = #tpu.pipeline_mode<synchronous>, transform_indices = @transform_20, window_bounds = array<i64: 1, 32>}, {pipeline_mode = #tpu.pipeline_mode<synchronous>, transform_indices = @transform_21, window_bounds = array<i64: 1, 32>}, {pipeline_mode = #tpu.pipeline_mode<synchronous>, transform_indices = @transform_22, window_bounds = array<i64: 32, 64>}, {pipeline_mode = #tpu.pipeline_mode<synchronous>, transform_indices = @transform_23, window_bounds = array<i64: 1, 64>}, {pipeline_mode = #tpu.pipeline_mode<synchronous>, transform_indices = @transform_24, window_bounds = array<i64: 64, 32>}, {pipeline_mode = #tpu.pipeline_mode<synchronous>, transform_indices = @transform_25, window_bounds = array<i64: 1, 32>}, {pipeline_mode = #tpu.pipeline_mode<synchronous>, transform_indices = @transform_26, window_bounds = array<i64: 1, 32>}, {pipeline_mode = #tpu.pipeline_mode<synchronous>, transform_indices = @transform_27, window_bounds = array<i64: 1, 32>}, {transform_indices = @transform_28, window_bounds = array<i64: 16, 32>}, {transform_indices = @transform_29, window_bounds = array<i64: 16, 32>}]} {
    %c0 = arith.constant 0 : index
    %c0_0 = arith.constant 0 : index
    %0 = vector.load %arg1[%c0, %c0_0] : memref<16x32xbf16, #tpu.memory_space<vmem>>, vector<16x32xbf16>
    %c0_1 = arith.constant 0 : index
    %c0_2 = arith.constant 0 : index
    %1 = vector.load %arg2[%c0_1, %c0_2] : memref<8x32xbf16, #tpu.memory_space<vmem>>, vector<8x32xbf16>
    %c0_3 = arith.constant 0 : index
    %c0_4 = arith.constant 0 : index
    %2 = vector.load %arg5[%c0_3, %c0_4] : memref<32x32xbf16, #tpu.memory_space<vmem>>, vector<32x32xbf16>
    %cst = arith.constant dense<0.000000e+00> : vector<16x32xf32>
    %3 = tpu.matmul %0, %2, %cst {dimension_numbers = #tpu.dot_dimension_numbers<[1], [0], [0], [1], [0, 0, 1, 1], [], []>} : vector<16x32xbf16>, vector<32x32xbf16>, vector<16x32xf32> -> vector<16x32xf32>
    %c0_5 = arith.constant 0 : index
    %c0_6 = arith.constant 0 : index
    %4 = vector.load %arg6[%c0_5, %c0_6] : memref<1x32xf32, #tpu.memory_space<vmem>>, vector<1x32xf32>
    %5 = vector.broadcast %4 : vector<1x32xf32> to vector<16x32xf32>
    %6 = arith.addf %3, %5 : vector<16x32xf32>
    %c0_7 = arith.constant 0 : index
    %c0_8 = arith.constant 0 : index
    %7 = vector.load %arg7[%c0_7, %c0_8] : memref<32x32xbf16, #tpu.memory_space<vmem>>, vector<32x32xbf16>
    %cst_9 = arith.constant dense<0.000000e+00> : vector<16x32xf32>
    %8 = tpu.matmul %0, %7, %cst_9 {dimension_numbers = #tpu.dot_dimension_numbers<[1], [0], [0], [1], [0, 0, 1, 1], [], []>} : vector<16x32xbf16>, vector<32x32xbf16>, vector<16x32xf32> -> vector<16x32xf32>
    %c0_10 = arith.constant 0 : index
    %c0_11 = arith.constant 0 : index
    %9 = vector.load %arg8[%c0_10, %c0_11] : memref<1x32xf32, #tpu.memory_space<vmem>>, vector<1x32xf32>
    %10 = vector.broadcast %9 : vector<1x32xf32> to vector<16x32xf32>
    %11 = arith.addf %8, %10 : vector<16x32xf32>
    %c0_12 = arith.constant 0 : index
    %c0_13 = arith.constant 0 : index
    %12 = vector.load %arg11[%c0_12, %c0_13] : memref<32x32xbf16, #tpu.memory_space<vmem>>, vector<32x32xbf16>
    %cst_14 = arith.constant dense<0.000000e+00> : vector<16x32xf32>
    %13 = tpu.matmul %0, %12, %cst_14 {dimension_numbers = #tpu.dot_dimension_numbers<[1], [0], [0], [1], [0, 0, 1, 1], [], []>} : vector<16x32xbf16>, vector<32x32xbf16>, vector<16x32xf32> -> vector<16x32xf32>
    %c0_15 = arith.constant 0 : index
    %c0_16 = arith.constant 0 : index
    %14 = vector.load %arg12[%c0_15, %c0_16] : memref<1x32xf32, #tpu.memory_space<vmem>>, vector<1x32xf32>
    %15 = vector.broadcast %14 : vector<1x32xf32> to vector<16x32xf32>
    %16 = arith.addf %13, %15 : vector<16x32xf32>
    %cst_17 = arith.constant 2.500000e-01 : f32
    %17 = vector.broadcast %cst_17 : f32 to vector<16x32xf32>
    %18 = arith.mulf %16, %17 : vector<16x32xf32>
    %c0_18 = arith.constant 0 : index
    %c0_19 = arith.constant 0 : index
    %19 = vector.load %arg3[%c0_18, %c0_19] : memref<32x32xbf16, #tpu.memory_space<vmem>>, vector<32x32xbf16>
    %cst_20 = arith.constant dense<0.000000e+00> : vector<8x32xf32>
    %20 = tpu.matmul %1, %19, %cst_20 {dimension_numbers = #tpu.dot_dimension_numbers<[1], [0], [0], [1], [0, 0, 1, 1], [], []>} : vector<8x32xbf16>, vector<32x32xbf16>, vector<8x32xf32> -> vector<8x32xf32>
    %c0_21 = arith.constant 0 : index
    %c0_22 = arith.constant 0 : index
    %21 = vector.load %arg4[%c0_21, %c0_22] : memref<1x32xf32, #tpu.memory_space<vmem>>, vector<1x32xf32>
    %22 = vector.broadcast %21 : vector<1x32xf32> to vector<8x32xf32>
    %23 = arith.addf %20, %22 : vector<8x32xf32>
    %cst_23 = arith.constant 2.500000e-01 : f32
    %24 = vector.broadcast %cst_23 : f32 to vector<8x32xf32>
    %25 = arith.mulf %23, %24 : vector<8x32xf32>
    %26 = vector.extract_strided_slice %6 {offsets = [0, 0], sizes = [8, 32], strides = [1, 1]} : vector<16x32xf32> to vector<8x32xf32>
    %27 = vector.extract_strided_slice %11 {offsets = [0, 0], sizes = [8, 32], strides = [1, 1]} : vector<16x32xf32> to vector<8x32xf32>
    %28 = vector.extract_strided_slice %25 {offsets = [0, 0], sizes = [8, 16], strides = [1, 1]} : vector<8x32xf32> to vector<8x16xf32>
    %29 = arith.truncf %28 : vector<8x16xf32> to vector<8x16xbf16>
    %30 = vector.extract_strided_slice %26 {offsets = [0, 0], sizes = [8, 16], strides = [1, 1]} : vector<8x32xf32> to vector<8x16xf32>
    %31 = arith.truncf %30 : vector<8x16xf32> to vector<8x16xbf16>
    %32 = vector.extract_strided_slice %27 {offsets = [0, 0], sizes = [8, 16], strides = [1, 1]} : vector<8x32xf32> to vector<8x16xf32>
    %33 = arith.truncf %32 : vector<8x16xf32> to vector<8x16xbf16>
    %cst_24 = arith.constant dense<0.000000e+00> : vector<8x8xf32>
    %34 = tpu.matmul %29, %31, %cst_24 {dimension_numbers = #tpu.dot_dimension_numbers<[1], [1], [0], [0], [0, 0, 1, 0], [], []>} : vector<8x16xbf16>, vector<8x16xbf16>, vector<8x8xf32> -> vector<8x8xf32>
    %cst_25 = arith.constant dense<0xFF800000> : vector<8xf32>
    %35 = vector.multi_reduction <maximumf>, %34, %cst_25 [1] : vector<8x8xf32> to vector<8xf32>
    %36 = vector.shape_cast %35 : vector<8xf32> to vector<8x1xf32>
    %37 = vector.broadcast %36 : vector<8x1xf32> to vector<8x8xf32>
    %38 = arith.subf %34, %37 : vector<8x8xf32>
    %39 = math.exp %38 : vector<8x8xf32>
    %cst_26 = arith.constant dense<0.000000e+00> : vector<8xf32>
    %40 = vector.multi_reduction <add>, %39, %cst_26 [1] : vector<8x8xf32> to vector<8xf32>
    %41 = vector.shape_cast %40 : vector<8xf32> to vector<8x1xf32>
    %42 = tpu.reciprocal %41 {approx = true} : vector<8x1xf32> -> vector<8x1xf32>
    %43 = vector.broadcast %42 : vector<8x1xf32> to vector<8x8xf32>
    %44 = arith.mulf %39, %43 : vector<8x8xf32>
    %45 = arith.truncf %44 : vector<8x8xf32> to vector<8x8xbf16>
    %cst_27 = arith.constant dense<0.000000e+00> : vector<8x16xf32>
    %46 = tpu.matmul %45, %33, %cst_27 {dimension_numbers = #tpu.dot_dimension_numbers<[1], [0], [0], [1], [0, 0, 1, 1], [], []>} : vector<8x8xbf16>, vector<8x16xbf16>, vector<8x16xf32> -> vector<8x16xf32>
    %47 = vector.extract_strided_slice %25 {offsets = [0, 16], sizes = [8, 16], strides = [1, 1]} : vector<8x32xf32> to vector<8x16xf32>
    %48 = arith.truncf %47 : vector<8x16xf32> to vector<8x16xbf16>
    %49 = vector.extract_strided_slice %26 {offsets = [0, 16], sizes = [8, 16], strides = [1, 1]} : vector<8x32xf32> to vector<8x16xf32>
    %50 = arith.truncf %49 : vector<8x16xf32> to vector<8x16xbf16>
    %51 = vector.extract_strided_slice %27 {offsets = [0, 16], sizes = [8, 16], strides = [1, 1]} : vector<8x32xf32> to vector<8x16xf32>
    %52 = arith.truncf %51 : vector<8x16xf32> to vector<8x16xbf16>
    %cst_28 = arith.constant dense<0.000000e+00> : vector<8x8xf32>
    %53 = tpu.matmul %48, %50, %cst_28 {dimension_numbers = #tpu.dot_dimension_numbers<[1], [1], [0], [0], [0, 0, 1, 0], [], []>} : vector<8x16xbf16>, vector<8x16xbf16>, vector<8x8xf32> -> vector<8x8xf32>
    %cst_29 = arith.constant dense<0xFF800000> : vector<8xf32>
    %54 = vector.multi_reduction <maximumf>, %53, %cst_29 [1] : vector<8x8xf32> to vector<8xf32>
    %55 = vector.shape_cast %54 : vector<8xf32> to vector<8x1xf32>
    %56 = vector.broadcast %55 : vector<8x1xf32> to vector<8x8xf32>
    %57 = arith.subf %53, %56 : vector<8x8xf32>
    %58 = math.exp %57 : vector<8x8xf32>
    %cst_30 = arith.constant dense<0.000000e+00> : vector<8xf32>
    %59 = vector.multi_reduction <add>, %58, %cst_30 [1] : vector<8x8xf32> to vector<8xf32>
    %60 = vector.shape_cast %59 : vector<8xf32> to vector<8x1xf32>
    %61 = tpu.reciprocal %60 {approx = true} : vector<8x1xf32> -> vector<8x1xf32>
    %62 = vector.broadcast %61 : vector<8x1xf32> to vector<8x8xf32>
    %63 = arith.mulf %58, %62 : vector<8x8xf32>
    %64 = arith.truncf %63 : vector<8x8xf32> to vector<8x8xbf16>
    %cst_31 = arith.constant dense<0.000000e+00> : vector<8x16xf32>
    %65 = tpu.matmul %64, %52, %cst_31 {dimension_numbers = #tpu.dot_dimension_numbers<[1], [0], [0], [1], [0, 0, 1, 1], [], []>} : vector<8x8xbf16>, vector<8x16xbf16>, vector<8x16xf32> -> vector<8x16xf32>
    %66 = tpu.concatenate %46, %65 in 1 : vector<8x16xf32>, vector<8x16xf32> -> vector<8x32xf32>
    %67 = vector.extract_strided_slice %6 {offsets = [8, 0], sizes = [8, 32], strides = [1, 1]} : vector<16x32xf32> to vector<8x32xf32>
    %68 = vector.extract_strided_slice %11 {offsets = [8, 0], sizes = [8, 32], strides = [1, 1]} : vector<16x32xf32> to vector<8x32xf32>
    %69 = vector.extract_strided_slice %25 {offsets = [0, 0], sizes = [8, 16], strides = [1, 1]} : vector<8x32xf32> to vector<8x16xf32>
    %70 = arith.truncf %69 : vector<8x16xf32> to vector<8x16xbf16>
    %71 = vector.extract_strided_slice %67 {offsets = [0, 0], sizes = [8, 16], strides = [1, 1]} : vector<8x32xf32> to vector<8x16xf32>
    %72 = arith.truncf %71 : vector<8x16xf32> to vector<8x16xbf16>
    %73 = vector.extract_strided_slice %68 {offsets = [0, 0], sizes = [8, 16], strides = [1, 1]} : vector<8x32xf32> to vector<8x16xf32>
    %74 = arith.truncf %73 : vector<8x16xf32> to vector<8x16xbf16>
    %cst_32 = arith.constant dense<0.000000e+00> : vector<8x8xf32>
    %75 = tpu.matmul %70, %72, %cst_32 {dimension_numbers = #tpu.dot_dimension_numbers<[1], [1], [0], [0], [0, 0, 1, 0], [], []>} : vector<8x16xbf16>, vector<8x16xbf16>, vector<8x8xf32> -> vector<8x8xf32>
    %cst_33 = arith.constant dense<0xFF800000> : vector<8xf32>
    %76 = vector.multi_reduction <maximumf>, %75, %cst_33 [1] : vector<8x8xf32> to vector<8xf32>
    %77 = vector.shape_cast %76 : vector<8xf32> to vector<8x1xf32>
    %78 = vector.broadcast %77 : vector<8x1xf32> to vector<8x8xf32>
    %79 = arith.subf %75, %78 : vector<8x8xf32>
    %80 = math.exp %79 : vector<8x8xf32>
    %cst_34 = arith.constant dense<0.000000e+00> : vector<8xf32>
    %81 = vector.multi_reduction <add>, %80, %cst_34 [1] : vector<8x8xf32> to vector<8xf32>
    %82 = vector.shape_cast %81 : vector<8xf32> to vector<8x1xf32>
    %83 = tpu.reciprocal %82 {approx = true} : vector<8x1xf32> -> vector<8x1xf32>
    %84 = vector.broadcast %83 : vector<8x1xf32> to vector<8x8xf32>
    %85 = arith.mulf %80, %84 : vector<8x8xf32>
    %86 = arith.truncf %85 : vector<8x8xf32> to vector<8x8xbf16>
    %cst_35 = arith.constant dense<0.000000e+00> : vector<8x16xf32>
    %87 = tpu.matmul %86, %74, %cst_35 {dimension_numbers = #tpu.dot_dimension_numbers<[1], [0], [0], [1], [0, 0, 1, 1], [], []>} : vector<8x8xbf16>, vector<8x16xbf16>, vector<8x16xf32> -> vector<8x16xf32>
    %88 = vector.extract_strided_slice %25 {offsets = [0, 16], sizes = [8, 16], strides = [1, 1]} : vector<8x32xf32> to vector<8x16xf32>
    %89 = arith.truncf %88 : vector<8x16xf32> to vector<8x16xbf16>
    %90 = vector.extract_strided_slice %67 {offsets = [0, 16], sizes = [8, 16], strides = [1, 1]} : vector<8x32xf32> to vector<8x16xf32>
    %91 = arith.truncf %90 : vector<8x16xf32> to vector<8x16xbf16>
    %92 = vector.extract_strided_slice %68 {offsets = [0, 16], sizes = [8, 16], strides = [1, 1]} : vector<8x32xf32> to vector<8x16xf32>
    %93 = arith.truncf %92 : vector<8x16xf32> to vector<8x16xbf16>
    %cst_36 = arith.constant dense<0.000000e+00> : vector<8x8xf32>
    %94 = tpu.matmul %89, %91, %cst_36 {dimension_numbers = #tpu.dot_dimension_numbers<[1], [1], [0], [0], [0, 0, 1, 0], [], []>} : vector<8x16xbf16>, vector<8x16xbf16>, vector<8x8xf32> -> vector<8x8xf32>
    %cst_37 = arith.constant dense<0xFF800000> : vector<8xf32>
    %95 = vector.multi_reduction <maximumf>, %94, %cst_37 [1] : vector<8x8xf32> to vector<8xf32>
    %96 = vector.shape_cast %95 : vector<8xf32> to vector<8x1xf32>
    %97 = vector.broadcast %96 : vector<8x1xf32> to vector<8x8xf32>
    %98 = arith.subf %94, %97 : vector<8x8xf32>
    %99 = math.exp %98 : vector<8x8xf32>
    %cst_38 = arith.constant dense<0.000000e+00> : vector<8xf32>
    %100 = vector.multi_reduction <add>, %99, %cst_38 [1] : vector<8x8xf32> to vector<8xf32>
    %101 = vector.shape_cast %100 : vector<8xf32> to vector<8x1xf32>
    %102 = tpu.reciprocal %101 {approx = true} : vector<8x1xf32> -> vector<8x1xf32>
    %103 = vector.broadcast %102 : vector<8x1xf32> to vector<8x8xf32>
    %104 = arith.mulf %99, %103 : vector<8x8xf32>
    %105 = arith.truncf %104 : vector<8x8xf32> to vector<8x8xbf16>
    %cst_39 = arith.constant dense<0.000000e+00> : vector<8x16xf32>
    %106 = tpu.matmul %105, %93, %cst_39 {dimension_numbers = #tpu.dot_dimension_numbers<[1], [0], [0], [1], [0, 0, 1, 1], [], []>} : vector<8x8xbf16>, vector<8x16xbf16>, vector<8x16xf32> -> vector<8x16xf32>
    %107 = tpu.concatenate %87, %106 in 1 : vector<8x16xf32>, vector<8x16xf32> -> vector<8x32xf32>
    %108 = tpu.concatenate %66, %107 in 0 : vector<8x32xf32>, vector<8x32xf32> -> vector<16x32xf32>
    %109 = arith.truncf %108 : vector<16x32xf32> to vector<16x32xbf16>
    %c0_40 = arith.constant 0 : index
    %c0_41 = arith.constant 0 : index
    %110 = vector.load %arg9[%c0_40, %c0_41] : memref<32x32xbf16, #tpu.memory_space<vmem>>, vector<32x32xbf16>
    %cst_42 = arith.constant dense<0.000000e+00> : vector<16x32xf32>
    %111 = tpu.matmul %109, %110, %cst_42 {dimension_numbers = #tpu.dot_dimension_numbers<[1], [0], [0], [1], [0, 0, 1, 1], [], []>} : vector<16x32xbf16>, vector<32x32xbf16>, vector<16x32xf32> -> vector<16x32xf32>
    %c0_43 = arith.constant 0 : index
    %c0_44 = arith.constant 0 : index
    %112 = vector.load %arg10[%c0_43, %c0_44] : memref<1x32xf32, #tpu.memory_space<vmem>>, vector<1x32xf32>
    %113 = vector.broadcast %112 : vector<1x32xf32> to vector<16x32xf32>
    %114 = arith.addf %111, %113 : vector<16x32xf32>
    %115 = arith.extf %1 : vector<8x32xbf16> to vector<8x32xf32>
    %116 = tpu.concatenate %115, %115 in 0 : vector<8x32xf32>, vector<8x32xf32> -> vector<16x32xf32>
    %117 = arith.addf %116, %114 : vector<16x32xf32>
    %c0_45 = arith.constant 0 : index
    %c0_46 = arith.constant 0 : index
    %118 = vector.load %arg19[%c0_45, %c0_46] : memref<1x32xf32, #tpu.memory_space<vmem>>, vector<1x32xf32>
    %c0_47 = arith.constant 0 : index
    %c0_48 = arith.constant 0 : index
    %119 = vector.load %arg20[%c0_47, %c0_48] : memref<1x32xf32, #tpu.memory_space<vmem>>, vector<1x32xf32>
    %cst_49 = arith.constant dense<0.000000e+00> : vector<16xf32>
    %120 = vector.multi_reduction <add>, %117, %cst_49 [1] : vector<16x32xf32> to vector<16xf32>
    %121 = vector.shape_cast %120 : vector<16xf32> to vector<16x1xf32>
    %cst_50 = arith.constant 3.200000e+01 : f32
    %122 = vector.broadcast %cst_50 : f32 to vector<16x1xf32>
    %123 = arith.divf %121, %122 : vector<16x1xf32>
    %124 = vector.broadcast %123 : vector<16x1xf32> to vector<16x32xf32>
    %125 = arith.subf %117, %124 : vector<16x32xf32>
    %126 = arith.mulf %125, %125 : vector<16x32xf32>
    %cst_51 = arith.constant dense<0.000000e+00> : vector<16xf32>
    %127 = vector.multi_reduction <add>, %126, %cst_51 [1] : vector<16x32xf32> to vector<16xf32>
    %128 = vector.shape_cast %127 : vector<16xf32> to vector<16x1xf32>
    %cst_52 = arith.constant 3.200000e+01 : f32
    %129 = vector.broadcast %cst_52 : f32 to vector<16x1xf32>
    %130 = arith.divf %128, %129 : vector<16x1xf32>
    %131 = vector.broadcast %123 : vector<16x1xf32> to vector<16x32xf32>
    %132 = arith.subf %117, %131 : vector<16x32xf32>
    %cst_53 = arith.constant 9.99999974E-6 : f32
    %133 = vector.broadcast %cst_53 : f32 to vector<16x1xf32>
    %134 = arith.addf %130, %133 : vector<16x1xf32>
    %135 = math.rsqrt %134 : vector<16x1xf32>
    %136 = vector.broadcast %135 : vector<16x1xf32> to vector<16x32xf32>
    %137 = arith.mulf %132, %136 : vector<16x32xf32>
    %138 = vector.broadcast %118 : vector<1x32xf32> to vector<16x32xf32>
    %139 = arith.mulf %137, %138 : vector<16x32xf32>
    %140 = vector.broadcast %119 : vector<1x32xf32> to vector<16x32xf32>
    %141 = arith.addf %139, %140 : vector<16x32xf32>
    %142 = arith.truncf %114 : vector<16x32xf32> to vector<16x32xbf16>
    %c0_54 = arith.constant 0 : index
    %c0_55 = arith.constant 0 : index
    %143 = vector.load %arg13[%c0_54, %c0_55] : memref<32x32xbf16, #tpu.memory_space<vmem>>, vector<32x32xbf16>
    %cst_56 = arith.constant dense<0.000000e+00> : vector<16x32xf32>
    %144 = tpu.matmul %142, %143, %cst_56 {dimension_numbers = #tpu.dot_dimension_numbers<[1], [0], [0], [1], [0, 0, 1, 1], [], []>} : vector<16x32xbf16>, vector<32x32xbf16>, vector<16x32xf32> -> vector<16x32xf32>
    %c0_57 = arith.constant 0 : index
    %c0_58 = arith.constant 0 : index
    %145 = vector.load %arg14[%c0_57, %c0_58] : memref<1x32xf32, #tpu.memory_space<vmem>>, vector<1x32xf32>
    %146 = vector.broadcast %145 : vector<1x32xf32> to vector<16x32xf32>
    %147 = arith.addf %144, %146 : vector<16x32xf32>
    %c0_59 = arith.constant 0 : index
    %c0_60 = arith.constant 0 : index
    %148 = vector.load %arg15[%c0_59, %c0_60] : memref<32x32xbf16, #tpu.memory_space<vmem>>, vector<32x32xbf16>
    %cst_61 = arith.constant dense<0.000000e+00> : vector<16x32xf32>
    %149 = tpu.matmul %142, %148, %cst_61 {dimension_numbers = #tpu.dot_dimension_numbers<[1], [0], [0], [1], [0, 0, 1, 1], [], []>} : vector<16x32xbf16>, vector<32x32xbf16>, vector<16x32xf32> -> vector<16x32xf32>
    %c0_62 = arith.constant 0 : index
    %c0_63 = arith.constant 0 : index
    %150 = vector.load %arg16[%c0_62, %c0_63] : memref<1x32xf32, #tpu.memory_space<vmem>>, vector<1x32xf32>
    %151 = vector.broadcast %150 : vector<1x32xf32> to vector<16x32xf32>
    %152 = arith.addf %149, %151 : vector<16x32xf32>
    %153 = vector.extract_strided_slice %18 {offsets = [0, 0], sizes = [8, 32], strides = [1, 1]} : vector<16x32xf32> to vector<8x32xf32>
    %154 = vector.extract_strided_slice %147 {offsets = [0, 0], sizes = [8, 32], strides = [1, 1]} : vector<16x32xf32> to vector<8x32xf32>
    %155 = vector.extract_strided_slice %152 {offsets = [0, 0], sizes = [8, 32], strides = [1, 1]} : vector<16x32xf32> to vector<8x32xf32>
    %156 = vector.extract_strided_slice %153 {offsets = [0, 0], sizes = [8, 16], strides = [1, 1]} : vector<8x32xf32> to vector<8x16xf32>
    %157 = arith.truncf %156 : vector<8x16xf32> to vector<8x16xbf16>
    %158 = vector.extract_strided_slice %154 {offsets = [0, 0], sizes = [8, 16], strides = [1, 1]} : vector<8x32xf32> to vector<8x16xf32>
    %159 = arith.truncf %158 : vector<8x16xf32> to vector<8x16xbf16>
    %160 = vector.extract_strided_slice %155 {offsets = [0, 0], sizes = [8, 16], strides = [1, 1]} : vector<8x32xf32> to vector<8x16xf32>
    %161 = arith.truncf %160 : vector<8x16xf32> to vector<8x16xbf16>
    %cst_64 = arith.constant dense<0.000000e+00> : vector<8x8xf32>
    %162 = tpu.matmul %157, %159, %cst_64 {dimension_numbers = #tpu.dot_dimension_numbers<[1], [1], [0], [0], [0, 0, 1, 0], [], []>} : vector<8x16xbf16>, vector<8x16xbf16>, vector<8x8xf32> -> vector<8x8xf32>
    %cst_65 = arith.constant dense<0xFF800000> : vector<8xf32>
    %163 = vector.multi_reduction <maximumf>, %162, %cst_65 [1] : vector<8x8xf32> to vector<8xf32>
    %164 = vector.shape_cast %163 : vector<8xf32> to vector<8x1xf32>
    %165 = vector.broadcast %164 : vector<8x1xf32> to vector<8x8xf32>
    %166 = arith.subf %162, %165 : vector<8x8xf32>
    %167 = math.exp %166 : vector<8x8xf32>
    %cst_66 = arith.constant dense<0.000000e+00> : vector<8xf32>
    %168 = vector.multi_reduction <add>, %167, %cst_66 [1] : vector<8x8xf32> to vector<8xf32>
    %169 = vector.shape_cast %168 : vector<8xf32> to vector<8x1xf32>
    %170 = tpu.reciprocal %169 {approx = true} : vector<8x1xf32> -> vector<8x1xf32>
    %171 = vector.broadcast %170 : vector<8x1xf32> to vector<8x8xf32>
    %172 = arith.mulf %167, %171 : vector<8x8xf32>
    %173 = arith.truncf %172 : vector<8x8xf32> to vector<8x8xbf16>
    %cst_67 = arith.constant dense<0.000000e+00> : vector<8x16xf32>
    %174 = tpu.matmul %173, %161, %cst_67 {dimension_numbers = #tpu.dot_dimension_numbers<[1], [0], [0], [1], [0, 0, 1, 1], [], []>} : vector<8x8xbf16>, vector<8x16xbf16>, vector<8x16xf32> -> vector<8x16xf32>
    %175 = vector.extract_strided_slice %153 {offsets = [0, 16], sizes = [8, 16], strides = [1, 1]} : vector<8x32xf32> to vector<8x16xf32>
    %176 = arith.truncf %175 : vector<8x16xf32> to vector<8x16xbf16>
    %177 = vector.extract_strided_slice %154 {offsets = [0, 16], sizes = [8, 16], strides = [1, 1]} : vector<8x32xf32> to vector<8x16xf32>
    %178 = arith.truncf %177 : vector<8x16xf32> to vector<8x16xbf16>
    %179 = vector.extract_strided_slice %155 {offsets = [0, 16], sizes = [8, 16], strides = [1, 1]} : vector<8x32xf32> to vector<8x16xf32>
    %180 = arith.truncf %179 : vector<8x16xf32> to vector<8x16xbf16>
    %cst_68 = arith.constant dense<0.000000e+00> : vector<8x8xf32>
    %181 = tpu.matmul %176, %178, %cst_68 {dimension_numbers = #tpu.dot_dimension_numbers<[1], [1], [0], [0], [0, 0, 1, 0], [], []>} : vector<8x16xbf16>, vector<8x16xbf16>, vector<8x8xf32> -> vector<8x8xf32>
    %cst_69 = arith.constant dense<0xFF800000> : vector<8xf32>
    %182 = vector.multi_reduction <maximumf>, %181, %cst_69 [1] : vector<8x8xf32> to vector<8xf32>
    %183 = vector.shape_cast %182 : vector<8xf32> to vector<8x1xf32>
    %184 = vector.broadcast %183 : vector<8x1xf32> to vector<8x8xf32>
    %185 = arith.subf %181, %184 : vector<8x8xf32>
    %186 = math.exp %185 : vector<8x8xf32>
    %cst_70 = arith.constant dense<0.000000e+00> : vector<8xf32>
    %187 = vector.multi_reduction <add>, %186, %cst_70 [1] : vector<8x8xf32> to vector<8xf32>
    %188 = vector.shape_cast %187 : vector<8xf32> to vector<8x1xf32>
    %189 = tpu.reciprocal %188 {approx = true} : vector<8x1xf32> -> vector<8x1xf32>
    %190 = vector.broadcast %189 : vector<8x1xf32> to vector<8x8xf32>
    %191 = arith.mulf %186, %190 : vector<8x8xf32>
    %192 = arith.truncf %191 : vector<8x8xf32> to vector<8x8xbf16>
    %cst_71 = arith.constant dense<0.000000e+00> : vector<8x16xf32>
    %193 = tpu.matmul %192, %180, %cst_71 {dimension_numbers = #tpu.dot_dimension_numbers<[1], [0], [0], [1], [0, 0, 1, 1], [], []>} : vector<8x8xbf16>, vector<8x16xbf16>, vector<8x16xf32> -> vector<8x16xf32>
    %194 = tpu.concatenate %174, %193 in 1 : vector<8x16xf32>, vector<8x16xf32> -> vector<8x32xf32>
    %195 = vector.extract_strided_slice %18 {offsets = [8, 0], sizes = [8, 32], strides = [1, 1]} : vector<16x32xf32> to vector<8x32xf32>
    %196 = vector.extract_strided_slice %147 {offsets = [8, 0], sizes = [8, 32], strides = [1, 1]} : vector<16x32xf32> to vector<8x32xf32>
    %197 = vector.extract_strided_slice %152 {offsets = [8, 0], sizes = [8, 32], strides = [1, 1]} : vector<16x32xf32> to vector<8x32xf32>
    %198 = vector.extract_strided_slice %195 {offsets = [0, 0], sizes = [8, 16], strides = [1, 1]} : vector<8x32xf32> to vector<8x16xf32>
    %199 = arith.truncf %198 : vector<8x16xf32> to vector<8x16xbf16>
    %200 = vector.extract_strided_slice %196 {offsets = [0, 0], sizes = [8, 16], strides = [1, 1]} : vector<8x32xf32> to vector<8x16xf32>
    %201 = arith.truncf %200 : vector<8x16xf32> to vector<8x16xbf16>
    %202 = vector.extract_strided_slice %197 {offsets = [0, 0], sizes = [8, 16], strides = [1, 1]} : vector<8x32xf32> to vector<8x16xf32>
    %203 = arith.truncf %202 : vector<8x16xf32> to vector<8x16xbf16>
    %cst_72 = arith.constant dense<0.000000e+00> : vector<8x8xf32>
    %204 = tpu.matmul %199, %201, %cst_72 {dimension_numbers = #tpu.dot_dimension_numbers<[1], [1], [0], [0], [0, 0, 1, 0], [], []>} : vector<8x16xbf16>, vector<8x16xbf16>, vector<8x8xf32> -> vector<8x8xf32>
    %cst_73 = arith.constant dense<0xFF800000> : vector<8xf32>
    %205 = vector.multi_reduction <maximumf>, %204, %cst_73 [1] : vector<8x8xf32> to vector<8xf32>
    %206 = vector.shape_cast %205 : vector<8xf32> to vector<8x1xf32>
    %207 = vector.broadcast %206 : vector<8x1xf32> to vector<8x8xf32>
    %208 = arith.subf %204, %207 : vector<8x8xf32>
    %209 = math.exp %208 : vector<8x8xf32>
    %cst_74 = arith.constant dense<0.000000e+00> : vector<8xf32>
    %210 = vector.multi_reduction <add>, %209, %cst_74 [1] : vector<8x8xf32> to vector<8xf32>
    %211 = vector.shape_cast %210 : vector<8xf32> to vector<8x1xf32>
    %212 = tpu.reciprocal %211 {approx = true} : vector<8x1xf32> -> vector<8x1xf32>
    %213 = vector.broadcast %212 : vector<8x1xf32> to vector<8x8xf32>
    %214 = arith.mulf %209, %213 : vector<8x8xf32>
    %215 = arith.truncf %214 : vector<8x8xf32> to vector<8x8xbf16>
    %cst_75 = arith.constant dense<0.000000e+00> : vector<8x16xf32>
    %216 = tpu.matmul %215, %203, %cst_75 {dimension_numbers = #tpu.dot_dimension_numbers<[1], [0], [0], [1], [0, 0, 1, 1], [], []>} : vector<8x8xbf16>, vector<8x16xbf16>, vector<8x16xf32> -> vector<8x16xf32>
    %217 = vector.extract_strided_slice %195 {offsets = [0, 16], sizes = [8, 16], strides = [1, 1]} : vector<8x32xf32> to vector<8x16xf32>
    %218 = arith.truncf %217 : vector<8x16xf32> to vector<8x16xbf16>
    %219 = vector.extract_strided_slice %196 {offsets = [0, 16], sizes = [8, 16], strides = [1, 1]} : vector<8x32xf32> to vector<8x16xf32>
    %220 = arith.truncf %219 : vector<8x16xf32> to vector<8x16xbf16>
    %221 = vector.extract_strided_slice %197 {offsets = [0, 16], sizes = [8, 16], strides = [1, 1]} : vector<8x32xf32> to vector<8x16xf32>
    %222 = arith.truncf %221 : vector<8x16xf32> to vector<8x16xbf16>
    %cst_76 = arith.constant dense<0.000000e+00> : vector<8x8xf32>
    %223 = tpu.matmul %218, %220, %cst_76 {dimension_numbers = #tpu.dot_dimension_numbers<[1], [1], [0], [0], [0, 0, 1, 0], [], []>} : vector<8x16xbf16>, vector<8x16xbf16>, vector<8x8xf32> -> vector<8x8xf32>
    %cst_77 = arith.constant dense<0xFF800000> : vector<8xf32>
    %224 = vector.multi_reduction <maximumf>, %223, %cst_77 [1] : vector<8x8xf32> to vector<8xf32>
    %225 = vector.shape_cast %224 : vector<8xf32> to vector<8x1xf32>
    %226 = vector.broadcast %225 : vector<8x1xf32> to vector<8x8xf32>
    %227 = arith.subf %223, %226 : vector<8x8xf32>
    %228 = math.exp %227 : vector<8x8xf32>
    %cst_78 = arith.constant dense<0.000000e+00> : vector<8xf32>
    %229 = vector.multi_reduction <add>, %228, %cst_78 [1] : vector<8x8xf32> to vector<8xf32>
    %230 = vector.shape_cast %229 : vector<8xf32> to vector<8x1xf32>
    %231 = tpu.reciprocal %230 {approx = true} : vector<8x1xf32> -> vector<8x1xf32>
    %232 = vector.broadcast %231 : vector<8x1xf32> to vector<8x8xf32>
    %233 = arith.mulf %228, %232 : vector<8x8xf32>
    %234 = arith.truncf %233 : vector<8x8xf32> to vector<8x8xbf16>
    %cst_79 = arith.constant dense<0.000000e+00> : vector<8x16xf32>
    %235 = tpu.matmul %234, %222, %cst_79 {dimension_numbers = #tpu.dot_dimension_numbers<[1], [0], [0], [1], [0, 0, 1, 1], [], []>} : vector<8x8xbf16>, vector<8x16xbf16>, vector<8x16xf32> -> vector<8x16xf32>
    %236 = tpu.concatenate %216, %235 in 1 : vector<8x16xf32>, vector<8x16xf32> -> vector<8x32xf32>
    %237 = tpu.concatenate %194, %236 in 0 : vector<8x32xf32>, vector<8x32xf32> -> vector<16x32xf32>
    %238 = arith.truncf %237 : vector<16x32xf32> to vector<16x32xbf16>
    %c0_80 = arith.constant 0 : index
    %c0_81 = arith.constant 0 : index
    %239 = vector.load %arg17[%c0_80, %c0_81] : memref<32x32xbf16, #tpu.memory_space<vmem>>, vector<32x32xbf16>
    %cst_82 = arith.constant dense<0.000000e+00> : vector<16x32xf32>
    %240 = tpu.matmul %238, %239, %cst_82 {dimension_numbers = #tpu.dot_dimension_numbers<[1], [0], [0], [1], [0, 0, 1, 1], [], []>} : vector<16x32xbf16>, vector<32x32xbf16>, vector<16x32xf32> -> vector<16x32xf32>
    %c0_83 = arith.constant 0 : index
    %c0_84 = arith.constant 0 : index
    %241 = vector.load %arg18[%c0_83, %c0_84] : memref<1x32xf32, #tpu.memory_space<vmem>>, vector<1x32xf32>
    %242 = vector.broadcast %241 : vector<1x32xf32> to vector<16x32xf32>
    %243 = arith.addf %240, %242 : vector<16x32xf32>
    %244 = arith.extf %0 : vector<16x32xbf16> to vector<16x32xf32>
    %245 = arith.addf %244, %243 : vector<16x32xf32>
    %c0_85 = arith.constant 0 : index
    %c0_86 = arith.constant 0 : index
    %246 = vector.load %arg21[%c0_85, %c0_86] : memref<1x32xf32, #tpu.memory_space<vmem>>, vector<1x32xf32>
    %c0_87 = arith.constant 0 : index
    %c0_88 = arith.constant 0 : index
    %247 = vector.load %arg22[%c0_87, %c0_88] : memref<1x32xf32, #tpu.memory_space<vmem>>, vector<1x32xf32>
    %cst_89 = arith.constant dense<0.000000e+00> : vector<16xf32>
    %248 = vector.multi_reduction <add>, %245, %cst_89 [1] : vector<16x32xf32> to vector<16xf32>
    %249 = vector.shape_cast %248 : vector<16xf32> to vector<16x1xf32>
    %cst_90 = arith.constant 3.200000e+01 : f32
    %250 = vector.broadcast %cst_90 : f32 to vector<16x1xf32>
    %251 = arith.divf %249, %250 : vector<16x1xf32>
    %252 = vector.broadcast %251 : vector<16x1xf32> to vector<16x32xf32>
    %253 = arith.subf %245, %252 : vector<16x32xf32>
    %254 = arith.mulf %253, %253 : vector<16x32xf32>
    %cst_91 = arith.constant dense<0.000000e+00> : vector<16xf32>
    %255 = vector.multi_reduction <add>, %254, %cst_91 [1] : vector<16x32xf32> to vector<16xf32>
    %256 = vector.shape_cast %255 : vector<16xf32> to vector<16x1xf32>
    %cst_92 = arith.constant 3.200000e+01 : f32
    %257 = vector.broadcast %cst_92 : f32 to vector<16x1xf32>
    %258 = arith.divf %256, %257 : vector<16x1xf32>
    %259 = vector.broadcast %251 : vector<16x1xf32> to vector<16x32xf32>
    %260 = arith.subf %245, %259 : vector<16x32xf32>
    %cst_93 = arith.constant 9.99999974E-6 : f32
    %261 = vector.broadcast %cst_93 : f32 to vector<16x1xf32>
    %262 = arith.addf %258, %261 : vector<16x1xf32>
    %263 = math.rsqrt %262 : vector<16x1xf32>
    %264 = vector.broadcast %263 : vector<16x1xf32> to vector<16x32xf32>
    %265 = arith.mulf %260, %264 : vector<16x32xf32>
    %266 = vector.broadcast %246 : vector<1x32xf32> to vector<16x32xf32>
    %267 = arith.mulf %265, %266 : vector<16x32xf32>
    %268 = vector.broadcast %247 : vector<1x32xf32> to vector<16x32xf32>
    %269 = arith.addf %267, %268 : vector<16x32xf32>
    %270 = arith.truncf %269 : vector<16x32xf32> to vector<16x32xbf16>
    %c0_94 = arith.constant 0 : index
    %c0_95 = arith.constant 0 : index
    %271 = vector.load %arg23[%c0_94, %c0_95] : memref<32x64xbf16, #tpu.memory_space<vmem>>, vector<32x64xbf16>
    %cst_96 = arith.constant dense<0.000000e+00> : vector<16x64xf32>
    %272 = tpu.matmul %270, %271, %cst_96 {dimension_numbers = #tpu.dot_dimension_numbers<[1], [0], [0], [1], [0, 0, 1, 1], [], []>} : vector<16x32xbf16>, vector<32x64xbf16>, vector<16x64xf32> -> vector<16x64xf32>
    %c0_97 = arith.constant 0 : index
    %c0_98 = arith.constant 0 : index
    %273 = vector.load %arg24[%c0_97, %c0_98] : memref<1x64xf32, #tpu.memory_space<vmem>>, vector<1x64xf32>
    %274 = vector.broadcast %273 : vector<1x64xf32> to vector<16x64xf32>
    %275 = arith.addf %272, %274 : vector<16x64xf32>
    %cst_99 = arith.constant 0.000000e+00 : f32
    %276 = vector.broadcast %cst_99 : f32 to vector<16x64xf32>
    %277 = arith.maximumf %275, %276 : vector<16x64xf32>
    %278 = arith.truncf %277 : vector<16x64xf32> to vector<16x64xbf16>
    %c0_100 = arith.constant 0 : index
    %c0_101 = arith.constant 0 : index
    %279 = vector.load %arg25[%c0_100, %c0_101] : memref<64x32xbf16, #tpu.memory_space<vmem>>, vector<64x32xbf16>
    %cst_102 = arith.constant dense<0.000000e+00> : vector<16x32xf32>
    %280 = tpu.matmul %278, %279, %cst_102 {dimension_numbers = #tpu.dot_dimension_numbers<[1], [0], [0], [1], [0, 0, 1, 1], [], []>} : vector<16x64xbf16>, vector<64x32xbf16>, vector<16x32xf32> -> vector<16x32xf32>
    %c0_103 = arith.constant 0 : index
    %c0_104 = arith.constant 0 : index
    %281 = vector.load %arg26[%c0_103, %c0_104] : memref<1x32xf32, #tpu.memory_space<vmem>>, vector<1x32xf32>
    %282 = vector.broadcast %281 : vector<1x32xf32> to vector<16x32xf32>
    %283 = arith.addf %280, %282 : vector<16x32xf32>
    %284 = arith.addf %269, %283 : vector<16x32xf32>
    %c0_105 = arith.constant 0 : index
    %c0_106 = arith.constant 0 : index
    %285 = vector.load %arg27[%c0_105, %c0_106] : memref<1x32xf32, #tpu.memory_space<vmem>>, vector<1x32xf32>
    %c0_107 = arith.constant 0 : index
    %c0_108 = arith.constant 0 : index
    %286 = vector.load %arg28[%c0_107, %c0_108] : memref<1x32xf32, #tpu.memory_space<vmem>>, vector<1x32xf32>
    %cst_109 = arith.constant dense<0.000000e+00> : vector<16xf32>
    %287 = vector.multi_reduction <add>, %284, %cst_109 [1] : vector<16x32xf32> to vector<16xf32>
    %288 = vector.shape_cast %287 : vector<16xf32> to vector<16x1xf32>
    %cst_110 = arith.constant 3.200000e+01 : f32
    %289 = vector.broadcast %cst_110 : f32 to vector<16x1xf32>
    %290 = arith.divf %288, %289 : vector<16x1xf32>
    %291 = vector.broadcast %290 : vector<16x1xf32> to vector<16x32xf32>
    %292 = arith.subf %284, %291 : vector<16x32xf32>
    %293 = arith.mulf %292, %292 : vector<16x32xf32>
    %cst_111 = arith.constant dense<0.000000e+00> : vector<16xf32>
    %294 = vector.multi_reduction <add>, %293, %cst_111 [1] : vector<16x32xf32> to vector<16xf32>
    %295 = vector.shape_cast %294 : vector<16xf32> to vector<16x1xf32>
    %cst_112 = arith.constant 3.200000e+01 : f32
    %296 = vector.broadcast %cst_112 : f32 to vector<16x1xf32>
    %297 = arith.divf %295, %296 : vector<16x1xf32>
    %298 = vector.broadcast %290 : vector<16x1xf32> to vector<16x32xf32>
    %299 = arith.subf %284, %298 : vector<16x32xf32>
    %cst_113 = arith.constant 9.99999974E-6 : f32
    %300 = vector.broadcast %cst_113 : f32 to vector<16x1xf32>
    %301 = arith.addf %297, %300 : vector<16x1xf32>
    %302 = math.rsqrt %301 : vector<16x1xf32>
    %303 = vector.broadcast %302 : vector<16x1xf32> to vector<16x32xf32>
    %304 = arith.mulf %299, %303 : vector<16x32xf32>
    %305 = vector.broadcast %285 : vector<1x32xf32> to vector<16x32xf32>
    %306 = arith.mulf %304, %305 : vector<16x32xf32>
    %307 = vector.broadcast %286 : vector<1x32xf32> to vector<16x32xf32>
    %308 = arith.addf %306, %307 : vector<16x32xf32>
    %309 = arith.truncf %308 : vector<16x32xf32> to vector<16x32xbf16>
    %c0_114 = arith.constant 0 : index
    %c0_115 = arith.constant 0 : index
    %310 = vector.load %arg29[%c0_114, %c0_115] : memref<16x32xbf16, #tpu.memory_space<vmem>>, vector<16x32xbf16>
    tpu.vector_store %arg29[%c0_114, %c0_115], %309 {strides = array<i32>} : memref<16x32xbf16, #tpu.memory_space<vmem>>, vector<16x32xbf16>,
    %311 = arith.truncf %141 : vector<16x32xf32> to vector<16x32xbf16>
    %c0_116 = arith.constant 0 : index
    %c0_117 = arith.constant 0 : index
    %312 = vector.load %arg30[%c0_116, %c0_117] : memref<16x32xbf16, #tpu.memory_space<vmem>>, vector<16x32xbf16>
    tpu.vector_store %arg30[%c0_116, %c0_117], %311 {strides = array<i32>} : memref<16x32xbf16, #tpu.memory_space<vmem>>, vector<16x32xbf16>,
    return
  }
  func.func @transform_0(%arg0: i32) -> (i32, i32) {
    %c0_i32 = arith.constant 0 : i32
    %c0_i32_0 = arith.constant 0 : i32
    return %arg0, %c0_i32 : i32, i32
  }
  func.func @transform_1(%arg0: i32) -> (i32, i32) {
    %c0_i32 = arith.constant 0 : i32
    %c0_i32_0 = arith.constant 0 : i32
    %c0_i32_1 = arith.constant 0 : i32
    return %c0_i32, %c0_i32_0 : i32, i32
  }
  func.func @transform_2(%arg0: i32) -> (i32, i32) {
    %c0_i32 = arith.constant 0 : i32
    %c0_i32_0 = arith.constant 0 : i32
    %c0_i32_1 = arith.constant 0 : i32
    return %c0_i32, %c0_i32_0 : i32, i32
  }
  func.func @transform_3(%arg0: i32) -> (i32, i32) {
    %c0_i32 = arith.constant 0 : i32
    %c0_i32_0 = arith.constant 0 : i32
    %c0_i32_1 = arith.constant 0 : i32
    return %c0_i32, %c0_i32_0 : i32, i32
  }
  func.func @transform_4(%arg0: i32) -> (i32, i32) {
    %c0_i32 = arith.constant 0 : i32
    %c0_i32_0 = arith.constant 0 : i32
    %c0_i32_1 = arith.constant 0 : i32
    return %c0_i32, %c0_i32_0 : i32, i32
  }
  func.func @transform_5(%arg0: i32) -> (i32, i32) {
    %c0_i32 = arith.constant 0 : i32
    %c0_i32_0 = arith.constant 0 : i32
    %c0_i32_1 = arith.constant 0 : i32
    return %c0_i32, %c0_i32_0 : i32, i32
  }
  func.func @transform_6(%arg0: i32) -> (i32, i32) {
    %c0_i32 = arith.constant 0 : i32
    %c0_i32_0 = arith.constant 0 : i32
    %c0_i32_1 = arith.constant 0 : i32
    return %c0_i32, %c0_i32_0 : i32, i32
  }
  func.func @transform_7(%arg0: i32) -> (i32, i32) {
    %c0_i32 = arith.constant 0 : i32
    %c0_i32_0 = arith.constant 0 : i32
    %c0_i32_1 = arith.constant 0 : i32
    return %c0_i32, %c0_i32_0 : i32, i32
  }
  func.func @transform_8(%arg0: i32) -> (i32, i32) {
    %c0_i32 = arith.constant 0 : i32
    %c0_i32_0 = arith.constant 0 : i32
    %c0_i32_1 = arith.constant 0 : i32
    return %c0_i32, %c0_i32_0 : i32, i32
  }
  func.func @transform_9(%arg0: i32) -> (i32, i32) {
    %c0_i32 = arith.constant 0 : i32
    %c0_i32_0 = arith.constant 0 : i32
    %c0_i32_1 = arith.constant 0 : i32
    return %c0_i32, %c0_i32_0 : i32, i32
  }
  func.func @transform_10(%arg0: i32) -> (i32, i32) {
    %c0_i32 = arith.constant 0 : i32
    %c0_i32_0 = arith.constant 0 : i32
    %c0_i32_1 = arith.constant 0 : i32
    return %c0_i32, %c0_i32_0 : i32, i32
  }
  func.func @transform_11(%arg0: i32) -> (i32, i32) {
    %c0_i32 = arith.constant 0 : i32
    %c0_i32_0 = arith.constant 0 : i32
    %c0_i32_1 = arith.constant 0 : i32
    return %c0_i32, %c0_i32_0 : i32, i32
  }
  func.func @transform_12(%arg0: i32) -> (i32, i32) {
    %c0_i32 = arith.constant 0 : i32
    %c0_i32_0 = arith.constant 0 : i32
    %c0_i32_1 = arith.constant 0 : i32
    return %c0_i32, %c0_i32_0 : i32, i32
  }
  func.func @transform_13(%arg0: i32) -> (i32, i32) {
    %c0_i32 = arith.constant 0 : i32
    %c0_i32_0 = arith.constant 0 : i32
    %c0_i32_1 = arith.constant 0 : i32
    return %c0_i32, %c0_i32_0 : i32, i32
  }
  func.func @transform_14(%arg0: i32) -> (i32, i32) {
    %c0_i32 = arith.constant 0 : i32
    %c0_i32_0 = arith.constant 0 : i32
    %c0_i32_1 = arith.constant 0 : i32
    return %c0_i32, %c0_i32_0 : i32, i32
  }
  func.func @transform_15(%arg0: i32) -> (i32, i32) {
    %c0_i32 = arith.constant 0 : i32
    %c0_i32_0 = arith.constant 0 : i32
    %c0_i32_1 = arith.constant 0 : i32
    return %c0_i32, %c0_i32_0 : i32, i32
  }
  func.func @transform_16(%arg0: i32) -> (i32, i32) {
    %c0_i32 = arith.constant 0 : i32
    %c0_i32_0 = arith.constant 0 : i32
    %c0_i32_1 = arith.constant 0 : i32
    return %c0_i32, %c0_i32_0 : i32, i32
  }
  func.func @transform_17(%arg0: i32) -> (i32, i32) {
    %c0_i32 = arith.constant 0 : i32
    %c0_i32_0 = arith.constant 0 : i32
    %c0_i32_1 = arith.constant 0 : i32
    return %c0_i32, %c0_i32_0 : i32, i32
  }
  func.func @transform_18(%arg0: i32) -> (i32, i32) {
    %c0_i32 = arith.constant 0 : i32
    %c0_i32_0 = arith.constant 0 : i32
    %c0_i32_1 = arith.constant 0 : i32
    return %c0_i32, %c0_i32_0 : i32, i32
  }
  func.func @transform_19(%arg0: i32) -> (i32, i32) {
    %c0_i32 = arith.constant 0 : i32
    %c0_i32_0 = arith.constant 0 : i32
    %c0_i32_1 = arith.constant 0 : i32
    return %c0_i32, %c0_i32_0 : i32, i32
  }
  func.func @transform_20(%arg0: i32) -> (i32, i32) {
    %c0_i32 = arith.constant 0 : i32
    %c0_i32_0 = arith.constant 0 : i32
    %c0_i32_1 = arith.constant 0 : i32
    return %c0_i32, %c0_i32_0 : i32, i32
  }
  func.func @transform_21(%arg0: i32) -> (i32, i32) {
    %c0_i32 = arith.constant 0 : i32
    %c0_i32_0 = arith.constant 0 : i32
    %c0_i32_1 = arith.constant 0 : i32
    return %c0_i32, %c0_i32_0 : i32, i32
  }
  func.func @transform_22(%arg0: i32) -> (i32, i32) {
    %c0_i32 = arith.constant 0 : i32
    %c0_i32_0 = arith.constant 0 : i32
    %c0_i32_1 = arith.constant 0 : i32
    return %c0_i32, %c0_i32_0 : i32, i32
  }
  func.func @transform_23(%arg0: i32) -> (i32, i32) {
    %c0_i32 = arith.constant 0 : i32
    %c0_i32_0 = arith.constant 0 : i32
    %c0_i32_1 = arith.constant 0 : i32
    return %c0_i32, %c0_i32_0 : i32, i32
  }
  func.func @transform_24(%arg0: i32) -> (i32, i32) {
    %c0_i32 = arith.constant 0 : i32
    %c0_i32_0 = arith.constant 0 : i32
    %c0_i32_1 = arith.constant 0 : i32
    return %c0_i32, %c0_i32_0 : i32, i32
  }
  func.func @transform_25(%arg0: i32) -> (i32, i32) {
    %c0_i32 = arith.constant 0 : i32
    %c0_i32_0 = arith.constant 0 : i32
    %c0_i32_1 = arith.constant 0 : i32
    return %c0_i32, %c0_i32_0 : i32, i32
  }
  func.func @transform_26(%arg0: i32) -> (i32, i32) {
    %c0_i32 = arith.constant 0 : i32
    %c0_i32_0 = arith.constant 0 : i32
    %c0_i32_1 = arith.constant 0 : i32
    return %c0_i32, %c0_i32_0 : i32, i32
  }
  func.func @transform_27(%arg0: i32) -> (i32, i32) {
    %c0_i32 = arith.constant 0 : i32
    %c0_i32_0 = arith.constant 0 : i32
    %c0_i32_1 = arith.constant 0 : i32
    return %c0_i32, %c0_i32_0 : i32, i32
  }
  func.func @transform_28(%arg0: i32) -> (i32, i32) {
    %c0_i32 = arith.constant 0 : i32
    %c0_i32_0 = arith.constant 0 : i32
    return %arg0, %c0_i32 : i32, i32
  }
  func.func @transform_29(%arg0: i32) -> (i32, i32) {
    %c0_i32 = arith.constant 0 : i32
    %c0_i32_0 = arith.constant 0 : i32
    return %arg0, %c0_i32 : i32, i32
  }
}

</mosaic_0001>

<llo_original>
// kernel: tpu_custom_call.1
$region0: #{tpu_custom_call.1}
  #allocation0 [shape = 'u32[]', space=smem, size = 0x4, offset = 0x4, fixed_abs, tag = 'smem constant byte address 0x4 - core index']
  #allocation1 [shape = 'u32[144,128]{1,0:T(1,128)}', space=vmem, size = 0x12000, scoped, tag = 'internal scratch']
  %s0 = inlined_call_operand.smem [shape: u32[30], index: -1, kind: input, shape index: {}]
  %s1 = sld [smem:[%s0]]
  %s2 = scalar_lea.smem %s0, 1
  %s3 = sld [smem:[%s2]]
  %s4 = scalar_lea.smem %s0, 2
  %s5 = sld [smem:[%s4]]
  %s6 = scalar_lea.smem %s0, 3
  %s7 = sld [smem:[%s6]]
  %s8 = scalar_lea.smem %s0, 4
  %s9 = sld [smem:[%s8]]
  %s10 = scalar_lea.smem %s0, 5
  %s11 = sld [smem:[%s10]]
  %s12 = scalar_lea.smem %s0, 6
  %s13 = sld [smem:[%s12]]
  %s14 = scalar_lea.smem %s0, 7
  %s15 = sld [smem:[%s14]]
  %s16 = scalar_lea.smem %s0, 8
  %s17 = sld [smem:[%s16]]
  %s18 = scalar_lea.smem %s0, 9
  %s19 = sld [smem:[%s18]]
  %s20 = scalar_lea.smem %s0, 10
  %s21 = sld [smem:[%s20]]
  %s22 = scalar_lea.smem %s0, 11
  %s23 = sld [smem:[%s22]]
  %s24 = scalar_lea.smem %s0, 12
  %s25 = sld [smem:[%s24]]
  %s26 = scalar_lea.smem %s0, 13
  %s27 = sld [smem:[%s26]]
  %s28 = scalar_lea.smem %s0, 14
  %s29 = sld [smem:[%s28]]
  %s30 = scalar_lea.smem %s0, 15
  %s31 = sld [smem:[%s30]]
  %s32 = scalar_lea.smem %s0, 16
  %s33 = sld [smem:[%s32]]
  %s34 = scalar_lea.smem %s0, 17
  %s35 = sld [smem:[%s34]]
  %s36 = scalar_lea.smem %s0, 18
  %s37 = sld [smem:[%s36]]
  %s38 = scalar_lea.smem %s0, 19
  %s39 = sld [smem:[%s38]]
  %s40 = scalar_lea.smem %s0, 20
  %s41 = sld [smem:[%s40]]
  %s42 = scalar_lea.smem %s0, 21
  %s43 = sld [smem:[%s42]]
  %s44 = scalar_lea.smem %s0, 22
  %s45 = sld [smem:[%s44]]
  %s46 = scalar_lea.smem %s0, 23
  %s47 = sld [smem:[%s46]]
  %s48 = scalar_lea.smem %s0, 24
  %s49 = sld [smem:[%s48]]
  %s50 = scalar_lea.smem %s0, 25
  %s51 = sld [smem:[%s50]]
  %s52 = scalar_lea.smem %s0, 26
  %s53 = sld [smem:[%s52]]
  %s54 = scalar_lea.smem %s0, 27
  %s55 = sld [smem:[%s54]]
  %s56 = scalar_lea.smem %s0, 28
  %s57 = sld [smem:[%s56]]
  %s58 = scalar_lea.smem %s0, 29
  %s59 = sld [smem:[%s58]]
  %60 = xla_tuple %s57, %s59
  %s61 = sld [smem:[#allocation0]]
  $region182: #{tpu_custom_call.1} parent=0
    _
  %s63 = ssub.s32 1, %s61
  %s64 = scalar_select 0, %s63, %s61
  $region1: #{tpu_custom_call.1} parent=0
    #allocation2 [shape = 'u8[4096]{0}', space=vmem, size = 0x1000, scoped, tag = 'input window, operand 0, single buffered']
    #allocation3 [shape = 's32[1]{0}', space=sflag, size = 0x4, scoped, tag = 'scoped memory for tpu_custom_call.1']
    #allocation4 [shape = 's32[1]{0}', space=sflag, size = 0x4, scoped, tag = 'scoped memory for tpu_custom_call.1']
    #allocation5 [shape = 'u8[2048]{0}', space=vmem, size = 0x800, scoped, tag = 'input window, operand 1, single buffered']
    #allocation6 [shape = 's32[1]{0}', space=sflag, size = 0x4, scoped, tag = 'scoped memory for tpu_custom_call.1']
    #allocation7 [shape = 'u8[512]{0}', space=vmem, size = 0x400, scoped, tag = 'input window, operand 3, single buffered']
    #allocation8 [shape = 'u8[512]{0}', space=vmem, size = 0x400, scoped, tag = 'input window, operand 5, single buffered']
    #allocation9 [shape = 's32[1]{0}', space=sflag, size = 0x4, scoped, tag = 'scoped memory for tpu_custom_call.1']
    #allocation10 [shape = 'u8[512]{0}', space=vmem, size = 0x400, scoped, tag = 'input window, operand 7, single buffered']
    #allocation11 [shape = 'u8[8192]{0}', space=vmem, size = 0x2000, scoped, tag = 'input window, operand 8, single buffered']
    #allocation12 [shape = 's32[1]{0}', space=sflag, size = 0x4, scoped, tag = 'scoped memory for tpu_custom_call.1']
    #allocation13 [shape = 'u8[512]{0}', space=vmem, size = 0x400, scoped, tag = 'input window, operand 9, single buffered']
    #allocation14 [shape = 'u8[512]{0}', space=vmem, size = 0x400, scoped, tag = 'input window, operand 11, single buffered']
    #allocation15 [shape = 's32[1]{0}', space=sflag, size = 0x4, scoped, tag = 'scoped memory for tpu_custom_call.1']
    #allocation16 [shape = 'u8[8192]{0}', space=vmem, size = 0x2000, scoped, tag = 'input window, operand 12, single buffered']
    #allocation17 [shape = 'u8[512]{0}', space=vmem, size = 0x400, scoped, tag = 'input window, operand 13, single buffered']
    #allocation18 [shape = 's32[1]{0}', space=sflag, size = 0x4, scoped, tag = 'scoped memory for tpu_custom_call.1']
    #allocation19 [shape = 'u8[512]{0}', space=vmem, size = 0x400, scoped, tag = 'input window, operand 15, single buffered']
    #allocation20 [shape = 'u8[8192]{0}', space=vmem, size = 0x2000, scoped, tag = 'input window, operand 16, single buffered']
    #allocation21 [shape = 's32[1]{0}', space=sflag, size = 0x4, scoped, tag = 'scoped memory for tpu_custom_call.1']
    #allocation22 [shape = 'u8[512]{0}', space=vmem, size = 0x400, scoped, tag = 'input window, operand 17, single buffered']
    #allocation23 [shape = 'u8[4096]{0}', space=vmem, size = 0x1000, scoped, tag = 'output window, operand 0, single buffered']
    #allocation24 [shape = 'u8[4096]{0}', space=vmem, size = 0x1000, scoped, tag = 'output window, operand 1, single buffered']
    #allocation25 [shape = 's32[1]{0}', space=sflag, size = 0x4, scoped, tag = 'scoped memory for tpu_custom_call.1']
    %65 = vsyncpa [#allocation3], 0
    %66 = vsyncpa [#allocation6], 0
    %67 = vsyncpa [#allocation9], 0
    %68 = vsyncpa [#allocation12], 0
    %69 = vsyncpa [#allocation15], 0
    %70 = vsyncpa [#allocation18], 0
    %71 = vsyncpa [#allocation21], 0
    %72 = vsyncpa [#allocation4], 0
    %73 = vsyncpa [#allocation25], 0
    // Predicated region
    $region2: #{tpu_custom_call.1} parent=1 // pred_check
      _
    $region3: #{tpu_custom_call.1} parent=1 // pred_check_branch
      %75 = sbr.rel (0) target = $region5
    $region4: #{tpu_custom_call.1} parent=1 // pred_region
      %s77 = ssub.s32 128, 128
      %78 = vsyncadd [#allocation3], %s77
      %s79 = sshll.u32 [#allocation2], 4
      %s80 = int_to_ptr.vmem [resolvable:$true] %s79
      %85 = dma.hbm_to_vmem [thread:$0]  %s1, 128, %s80, [#allocation3], 64, 64, 4
    $region5: #{tpu_custom_call.1} parent=1 // pred_fallthru
      _
    // Predicated region
    $region6: #{tpu_custom_call.1} parent=1 // pred_check
      _
    $region7: #{tpu_custom_call.1} parent=1 // pred_check_branch
      %87 = sbr.rel (0) target = $region9
    $region8: #{tpu_custom_call.1} parent=1 // pred_region
      %s89 = ssub.s32 64, 64
      %90 = vsyncadd [#allocation6], %s89
      %s92 = sshll.u32 [#allocation5], 4
      %s93 = int_to_ptr.vmem [resolvable:$true] %s92
      %95 = dma.hbm_to_vmem [thread:$0]  %s3, 64, %s93, [#allocation6]
    $region9: #{tpu_custom_call.1} parent=1 // pred_fallthru
      _
    // Predicated region
    $region10: #{tpu_custom_call.1} parent=1 // pred_check
      _
    $region11: #{tpu_custom_call.1} parent=1 // pred_check_branch
      %97 = sbr.rel (0) target = $region13
    $region12: #{tpu_custom_call.1} parent=1 // pred_region
      _
    $region13: #{tpu_custom_call.1} parent=1 // pred_fallthru
      _
    // Predicated region
    $region14: #{tpu_custom_call.1} parent=1 // pred_check
      _
    $region15: #{tpu_custom_call.1} parent=1 // pred_check_branch
      %99 = sbr.rel (0) target = $region17
    $region16: #{tpu_custom_call.1} parent=1 // pred_region
      %s101 = ssub.s32 16, 16
      %102 = vsyncadd [#allocation6], %s101
      %s104 = sshll.u32 [#allocation7], 4
      %s105 = int_to_ptr.vmem [resolvable:$true] %s104
      %107 = dma.hbm_to_vmem [thread:$0]  %s7, 16, %s105, [#allocation6]
    $region17: #{tpu_custom_call.1} parent=1 // pred_fallthru
      _
    // Predicated region
    $region18: #{tpu_custom_call.1} parent=1 // pred_check
      _
    $region19: #{tpu_custom_call.1} parent=1 // pred_check_branch
      %109 = sbr.rel (0) target = $region21
    $region20: #{tpu_custom_call.1} parent=1 // pred_region
      _
    $region21: #{tpu_custom_call.1} parent=1 // pred_fallthru
      _
    // Predicated region
    $region22: #{tpu_custom_call.1} parent=1 // pred_check
      _
    $region23: #{tpu_custom_call.1} parent=1 // pred_check_branch
      %111 = sbr.rel (0) target = $region25
    $region24: #{tpu_custom_call.1} parent=1 // pred_region
      %s113 = ssub.s32 16, 16
      %114 = vsyncadd [#allocation9], %s113
      %s116 = sshll.u32 [#allocation8], 4
      %s117 = int_to_ptr.vmem [resolvable:$true] %s116
      %119 = dma.hbm_to_vmem [thread:$0]  %s11, 16, %s117, [#allocation9]
    $region25: #{tpu_custom_call.1} parent=1 // pred_fallthru
      _
    // Predicated region
    $region26: #{tpu_custom_call.1} parent=1 // pred_check
      _
    $region27: #{tpu_custom_call.1} parent=1 // pred_check_branch
      %121 = sbr.rel (0) target = $region29
    $region28: #{tpu_custom_call.1} parent=1 // pred_region
      _
    $region29: #{tpu_custom_call.1} parent=1 // pred_fallthru
      _
    // Predicated region
    $region30: #{tpu_custom_call.1} parent=1 // pred_check
      _
    $region31: #{tpu_custom_call.1} parent=1 // pred_check_branch
      %123 = sbr.rel (0) target = $region33
    $region32: #{tpu_custom_call.1} parent=1 // pred_region
      %s125 = ssub.s32 16, 16
      %126 = vsyncadd [#allocation9], %s125
      %s128 = sshll.u32 [#allocation10], 4
      %s129 = int_to_ptr.vmem [resolvable:$true] %s128
      %131 = dma.hbm_to_vmem [thread:$0]  %s15, 16, %s129, [#allocation9]
    $region33: #{tpu_custom_call.1} parent=1 // pred_fallthru
      _
    // Predicated region
    $region34: #{tpu_custom_call.1} parent=1 // pred_check
      _
    $region35: #{tpu_custom_call.1} parent=1 // pred_check_branch
      %133 = sbr.rel (0) target = $region37
    $region36: #{tpu_custom_call.1} parent=1 // pred_region
      %s135 = ssub.s32 256, 256
      %136 = vsyncadd [#allocation12], %s135
      %s137 = sshll.u32 [#allocation11], 4
      %s138 = int_to_ptr.vmem [resolvable:$true] %s137
      %143 = dma.hbm_to_vmem [thread:$0]  %s17, 256, %s138, [#allocation12], 64, 64, 4
    $region37: #{tpu_custom_call.1} parent=1 // pred_fallthru
      _
    // Predicated region
    $region38: #{tpu_custom_call.1} parent=1 // pred_check
      _
    $region39: #{tpu_custom_call.1} parent=1 // pred_check_branch
      %145 = sbr.rel (0) target = $region41
    $region40: #{tpu_custom_call.1} parent=1 // pred_region
      %s147 = ssub.s32 16, 16
      %148 = vsyncadd [#allocation12], %s147
      %s150 = sshll.u32 [#allocation13], 4
      %s151 = int_to_ptr.vmem [resolvable:$true] %s150
      %153 = dma.hbm_to_vmem [thread:$0]  %s19, 16, %s151, [#allocation12]
    $region41: #{tpu_custom_call.1} parent=1 // pred_fallthru
      _
    // Predicated region
    $region42: #{tpu_custom_call.1} parent=1 // pred_check
      _
    $region43: #{tpu_custom_call.1} parent=1 // pred_check_branch
      %155 = sbr.rel (0) target = $region45
    $region44: #{tpu_custom_call.1} parent=1 // pred_region
      _
    $region45: #{tpu_custom_call.1} parent=1 // pred_fallthru
      _
    // Predicated region
    $region46: #{tpu_custom_call.1} parent=1 // pred_check
      _
    $region47: #{tpu_custom_call.1} parent=1 // pred_check_branch
      %157 = sbr.rel (0) target = $region49
    $region48: #{tpu_custom_call.1} parent=1 // pred_region
      %s159 = ssub.s32 16, 16
      %160 = vsyncadd [#allocation15], %s159
      %s162 = sshll.u32 [#allocation14], 4
      %s163 = int_to_ptr.vmem [resolvable:$true] %s162
      %165 = dma.hbm_to_vmem [thread:$0]  %s23, 16, %s163, [#allocation15]
    $region49: #{tpu_custom_call.1} parent=1 // pred_fallthru
      _
    // Predicated region
    $region50: #{tpu_custom_call.1} parent=1 // pred_check
      _
    $region51: #{tpu_custom_call.1} parent=1 // pred_check_branch
      %167 = sbr.rel (0) target = $region53
    $region52: #{tpu_custom_call.1} parent=1 // pred_region
      %s169 = ssub.s32 256, 256
      %170 = vsyncadd [#allocation15], %s169
      %s171 = sshll.u32 [#allocation16], 4
      %s172 = int_to_ptr.vmem [resolvable:$true] %s171
      %177 = dma.hbm_to_vmem [thread:$0]  %s25, 256, %s172, [#allocation15], 64, 64, 4
    $region53: #{tpu_custom_call.1} parent=1 // pred_fallthru
      _
    // Predicated region
    $region54: #{tpu_custom_call.1} parent=1 // pred_check
      _
    $region55: #{tpu_custom_call.1} parent=1 // pred_check_branch
      %179 = sbr.rel (0) target = $region57
    $region56: #{tpu_custom_call.1} parent=1 // pred_region
      %s181 = ssub.s32 16, 16
      %182 = vsyncadd [#allocation18], %s181
      %s184 = sshll.u32 [#allocation17], 4
      %s185 = int_to_ptr.vmem [resolvable:$true] %s184
      %187 = dma.hbm_to_vmem [thread:$0]  %s27, 16, %s185, [#allocation18]
    $region57: #{tpu_custom_call.1} parent=1 // pred_fallthru
      _
    // Predicated region
    $region58: #{tpu_custom_call.1} parent=1 // pred_check
      _
    $region59: #{tpu_custom_call.1} parent=1 // pred_check_branch
      %189 = sbr.rel (0) target = $region61
    $region60: #{tpu_custom_call.1} parent=1 // pred_region
      _
    $region61: #{tpu_custom_call.1} parent=1 // pred_fallthru
      _
    // Predicated region
    $region62: #{tpu_custom_call.1} parent=1 // pred_check
      _
    $region63: #{tpu_custom_call.1} parent=1 // pred_check_branch
      %191 = sbr.rel (0) target = $region65
    $region64: #{tpu_custom_call.1} parent=1 // pred_region
      %s193 = ssub.s32 16, 16
      %194 = vsyncadd [#allocation18], %s193
      %s196 = sshll.u32 [#allocation19], 4
      %s197 = int_to_ptr.vmem [resolvable:$true] %s196
      %199 = dma.hbm_to_vmem [thread:$0]  %s31, 16, %s197, [#allocation18]
    $region65: #{tpu_custom_call.1} parent=1 // pred_fallthru
      _
    // Predicated region
    $region66: #{tpu_custom_call.1} parent=1 // pred_check
      _
    $region67: #{tpu_custom_call.1} parent=1 // pred_check_branch
      %201 = sbr.rel (0) target = $region69
    $region68: #{tpu_custom_call.1} parent=1 // pred_region
      %s203 = ssub.s32 256, 256
      %204 = vsyncadd [#allocation21], %s203
      %s205 = sshll.u32 [#allocation20], 4
      %s206 = int_to_ptr.vmem [resolvable:$true] %s205
      %211 = dma.hbm_to_vmem [thread:$0]  %s33, 256, %s206, [#allocation21], 64, 64, 4
    $region69: #{tpu_custom_call.1} parent=1 // pred_fallthru
      _
    // Predicated region
    $region70: #{tpu_custom_call.1} parent=1 // pred_check
      _
    $region71: #{tpu_custom_call.1} parent=1 // pred_check_branch
      %213 = sbr.rel (0) target = $region73
    $region72: #{tpu_custom_call.1} parent=1 // pred_region
      %s215 = ssub.s32 16, 16
      %216 = vsyncadd [#allocation21], %s215
      %s218 = sshll.u32 [#allocation22], 4
      %s219 = int_to_ptr.vmem [resolvable:$true] %s218
      %221 = dma.hbm_to_vmem [thread:$0]  %s35, 16, %s219, [#allocation21]
    $region73: #{tpu_custom_call.1} parent=1 // pred_fallthru
      _
    // Predicated region
    $region74: #{tpu_custom_call.1} parent=1 // pred_check
      _
    $region75: #{tpu_custom_call.1} parent=1 // pred_check_branch
      %223 = sbr.rel (0) target = $region77
    $region76: #{tpu_custom_call.1} parent=1 // pred_region
      _
    $region77: #{tpu_custom_call.1} parent=1 // pred_fallthru
      _
    // Predicated region
    $region78: #{tpu_custom_call.1} parent=1 // pred_check
      _
    $region79: #{tpu_custom_call.1} parent=1 // pred_check_branch
      %225 = sbr.rel (0) target = $region81
    $region80: #{tpu_custom_call.1} parent=1 // pred_region
      _
    $region81: #{tpu_custom_call.1} parent=1 // pred_fallthru
      _
    // Predicated region
    $region82: #{tpu_custom_call.1} parent=1 // pred_check
      _
    $region83: #{tpu_custom_call.1} parent=1 // pred_check_branch
      %227 = sbr.rel (0) target = $region85
    $region84: #{tpu_custom_call.1} parent=1 // pred_region
      _
    $region85: #{tpu_custom_call.1} parent=1 // pred_fallthru
      _
    // Predicated region
    $region86: #{tpu_custom_call.1} parent=1 // pred_check
      _
    $region87: #{tpu_custom_call.1} parent=1 // pred_check_branch
      %229 = sbr.rel (0) target = $region89
    $region88: #{tpu_custom_call.1} parent=1 // pred_region
      _
    $region89: #{tpu_custom_call.1} parent=1 // pred_fallthru
      _
    // Predicated region
    $region90: #{tpu_custom_call.1} parent=1 // pred_check
      _
    $region91: #{tpu_custom_call.1} parent=1 // pred_check_branch
      %231 = sbr.rel (0) target = $region93
    $region92: #{tpu_custom_call.1} parent=1 // pred_region
      _
    $region93: #{tpu_custom_call.1} parent=1 // pred_fallthru
      _
    // Predicated region
    $region94: #{tpu_custom_call.1} parent=1 // pred_check
      _
    $region95: #{tpu_custom_call.1} parent=1 // pred_check_branch
      %233 = sbr.rel (0) target = $region97
    $region96: #{tpu_custom_call.1} parent=1 // pred_region
      _
    $region97: #{tpu_custom_call.1} parent=1 // pred_fallthru
      _
    // Predicated region
    $region98: #{tpu_custom_call.1} parent=1 // pred_check
      _
    $region99: #{tpu_custom_call.1} parent=1 // pred_check_branch
      %235 = sbr.rel (0) target = $region101
    $region100: #{tpu_custom_call.1} parent=1 // pred_region
      _
    $region101: #{tpu_custom_call.1} parent=1 // pred_fallthru
      _
    // Predicated region
    $region102: #{tpu_custom_call.1} parent=1 // pred_check
      _
    $region103: #{tpu_custom_call.1} parent=1 // pred_check_branch
      %237 = sbr.rel (0) target = $region105
    $region104: #{tpu_custom_call.1} parent=1 // pred_region
      _
    $region105: #{tpu_custom_call.1} parent=1 // pred_fallthru
      _
    // Predicated region
    $region106: #{tpu_custom_call.1} parent=1 // pred_check
      _
    $region107: #{tpu_custom_call.1} parent=1 // pred_check_branch
      %239 = sbr.rel (0) target = $region109
    $region108: #{tpu_custom_call.1} parent=1 // pred_region
      _
    $region109: #{tpu_custom_call.1} parent=1 // pred_fallthru
      _
    // Predicated region
    $region110: #{tpu_custom_call.1} parent=1 // pred_check
      _
    $region111: #{tpu_custom_call.1} parent=1 // pred_check_branch
      %241 = sbr.rel (0) target = $region113
    $region112: #{tpu_custom_call.1} parent=1 // pred_region
      _
    $region113: #{tpu_custom_call.1} parent=1 // pred_fallthru
      _
    // Predicated region
    $region114: #{tpu_custom_call.1} parent=1 // pred_check
      _
    $region115: #{tpu_custom_call.1} parent=1 // pred_check_branch
      %243 = sbr.rel (0) target = $region117
    $region116: #{tpu_custom_call.1} parent=1 // pred_region
      %244 = dma.done [#allocation3], 128
    $region117: #{tpu_custom_call.1} parent=1 // pred_fallthru
      _
    // Predicated region
    $region118: #{tpu_custom_call.1} parent=1 // pred_check
      _
    $region119: #{tpu_custom_call.1} parent=1 // pred_check_branch
      %246 = sbr.rel (0) target = $region121
    $region120: #{tpu_custom_call.1} parent=1 // pred_region
      %247 = dma.done [#allocation6], 64
    $region121: #{tpu_custom_call.1} parent=1 // pred_fallthru
      _
    // Predicated region
    $region122: #{tpu_custom_call.1} parent=1 // pred_check
      _
    $region123: #{tpu_custom_call.1} parent=1 // pred_check_branch
      %249 = sbr.rel (0) target = $region125
    $region124: #{tpu_custom_call.1} parent=1 // pred_region
      %250 = dma.done [#allocation6], 16
    $region125: #{tpu_custom_call.1} parent=1 // pred_fallthru
      _
    // Predicated region
    $region126: #{tpu_custom_call.1} parent=1 // pred_check
      _
    $region127: #{tpu_custom_call.1} parent=1 // pred_check_branch
      %252 = sbr.rel (0) target = $region129
    $region128: #{tpu_custom_call.1} parent=1 // pred_region
      %253 = dma.done [#allocation9], 16
    $region129: #{tpu_custom_call.1} parent=1 // pred_fallthru
      _
    // Predicated region
    $region130: #{tpu_custom_call.1} parent=1 // pred_check
      _
    $region131: #{tpu_custom_call.1} parent=1 // pred_check_branch
      %255 = sbr.rel (0) target = $region133
    $region132: #{tpu_custom_call.1} parent=1 // pred_region
      %256 = dma.done [#allocation9], 16
    $region133: #{tpu_custom_call.1} parent=1 // pred_fallthru
      _
    // Predicated region
    $region134: #{tpu_custom_call.1} parent=1 // pred_check
      _
    $region135: #{tpu_custom_call.1} parent=1 // pred_check_branch
      %258 = sbr.rel (0) target = $region137
    $region136: #{tpu_custom_call.1} parent=1 // pred_region
      %259 = dma.done [#allocation12], 256
    $region137: #{tpu_custom_call.1} parent=1 // pred_fallthru
      _
    // Predicated region
    $region138: #{tpu_custom_call.1} parent=1 // pred_check
      _
    $region139: #{tpu_custom_call.1} parent=1 // pred_check_branch
      %261 = sbr.rel (0) target = $region141
    $region140: #{tpu_custom_call.1} parent=1 // pred_region
      %262 = dma.done [#allocation12], 16
    $region141: #{tpu_custom_call.1} parent=1 // pred_fallthru
      _
    // Predicated region
    $region142: #{tpu_custom_call.1} parent=1 // pred_check
      _
    $region143: #{tpu_custom_call.1} parent=1 // pred_check_branch
      %264 = sbr.rel (0) target = $region145
    $region144: #{tpu_custom_call.1} parent=1 // pred_region
      %265 = dma.done [#allocation15], 16
    $region145: #{tpu_custom_call.1} parent=1 // pred_fallthru
      _
    // Predicated region
    $region146: #{tpu_custom_call.1} parent=1 // pred_check
      _
    $region147: #{tpu_custom_call.1} parent=1 // pred_check_branch
      %267 = sbr.rel (0) target = $region149
    $region148: #{tpu_custom_call.1} parent=1 // pred_region
      %268 = dma.done [#allocation15], 256
    $region149: #{tpu_custom_call.1} parent=1 // pred_fallthru
      _
    // Predicated region
    $region150: #{tpu_custom_call.1} parent=1 // pred_check
      _
    $region151: #{tpu_custom_call.1} parent=1 // pred_check_branch
      %270 = sbr.rel (0) target = $region153
    $region152: #{tpu_custom_call.1} parent=1 // pred_region
      %271 = dma.done [#allocation18], 16
    $region153: #{tpu_custom_call.1} parent=1 // pred_fallthru
      _
    // Predicated region
    $region154: #{tpu_custom_call.1} parent=1 // pred_check
      _
    $region155: #{tpu_custom_call.1} parent=1 // pred_check_branch
      %273 = sbr.rel (0) target = $region157
    $region156: #{tpu_custom_call.1} parent=1 // pred_region
      %274 = dma.done [#allocation18], 16
    $region157: #{tpu_custom_call.1} parent=1 // pred_fallthru
      _
    // Predicated region
    $region158: #{tpu_custom_call.1} parent=1 // pred_check
      _
    $region159: #{tpu_custom_call.1} parent=1 // pred_check_branch
      %276 = sbr.rel (0) target = $region161
    $region160: #{tpu_custom_call.1} parent=1 // pred_region
      %277 = dma.done [#allocation21], 256
    $region161: #{tpu_custom_call.1} parent=1 // pred_fallthru
      _
    // Predicated region
    $region162: #{tpu_custom_call.1} parent=1 // pred_check
      _
    $region163: #{tpu_custom_call.1} parent=1 // pred_check_branch
      %279 = sbr.rel (0) target = $region165
    $region164: #{tpu_custom_call.1} parent=1 // pred_region
      %280 = dma.done [#allocation21], 16
    $region165: #{tpu_custom_call.1} parent=1 // pred_fallthru
      _
    %v282 = vld [vmem:[#allocation2] sm:$0xf]
    %v283 = vld [vmem:[#allocation2 + $0x4] sm:$0xf]
    %v284 = vld [vmem:[#allocation5] sm:$0xf]
    %v285 = vld [vmem:[%s9] sm:$0xf]
    %v286 = vld [vmem:[%s9 + $0x4] sm:$0xf]
    %v287 = vld [vmem:[%s9 + $0x8] sm:$0xf]
    %v288 = vld [vmem:[%s9 + $0xc] sm:$0xf]
    %v289 = vld [vmem:[#allocation8] sm:$0x1]
    %v291 = vlaneseq
    %v292 = vshrl.u32 %v291, 7
    %v293 = vsub.s32 0, %v292
    %v294 = vrot.slane %v289, %v293
    %v298 = vunpack.c.l.b16 %v282
    %v299 = vunpack.c.l.b16 %v283
    %v300 = vpack.c.b16 %v299, %v298
    %v305 = vunpack.c.l.b16 %v285
    %v306 = vunpack.c.l.b16 %v286
    %v307 = vunpack.c.l.b16 %v287
    %v308 = vunpack.c.l.b16 %v288
    %v309 = vpack.c.b16 %v306, %v305
    %v310 = vpack.c.b16 %v308, %v307
    %vm313 = vcmask 261120
    %v315 = vsel %vm313, %v300, 0
    %317 = vmatprep.subr.bf16.mxu0 0
    %318 = vmatpush1.bf16.msra.mxu0 %v309
    %319 = vmatprep.subr.bf16.mxu0 0
    %320 = vmatpush1.bf16.msra.mxu0 %v310
    %321 = vmatprep.subr.bf16.mxu0 0
    %322 = vmatpush1.bf16.msra.mxu0 0
    %323 = vmatprep.subr.bf16.mxu0 0
    %324 = vmatpush1.bf16.msra.mxu0 0
    %325 = vmatprep.subr.bf16.mxu0 0
    %326 = vmatpush1.bf16.msra.mxu0 0
    %327 = vmatprep.subr.bf16.mxu0 0
    %328 = vmatpush1.bf16.msra.mxu0 0
    %329 = vmatprep.subr.bf16.mxu0 0
    %330 = vmatpush1.bf16.msra.mxu0 0
    %331 = vmatprep.subr.bf16.mxu0 0
    %332 = vmatpush1.bf16.msra.mxu0 0
    %333 = vmatprep.subr.bf16.mxu0 0
    %334 = vmatpush1.bf16.msra.mxu0 0
    %335 = vmatprep.subr.bf16.mxu0 0
    %336 = vmatpush1.bf16.msra.mxu0 0
    %337 = vmatprep.subr.bf16.mxu0 0
    %338 = vmatpush1.bf16.msra.mxu0 0
    %339 = vmatprep.subr.bf16.mxu0 0
    %340 = vmatpush1.bf16.msra.mxu0 0
    %341 = vmatprep.subr.bf16.mxu0 0
    %342 = vmatpush1.bf16.msra.mxu0 0
    %343 = vmatprep.subr.bf16.mxu0 0
    %344 = vmatpush1.bf16.msra.mxu0 0
    %345 = vmatprep.subr.bf16.mxu0 0
    %346 = vmatpush1.bf16.msra.mxu0 0
    %347 = vmatprep.subr.bf16.mxu0 0
    %348 = vmatpush1.bf16.msra.mxu0 0
    %349 = vmatprep.mubr.bf16.mxu0 0
    %350 = vmatmul.mubr.bf16.gmra.mrb[0].mxu0 %v315
    %v351 = vpop.f32.mrb[0].mxu0
    %v352 = vadd.f32 %v294, %v351
    %v353 = vpop.f32.mrb[0].mxu0
    %v354 = vpop.f32.mrb[0].mxu0
    %v355 = vadd.f32 %v294, %v354
    %v356 = vpop.f32.mrb[0].mxu0
    %357 = vdwg.mxu0
    %v358 = vld [vmem:[%s13] sm:$0xf]
    %v359 = vld [vmem:[%s13 + $0x4] sm:$0xf]
    %v360 = vld [vmem:[%s13 + $0x8] sm:$0xf]
    %v361 = vld [vmem:[%s13 + $0xc] sm:$0xf]
    %v362 = vld [vmem:[#allocation10] sm:$0x1]
    %v364 = vlaneseq
    %v365 = vshrl.u32 %v364, 7
    %v366 = vsub.s32 0, %v365
    %v367 = vrot.slane %v362, %v366
    %v373 = vunpack.c.l.b16 %v358
    %v374 = vunpack.c.l.b16 %v359
    %v375 = vunpack.c.l.b16 %v360
    %v376 = vunpack.c.l.b16 %v361
    %v377 = vpack.c.b16 %v374, %v373
    %v378 = vpack.c.b16 %v376, %v375
    %381 = vmatprep.subr.bf16.mxu0 0
    %382 = vmatpush1.bf16.msra.mxu0 %v377
    %383 = vmatprep.subr.bf16.mxu0 0
    %384 = vmatpush1.bf16.msra.mxu0 %v378
    %385 = vmatprep.subr.bf16.mxu0 0
    %386 = vmatpush1.bf16.msra.mxu0 0
    %387 = vmatprep.subr.bf16.mxu0 0
    %388 = vmatpush1.bf16.msra.mxu0 0
    %389 = vmatprep.subr.bf16.mxu0 0
    %390 = vmatpush1.bf16.msra.mxu0 0
    %391 = vmatprep.subr.bf16.mxu0 0
    %392 = vmatpush1.bf16.msra.mxu0 0
    %393 = vmatprep.subr.bf16.mxu0 0
    %394 = vmatpush1.bf16.msra.mxu0 0
    %395 = vmatprep.subr.bf16.mxu0 0
    %396 = vmatpush1.bf16.msra.mxu0 0
    %397 = vmatprep.subr.bf16.mxu0 0
    %398 = vmatpush1.bf16.msra.mxu0 0
    %399 = vmatprep.subr.bf16.mxu0 0
    %400 = vmatpush1.bf16.msra.mxu0 0
    %401 = vmatprep.subr.bf16.mxu0 0
    %402 = vmatpush1.bf16.msra.mxu0 0
    %403 = vmatprep.subr.bf16.mxu0 0
    %404 = vmatpush1.bf16.msra.mxu0 0
    %405 = vmatprep.subr.bf16.mxu0 0
    %406 = vmatpush1.bf16.msra.mxu0 0
    %407 = vmatprep.subr.bf16.mxu0 0
    %408 = vmatpush1.bf16.msra.mxu0 0
    %409 = vmatprep.subr.bf16.mxu0 0
    %410 = vmatpush1.bf16.msra.mxu0 0
    %411 = vmatprep.subr.bf16.mxu0 0
    %412 = vmatpush1.bf16.msra.mxu0 0
    %413 = vmatprep.mubr.bf16.mxu0 0
    %414 = vmatmul.mubr.bf16.gmra.mrb[0].mxu0 %v315
    %v415 = vpop.f32.mrb[0].mxu0
    %v416 = vadd.f32 %v367, %v415
    %v417 = vpop.f32.mrb[0].mxu0
    %v418 = vpop.f32.mrb[0].mxu0
    %v419 = vadd.f32 %v367, %v418
    %v420 = vpop.f32.mrb[0].mxu0
    %421 = vdwg.mxu0
    %v422 = vld [vmem:[%s21] sm:$0xf]
    %v423 = vld [vmem:[%s21 + $0x4] sm:$0xf]
    %v424 = vld [vmem:[%s21 + $0x8] sm:$0xf]
    %v425 = vld [vmem:[%s21 + $0xc] sm:$0xf]
    %v426 = vld [vmem:[#allocation14] sm:$0x1]
    %v428 = vlaneseq
    %v429 = vshrl.u32 %v428, 7
    %v430 = vsub.s32 0, %v429
    %v431 = vrot.slane %v426, %v430
    %v437 = vunpack.c.l.b16 %v422
    %v438 = vunpack.c.l.b16 %v423
    %v439 = vunpack.c.l.b16 %v424
    %v440 = vunpack.c.l.b16 %v425
    %v441 = vpack.c.b16 %v438, %v437
    %v442 = vpack.c.b16 %v440, %v439
    %445 = vmatprep.subr.bf16.mxu0 0
    %446 = vmatpush1.bf16.msra.mxu0 %v441
    %447 = vmatprep.subr.bf16.mxu0 0
    %448 = vmatpush1.bf16.msra.mxu0 %v442
    %449 = vmatprep.subr.bf16.mxu0 0
    %450 = vmatpush1.bf16.msra.mxu0 0
    %451 = vmatprep.subr.bf16.mxu0 0
    %452 = vmatpush1.bf16.msra.mxu0 0
    %453 = vmatprep.subr.bf16.mxu0 0
    %454 = vmatpush1.bf16.msra.mxu0 0
    %455 = vmatprep.subr.bf16.mxu0 0
    %456 = vmatpush1.bf16.msra.mxu0 0
    %457 = vmatprep.subr.bf16.mxu0 0
    %458 = vmatpush1.bf16.msra.mxu0 0
    %459 = vmatprep.subr.bf16.mxu0 0
    %460 = vmatpush1.bf16.msra.mxu0 0
    %461 = vmatprep.subr.bf16.mxu0 0
    %462 = vmatpush1.bf16.msra.mxu0 0
    %463 = vmatprep.subr.bf16.mxu0 0
    %464 = vmatpush1.bf16.msra.mxu0 0
    %465 = vmatprep.subr.bf16.mxu0 0
    %466 = vmatpush1.bf16.msra.mxu0 0
    %467 = vmatprep.subr.bf16.mxu0 0
    %468 = vmatpush1.bf16.msra.mxu0 0
    %469 = vmatprep.subr.bf16.mxu0 0
    %470 = vmatpush1.bf16.msra.mxu0 0
    %471 = vmatprep.subr.bf16.mxu0 0
    %472 = vmatpush1.bf16.msra.mxu0 0
    %473 = vmatprep.subr.bf16.mxu0 0
    %474 = vmatpush1.bf16.msra.mxu0 0
    %475 = vmatprep.subr.bf16.mxu0 0
    %476 = vmatpush1.bf16.msra.mxu0 0
    %477 = vmatprep.mubr.bf16.mxu0 0
    %478 = vmatmul.mubr.bf16.gmra.mrb[0].mxu0 %v315
    %v479 = vpop.f32.mrb[0].mxu0
    %v480 = vadd.f32 %v431, %v479
    %v481 = vpop.f32.mrb[0].mxu0
    %v482 = vpop.f32.mrb[0].mxu0
    %v483 = vadd.f32 %v431, %v482
    %v484 = vpop.f32.mrb[0].mxu0
    %485 = vdwg.mxu0
    %v486 = vmul.f32 %v480, 0.25
    %v487 = vmul.f32 %v483, 0.25
    %v488 = vld [vmem:[%s5] sm:$0xf]
    %v489 = vld [vmem:[%s5 + $0x4] sm:$0xf]
    %v490 = vld [vmem:[%s5 + $0x8] sm:$0xf]
    %v491 = vld [vmem:[%s5 + $0xc] sm:$0xf]
    %v492 = vld [vmem:[#allocation7] sm:$0x1]
    %v494 = vlaneseq
    %v495 = vshrl.u32 %v494, 7
    %v496 = vsub.s32 0, %v495
    %v497 = vrot.slane %v492, %v496
    %v503 = vunpack.c.l.b16 %v488
    %v504 = vunpack.c.l.b16 %v489
    %v505 = vunpack.c.l.b16 %v490
    %v506 = vunpack.c.l.b16 %v491
    %v507 = vpack.c.b16 %v504, %v503
    %v508 = vpack.c.b16 %v506, %v505
    %v512 = vsel %vm313, %v284, 0
    %514 = vmatprep.subr.bf16.mxu0 0
    %515 = vmatpush1.bf16.msra.mxu0 %v507
    %516 = vmatprep.subr.bf16.mxu0 0
    %517 = vmatpush1.bf16.msra.mxu0 %v508
    %518 = vmatprep.subr.bf16.mxu0 0
    %519 = vmatpush1.bf16.msra.mxu0 0
    %520 = vmatprep.subr.bf16.mxu0 0
    %521 = vmatpush1.bf16.msra.mxu0 0
    %522 = vmatprep.subr.bf16.mxu0 0
    %523 = vmatpush1.bf16.msra.mxu0 0
    %524 = vmatprep.subr.bf16.mxu0 0
    %525 = vmatpush1.bf16.msra.mxu0 0
    %526 = vmatprep.subr.bf16.mxu0 0
    %527 = vmatpush1.bf16.msra.mxu0 0
    %528 = vmatprep.subr.bf16.mxu0 0
    %529 = vmatpush1.bf16.msra.mxu0 0
    %530 = vmatprep.subr.bf16.mxu0 0
    %531 = vmatpush1.bf16.msra.mxu0 0
    %532 = vmatprep.subr.bf16.mxu0 0
    %533 = vmatpush1.bf16.msra.mxu0 0
    %534 = vmatprep.subr.bf16.mxu0 0
    %535 = vmatpush1.bf16.msra.mxu0 0
    %536 = vmatprep.subr.bf16.mxu0 0
    %537 = vmatpush1.bf16.msra.mxu0 0
    %538 = vmatprep.subr.bf16.mxu0 0
    %539 = vmatpush1.bf16.msra.mxu0 0
    %540 = vmatprep.subr.bf16.mxu0 0
    %541 = vmatpush1.bf16.msra.mxu0 0
    %542 = vmatprep.subr.bf16.mxu0 0
    %543 = vmatpush1.bf16.msra.mxu0 0
    %544 = vmatprep.subr.bf16.mxu0 0
    %545 = vmatpush1.bf16.msra.mxu0 0
    %546 = vmatprep.mubr.bf16.mxu0 0
    %547 = vmatmul.mubr.bf16.gmra.mrb[0].mxu0 %v512
    %v548 = vpop.f32.mrb[0].mxu0
    %v549 = vadd.f32 %v497, %v548
    %v550 = vpop.f32.mrb[0].mxu0
    %v551 = vpop.f32.mrb[0].mxu0
    %v552 = vpop.f32.mrb[0].mxu0
    %553 = vdwg.mxu0
    %v554 = vmul.f32 %v549, 0.25
    %v555 = vpack.c.bf16 %v554, %v554
    %v556 = vpack.c.bf16 %v352, %v352
    %v557 = vpack.c.bf16 %v416, %v416
    %vm558 = vcmask 130048
    %v560 = vsel %vm558, %v555, 0
    %v563 = vsel %vm558, %v556, 0
    %565 = vmatprep.subr.bf16.mxu0 0
    %566 = vmatpush1.bf16.xpose.msra.mxu0 %v563
    %567 = vmatprep.subr.bf16.mxu0 0
    %568 = vmatpush1.bf16.xpose.msra.mxu0 0
    %569 = vmatprep.subr.bf16.mxu0 0
    %570 = vmatpush1.bf16.xpose.msra.mxu0 0
    %571 = vmatprep.subr.bf16.mxu0 0
    %572 = vmatpush1.bf16.xpose.msra.mxu0 0
    %573 = vmatprep.subr.bf16.mxu0 0
    %574 = vmatpush1.bf16.xpose.msra.mxu0 0
    %575 = vmatprep.subr.bf16.mxu0 0
    %576 = vmatpush1.bf16.xpose.msra.mxu0 0
    %577 = vmatprep.subr.bf16.mxu0 0
    %578 = vmatpush1.bf16.xpose.msra.mxu0 0
    %579 = vmatprep.subr.bf16.mxu0 0
    %580 = vmatpush1.bf16.xpose.msra.mxu0 0
    %581 = vmatprep.subr.bf16.mxu0 0
    %582 = vmatpush1.bf16.xpose.msra.mxu0 0
    %583 = vmatprep.subr.bf16.mxu0 0
    %584 = vmatpush1.bf16.xpose.msra.mxu0 0
    %585 = vmatprep.subr.bf16.mxu0 0
    %586 = vmatpush1.bf16.xpose.msra.mxu0 0
    %587 = vmatprep.subr.bf16.mxu0 0
    %588 = vmatpush1.bf16.xpose.msra.mxu0 0
    %589 = vmatprep.subr.bf16.mxu0 0
    %590 = vmatpush1.bf16.xpose.msra.mxu0 0
    %591 = vmatprep.subr.bf16.mxu0 0
    %592 = vmatpush1.bf16.xpose.msra.mxu0 0
    %593 = vmatprep.subr.bf16.mxu0 0
    %594 = vmatpush1.bf16.xpose.msra.mxu0 0
    %595 = vmatprep.subr.bf16.mxu0 0
    %596 = vmatpush1.bf16.xpose.msra.mxu0 0
    %597 = vmatprep.mubr.bf16.mxu0 0
    %598 = vmatmul.mubr.bf16.gmra.mrb[0].mxu0 %v560
    %v599 = vpop.f32.mrb[0].mxu0
    %v600 = vadd.f32 0.0, %v599
    %v601 = vpop.f32.mrb[0].mxu0
    %v602 = vpop.f32.mrb[0].mxu0
    %v603 = vpop.f32.mrb[0].mxu0
    %604 = vdwg.mxu0
    %vm605 = vcmask 64512
    %v606 = vsel %vm605, %v600, -inf
    %607 = vmax.xlane.f32.xlu0 %v606
    %v608 = vpop.xlane.xlu0 %607
    %v609 = vsub.f32 %v600, %v608
    %v610 = vmul.f32 %v609, 1.442695
    %v611 = vpow.pop %v610
    %v612 = vsel %vm605, %v611, 0.0
    %613 = vadd.xlane.f32.xlu0 %v612
    %v614 = vpop.xlane.xlu0 %613
    %v615 = vrcp.pop %v614
    %v616 = vmul.f32 %v611, %v615
    %v617 = vpack.c.bf16 %v616, %v616
    %v619 = vsel %vm605, %v617, 0
    %vm621 = vcmask 1043456
    %v623 = vsel %vm621, %v557, 0
    %625 = vmatprep.subr.bf16.mxu0 0
    %626 = vmatpush1.bf16.msra.mxu0 %v623
    %627 = vmatprep.subr.bf16.mxu0 0
    %628 = vmatpush1.bf16.msra.mxu0 0
    %629 = vmatprep.subr.bf16.mxu0 0
    %630 = vmatpush1.bf16.msra.mxu0 0
    %631 = vmatprep.subr.bf16.mxu0 0
    %632 = vmatpush1.bf16.msra.mxu0 0
    %633 = vmatprep.subr.bf16.mxu0 0
    %634 = vmatpush1.bf16.msra.mxu0 0
    %635 = vmatprep.subr.bf16.mxu0 0
    %636 = vmatpush1.bf16.msra.mxu0 0
    %637 = vmatprep.subr.bf16.mxu0 0
    %638 = vmatpush1.bf16.msra.mxu0 0
    %639 = vmatprep.subr.bf16.mxu0 0
    %640 = vmatpush1.bf16.msra.mxu0 0
    %641 = vmatprep.subr.bf16.mxu0 0
    %642 = vmatpush1.bf16.msra.mxu0 0
    %643 = vmatprep.subr.bf16.mxu0 0
    %644 = vmatpush1.bf16.msra.mxu0 0
    %645 = vmatprep.subr.bf16.mxu0 0
    %646 = vmatpush1.bf16.msra.mxu0 0
    %647 = vmatprep.subr.bf16.mxu0 0
    %648 = vmatpush1.bf16.msra.mxu0 0
    %649 = vmatprep.subr.bf16.mxu0 0
    %650 = vmatpush1.bf16.msra.mxu0 0
    %651 = vmatprep.subr.bf16.mxu0 0
    %652 = vmatpush1.bf16.msra.mxu0 0
    %653 = vmatprep.subr.bf16.mxu0 0
    %654 = vmatpush1.bf16.msra.mxu0 0
    %655 = vmatprep.subr.bf16.mxu0 0
    %656 = vmatpush1.bf16.msra.mxu0 0
    %657 = vmatprep.mubr.bf16.mxu0 0
    %658 = vmatmul.mubr.bf16.gmra.mrb[0].mxu0 %v619
    %v659 = vpop.f32.mrb[0].mxu0
    %v660 = vadd.f32 0.0, %v659
    %v661 = vpop.f32.mrb[0].mxu0
    %v662 = vpop.f32.mrb[0].mxu0
    %v663 = vpop.f32.mrb[0].mxu0
    %664 = vdwg.mxu0
    %666 = vrot.lane.b32.xlu0 %v555, 112
    %v667 = vpop.permute.xlu0 %666
    %669 = vrot.lane.b32.xlu0 %v556, 112
    %v670 = vpop.permute.xlu0 %669
    %v672 = vsel %vm558, %v667, 0
    %v675 = vsel %vm558, %v670, 0
    %677 = vmatprep.subr.bf16.mxu0 0
    %678 = vmatpush1.bf16.xpose.msra.mxu0 %v675
    %679 = vmatprep.subr.bf16.mxu0 0
    %680 = vmatpush1.bf16.xpose.msra.mxu0 0
    %681 = vmatprep.subr.bf16.mxu0 0
    %682 = vmatpush1.bf16.xpose.msra.mxu0 0
    %683 = vmatprep.subr.bf16.mxu0 0
    %684 = vmatpush1.bf16.xpose.msra.mxu0 0
    %685 = vmatprep.subr.bf16.mxu0 0
    %686 = vmatpush1.bf16.xpose.msra.mxu0 0
    %687 = vmatprep.subr.bf16.mxu0 0
    %688 = vmatpush1.bf16.xpose.msra.mxu0 0
    %689 = vmatprep.subr.bf16.mxu0 0
    %690 = vmatpush1.bf16.xpose.msra.mxu0 0
    %691 = vmatprep.subr.bf16.mxu0 0
    %692 = vmatpush1.bf16.xpose.msra.mxu0 0
    %693 = vmatprep.subr.bf16.mxu0 0
    %694 = vmatpush1.bf16.xpose.msra.mxu0 0
    %695 = vmatprep.subr.bf16.mxu0 0
    %696 = vmatpush1.bf16.xpose.msra.mxu0 0
    %697 = vmatprep.subr.bf16.mxu0 0
    %698 = vmatpush1.bf16.xpose.msra.mxu0 0
    %699 = vmatprep.subr.bf16.mxu0 0
    %700 = vmatpush1.bf16.xpose.msra.mxu0 0
    %701 = vmatprep.subr.bf16.mxu0 0
    %702 = vmatpush1.bf16.xpose.msra.mxu0 0
    %703 = vmatprep.subr.bf16.mxu0 0
    %704 = vmatpush1.bf16.xpose.msra.mxu0 0
    %705 = vmatprep.subr.bf16.mxu0 0
    %706 = vmatpush1.bf16.xpose.msra.mxu0 0
    %707 = vmatprep.subr.bf16.mxu0 0
    %708 = vmatpush1.bf16.xpose.msra.mxu0 0
    %709 = vmatprep.mubr.bf16.mxu0 0
    %710 = vmatmul.mubr.bf16.gmra.mrb[0].mxu0 %v672
    %v711 = vpop.f32.mrb[0].mxu0
    %v712 = vadd.f32 0.0, %v711
    %v713 = vpop.f32.mrb[0].mxu0
    %v714 = vpop.f32.mrb[0].mxu0
    %v715 = vpop.f32.mrb[0].mxu0
    %716 = vdwg.mxu0
    %v717 = vsel %vm605, %v712, -inf
    %718 = vmax.xlane.f32.xlu0 %v717
    %v719 = vpop.xlane.xlu0 %718
    %v720 = vsub.f32 %v712, %v719
    %v721 = vmul.f32 %v720, 1.442695
    %v722 = vpow.pop %v721
    %v723 = vsel %vm605, %v722, 0.0
    %724 = vadd.xlane.f32.xlu0 %v723
    %v725 = vpop.xlane.xlu0 %724
    %v726 = vrcp.pop %v725
    %v727 = vmul.f32 %v722, %v726
    %v728 = vpack.c.bf16 %v727, %v727
    %730 = vrot.lane.b32.xlu0 %v557, 112
    %v731 = vpop.permute.xlu0 %730
    %v733 = vsel %vm605, %v728, 0
    %v736 = vsel %vm621, %v731, 0
    %738 = vmatprep.subr.bf16.mxu0 0
    %739 = vmatpush1.bf16.msra.mxu0 %v736
    %740 = vmatprep.subr.bf16.mxu0 0
    %741 = vmatpush1.bf16.msra.mxu0 0
    %742 = vmatprep.subr.bf16.mxu0 0
    %743 = vmatpush1.bf16.msra.mxu0 0
    %744 = vmatprep.subr.bf16.mxu0 0
    %745 = vmatpush1.bf16.msra.mxu0 0
    %746 = vmatprep.subr.bf16.mxu0 0
    %747 = vmatpush1.bf16.msra.mxu0 0
    %748 = vmatprep.subr.bf16.mxu0 0
    %749 = vmatpush1.bf16.msra.mxu0 0
    %750 = vmatprep.subr.bf16.mxu0 0
    %751 = vmatpush1.bf16.msra.mxu0 0
    %752 = vmatprep.subr.bf16.mxu0 0
    %753 = vmatpush1.bf16.msra.mxu0 0
    %754 = vmatprep.subr.bf16.mxu0 0
    %755 = vmatpush1.bf16.msra.mxu0 0
    %756 = vmatprep.subr.bf16.mxu0 0
    %757 = vmatpush1.bf16.msra.mxu0 0
    %758 = vmatprep.subr.bf16.mxu0 0
    %759 = vmatpush1.bf16.msra.mxu0 0
    %760 = vmatprep.subr.bf16.mxu0 0
    %761 = vmatpush1.bf16.msra.mxu0 0
    %762 = vmatprep.subr.bf16.mxu0 0
    %763 = vmatpush1.bf16.msra.mxu0 0
    %764 = vmatprep.subr.bf16.mxu0 0
    %765 = vmatpush1.bf16.msra.mxu0 0
    %766 = vmatprep.subr.bf16.mxu0 0
    %767 = vmatpush1.bf16.msra.mxu0 0
    %768 = vmatprep.subr.bf16.mxu0 0
    %769 = vmatpush1.bf16.msra.mxu0 0
    %770 = vmatprep.mubr.bf16.mxu0 0
    %771 = vmatmul.mubr.bf16.gmra.mrb[0].mxu0 %v733
    %v772 = vpop.f32.mrb[0].mxu0
    %v773 = vadd.f32 0.0, %v772
    %v774 = vpop.f32.mrb[0].mxu0
    %v775 = vpop.f32.mrb[0].mxu0
    %v776 = vpop.f32.mrb[0].mxu0
    %777 = vdwg.mxu0
    %779 = vrot.lane.b32.xlu0 %v773, 16
    %v780 = vpop.permute.xlu0 %779
    %v782 = vsel %vm558, %v660, %v780
    %v783 = vpack.c.bf16 %v355, %v355
    %v784 = vpack.c.bf16 %v419, %v419
    %v786 = vsel %vm558, %v783, 0
    %788 = vmatprep.subr.bf16.mxu0 0
    %789 = vmatpush1.bf16.xpose.msra.mxu0 %v786
    %790 = vmatprep.subr.bf16.mxu0 0
    %791 = vmatpush1.bf16.xpose.msra.mxu0 0
    %792 = vmatprep.subr.bf16.mxu0 0
    %793 = vmatpush1.bf16.xpose.msra.mxu0 0
    %794 = vmatprep.subr.bf16.mxu0 0
    %795 = vmatpush1.bf16.xpose.msra.mxu0 0
    %796 = vmatprep.subr.bf16.mxu0 0
    %797 = vmatpush1.bf16.xpose.msra.mxu0 0
    %798 = vmatprep.subr.bf16.mxu0 0
    %799 = vmatpush1.bf16.xpose.msra.mxu0 0
    %800 = vmatprep.subr.bf16.mxu0 0
    %801 = vmatpush1.bf16.xpose.msra.mxu0 0
    %802 = vmatprep.subr.bf16.mxu0 0
    %803 = vmatpush1.bf16.xpose.msra.mxu0 0
    %804 = vmatprep.subr.bf16.mxu0 0
    %805 = vmatpush1.bf16.xpose.msra.mxu0 0
    %806 = vmatprep.subr.bf16.mxu0 0
    %807 = vmatpush1.bf16.xpose.msra.mxu0 0
    %808 = vmatprep.subr.bf16.mxu0 0
    %809 = vmatpush1.bf16.xpose.msra.mxu0 0
    %810 = vmatprep.subr.bf16.mxu0 0
    %811 = vmatpush1.bf16.xpose.msra.mxu0 0
    %812 = vmatprep.subr.bf16.mxu0 0
    %813 = vmatpush1.bf16.xpose.msra.mxu0 0
    %814 = vmatprep.subr.bf16.mxu0 0
    %815 = vmatpush1.bf16.xpose.msra.mxu0 0
    %816 = vmatprep.subr.bf16.mxu0 0
    %817 = vmatpush1.bf16.xpose.msra.mxu0 0
    %818 = vmatprep.subr.bf16.mxu0 0
    %819 = vmatpush1.bf16.xpose.msra.mxu0 0
    %820 = vmatprep.mubr.bf16.mxu0 0
    %821 = vmatmul.mubr.bf16.gmra.mrb[0].mxu0 %v560
    %v822 = vpop.f32.mrb[0].mxu0
    %v823 = vadd.f32 0.0, %v822
    %v824 = vpop.f32.mrb[0].mxu0
    %v825 = vpop.f32.mrb[0].mxu0
    %v826 = vpop.f32.mrb[0].mxu0
    %827 = vdwg.mxu0
    %v828 = vsel %vm605, %v823, -inf
    %829 = vmax.xlane.f32.xlu0 %v828
    %v830 = vpop.xlane.xlu0 %829
    %v831 = vsub.f32 %v823, %v830
    %v832 = vmul.f32 %v831, 1.442695
    %v833 = vpow.pop %v832
    %v834 = vsel %vm605, %v833, 0.0
    %835 = vadd.xlane.f32.xlu0 %v834
    %v836 = vpop.xlane.xlu0 %835
    %v837 = vrcp.pop %v836
    %v838 = vmul.f32 %v833, %v837
    %v839 = vpack.c.bf16 %v838, %v838
    %v841 = vsel %vm605, %v839, 0
    %v844 = vsel %vm621, %v784, 0
    %846 = vmatprep.subr.bf16.mxu0 0
    %847 = vmatpush1.bf16.msra.mxu0 %v844
    %848 = vmatprep.subr.bf16.mxu0 0
    %849 = vmatpush1.bf16.msra.mxu0 0
    %850 = vmatprep.subr.bf16.mxu0 0
    %851 = vmatpush1.bf16.msra.mxu0 0
    %852 = vmatprep.subr.bf16.mxu0 0
    %853 = vmatpush1.bf16.msra.mxu0 0
    %854 = vmatprep.subr.bf16.mxu0 0
    %855 = vmatpush1.bf16.msra.mxu0 0
    %856 = vmatprep.subr.bf16.mxu0 0
    %857 = vmatpush1.bf16.msra.mxu0 0
    %858 = vmatprep.subr.bf16.mxu0 0
    %859 = vmatpush1.bf16.msra.mxu0 0
    %860 = vmatprep.subr.bf16.mxu0 0
    %861 = vmatpush1.bf16.msra.mxu0 0
    %862 = vmatprep.subr.bf16.mxu0 0
    %863 = vmatpush1.bf16.msra.mxu0 0
    %864 = vmatprep.subr.bf16.mxu0 0
    %865 = vmatpush1.bf16.msra.mxu0 0
    %866 = vmatprep.subr.bf16.mxu0 0
    %867 = vmatpush1.bf16.msra.mxu0 0
    %868 = vmatprep.subr.bf16.mxu0 0
    %869 = vmatpush1.bf16.msra.mxu0 0
    %870 = vmatprep.subr.bf16.mxu0 0
    %871 = vmatpush1.bf16.msra.mxu0 0
    %872 = vmatprep.subr.bf16.mxu0 0
    %873 = vmatpush1.bf16.msra.mxu0 0
    %874 = vmatprep.subr.bf16.mxu0 0
    %875 = vmatpush1.bf16.msra.mxu0 0
    %876 = vmatprep.subr.bf16.mxu0 0
    %877 = vmatpush1.bf16.msra.mxu0 0
    %878 = vmatprep.mubr.bf16.mxu0 0
    %879 = vmatmul.mubr.bf16.gmra.mrb[0].mxu0 %v841
    %v880 = vpop.f32.mrb[0].mxu0
    %v881 = vadd.f32 0.0, %v880
    %v882 = vpop.f32.mrb[0].mxu0
    %v883 = vpop.f32.mrb[0].mxu0
    %v884 = vpop.f32.mrb[0].mxu0
    %885 = vdwg.mxu0
    %887 = vrot.lane.b32.xlu0 %v783, 112
    %v888 = vpop.permute.xlu0 %887
    %v890 = vsel %vm558, %v888, 0
    %892 = vmatprep.subr.bf16.mxu0 0
    %893 = vmatpush1.bf16.xpose.msra.mxu0 %v890
    %894 = vmatprep.subr.bf16.mxu0 0
    %895 = vmatpush1.bf16.xpose.msra.mxu0 0
    %896 = vmatprep.subr.bf16.mxu0 0
    %897 = vmatpush1.bf16.xpose.msra.mxu0 0
    %898 = vmatprep.subr.bf16.mxu0 0
    %899 = vmatpush1.bf16.xpose.msra.mxu0 0
    %900 = vmatprep.subr.bf16.mxu0 0
    %901 = vmatpush1.bf16.xpose.msra.mxu0 0
    %902 = vmatprep.subr.bf16.mxu0 0
    %903 = vmatpush1.bf16.xpose.msra.mxu0 0
    %904 = vmatprep.subr.bf16.mxu0 0
    %905 = vmatpush1.bf16.xpose.msra.mxu0 0
    %906 = vmatprep.subr.bf16.mxu0 0
    %907 = vmatpush1.bf16.xpose.msra.mxu0 0
    %908 = vmatprep.subr.bf16.mxu0 0
    %909 = vmatpush1.bf16.xpose.msra.mxu0 0
    %910 = vmatprep.subr.bf16.mxu0 0
    %911 = vmatpush1.bf16.xpose.msra.mxu0 0
    %912 = vmatprep.subr.bf16.mxu0 0
    %913 = vmatpush1.bf16.xpose.msra.mxu0 0
    %914 = vmatprep.subr.bf16.mxu0 0
    %915 = vmatpush1.bf16.xpose.msra.mxu0 0
    %916 = vmatprep.subr.bf16.mxu0 0
    %917 = vmatpush1.bf16.xpose.msra.mxu0 0
    %918 = vmatprep.subr.bf16.mxu0 0
    %919 = vmatpush1.bf16.xpose.msra.mxu0 0
    %920 = vmatprep.subr.bf16.mxu0 0
    %921 = vmatpush1.bf16.xpose.msra.mxu0 0
    %922 = vmatprep.subr.bf16.mxu0 0
    %923 = vmatpush1.bf16.xpose.msra.mxu0 0
    %924 = vmatprep.mubr.bf16.mxu0 0
    %925 = vmatmul.mubr.bf16.gmra.mrb[0].mxu0 %v672
    %v926 = vpop.f32.mrb[0].mxu0
    %v927 = vadd.f32 0.0, %v926
    %v928 = vpop.f32.mrb[0].mxu0
    %v929 = vpop.f32.mrb[0].mxu0
    %v930 = vpop.f32.mrb[0].mxu0
    %931 = vdwg.mxu0
    %v932 = vsel %vm605, %v927, -inf
    %933 = vmax.xlane.f32.xlu0 %v932
    %v934 = vpop.xlane.xlu0 %933
    %v935 = vsub.f32 %v927, %v934
    %v936 = vmul.f32 %v935, 1.442695
    %v937 = vpow.pop %v936
    %v938 = vsel %vm605, %v937, 0.0
    %939 = vadd.xlane.f32.xlu0 %v938
    %v940 = vpop.xlane.xlu0 %939
    %v941 = vrcp.pop %v940
    %v942 = vmul.f32 %v937, %v941
    %v943 = vpack.c.bf16 %v942, %v942
    %945 = vrot.lane.b32.xlu0 %v784, 112
    %v946 = vpop.permute.xlu0 %945
    %v948 = vsel %vm605, %v943, 0
    %v951 = vsel %vm621, %v946, 0
    %953 = vmatprep.subr.bf16.mxu0 0
    %954 = vmatpush1.bf16.msra.mxu0 %v951
    %955 = vmatprep.subr.bf16.mxu0 0
    %956 = vmatpush1.bf16.msra.mxu0 0
    %957 = vmatprep.subr.bf16.mxu0 0
    %958 = vmatpush1.bf16.msra.mxu0 0
    %959 = vmatprep.subr.bf16.mxu0 0
    %960 = vmatpush1.bf16.msra.mxu0 0
    %961 = vmatprep.subr.bf16.mxu0 0
    %962 = vmatpush1.bf16.msra.mxu0 0
    %963 = vmatprep.subr.bf16.mxu0 0
    %964 = vmatpush1.bf16.msra.mxu0 0
    %965 = vmatprep.subr.bf16.mxu0 0
    %966 = vmatpush1.bf16.msra.mxu0 0
    %967 = vmatprep.subr.bf16.mxu0 0
    %968 = vmatpush1.bf16.msra.mxu0 0
    %969 = vmatprep.subr.bf16.mxu0 0
    %970 = vmatpush1.bf16.msra.mxu0 0
    %971 = vmatprep.subr.bf16.mxu0 0
    %972 = vmatpush1.bf16.msra.mxu0 0
    %973 = vmatprep.subr.bf16.mxu0 0
    %974 = vmatpush1.bf16.msra.mxu0 0
    %975 = vmatprep.subr.bf16.mxu0 0
    %976 = vmatpush1.bf16.msra.mxu0 0
    %977 = vmatprep.subr.bf16.mxu0 0
    %978 = vmatpush1.bf16.msra.mxu0 0
    %979 = vmatprep.subr.bf16.mxu0 0
    %980 = vmatpush1.bf16.msra.mxu0 0
    %981 = vmatprep.subr.bf16.mxu0 0
    %982 = vmatpush1.bf16.msra.mxu0 0
    %983 = vmatprep.subr.bf16.mxu0 0
    %984 = vmatpush1.bf16.msra.mxu0 0
    %985 = vmatprep.mubr.bf16.mxu0 0
    %986 = vmatmul.mubr.bf16.gmra.mrb[0].mxu0 %v948
    %v987 = vpop.f32.mrb[0].mxu0
    %v988 = vadd.f32 0.0, %v987
    %v989 = vpop.f32.mrb[0].mxu0
    %v990 = vpop.f32.mrb[0].mxu0
    %v991 = vpop.f32.mrb[0].mxu0
    %992 = vdwg.mxu0
    %994 = vrot.lane.b32.xlu0 %v988, 16
    %v995 = vpop.permute.xlu0 %994
    %v997 = vsel %vm558, %v881, %v995
    %v998 = vpack.c.bf16 %v997, %v782
    %v999 = vld [vmem:[#allocation11] sm:$0xf]
    %v1000 = vld [vmem:[#allocation11 + $0x4] sm:$0xf]
    %v1001 = vld [vmem:[#allocation11 + $0x8] sm:$0xf]
    %v1002 = vld [vmem:[#allocation11 + $0xc] sm:$0xf]
    %v1003 = vld [vmem:[#allocation13] sm:$0x1]
    %v1005 = vlaneseq
    %v1006 = vshrl.u32 %v1005, 7
    %v1007 = vsub.s32 0, %v1006
    %v1008 = vrot.slane %v1003, %v1007
    %v1014 = vunpack.c.l.b16 %v999
    %v1015 = vunpack.c.l.b16 %v1000
    %v1016 = vunpack.c.l.b16 %v1001
    %v1017 = vunpack.c.l.b16 %v1002
    %v1018 = vpack.c.b16 %v1015, %v1014
    %v1019 = vpack.c.b16 %v1017, %v1016
    %v1023 = vsel %vm313, %v998, 0
    %1025 = vmatprep.subr.bf16.mxu0 0
    %1026 = vmatpush1.bf16.msra.mxu0 %v1018
    %1027 = vmatprep.subr.bf16.mxu0 0
    %1028 = vmatpush1.bf16.msra.mxu0 %v1019
    %1029 = vmatprep.subr.bf16.mxu0 0
    %1030 = vmatpush1.bf16.msra.mxu0 0
    %1031 = vmatprep.subr.bf16.mxu0 0
    %1032 = vmatpush1.bf16.msra.mxu0 0
    %1033 = vmatprep.subr.bf16.mxu0 0
    %1034 = vmatpush1.bf16.msra.mxu0 0
    %1035 = vmatprep.subr.bf16.mxu0 0
    %1036 = vmatpush1.bf16.msra.mxu0 0
    %1037 = vmatprep.subr.bf16.mxu0 0
    %1038 = vmatpush1.bf16.msra.mxu0 0
    %1039 = vmatprep.subr.bf16.mxu0 0
    %1040 = vmatpush1.bf16.msra.mxu0 0
    %1041 = vmatprep.subr.bf16.mxu0 0
    %1042 = vmatpush1.bf16.msra.mxu0 0
    %1043 = vmatprep.subr.bf16.mxu0 0
    %1044 = vmatpush1.bf16.msra.mxu0 0
    %1045 = vmatprep.subr.bf16.mxu0 0
    %1046 = vmatpush1.bf16.msra.mxu0 0
    %1047 = vmatprep.subr.bf16.mxu0 0
    %1048 = vmatpush1.bf16.msra.mxu0 0
    %1049 = vmatprep.subr.bf16.mxu0 0
    %1050 = vmatpush1.bf16.msra.mxu0 0
    %1051 = vmatprep.subr.bf16.mxu0 0
    %1052 = vmatpush1.bf16.msra.mxu0 0
    %1053 = vmatprep.subr.bf16.mxu0 0
    %1054 = vmatpush1.bf16.msra.mxu0 0
    %1055 = vmatprep.subr.bf16.mxu0 0
    %1056 = vmatpush1.bf16.msra.mxu0 0
    %1057 = vmatprep.mubr.bf16.mxu0 0
    %1058 = vmatmul.mubr.bf16.gmra.mrb[0].mxu0 %v1023
    %v1059 = vpop.f32.mrb[0].mxu0
    %v1060 = vadd.f32 %v1008, %v1059
    %v1061 = vpop.f32.mrb[0].mxu0
    %v1062 = vpop.f32.mrb[0].mxu0
    %v1063 = vadd.f32 %v1008, %v1062
    %v1064 = vpop.f32.mrb[0].mxu0
    %1065 = vdwg.mxu0
    %v1066 = vunpack.c.l.bf16 %v284
    %v1067 = vadd.f32 %v1066, %v1060
    %v1068 = vadd.f32 %v1066, %v1063
    %v1069 = vld [vmem:[%s37] sm:$0x1]
    %v1070 = vld [vmem:[%s39] sm:$0x1]
    %v1071 = vsel %vm313, %v1067, 0.0
    %1072 = vadd.xlane.f32.xlu0 %v1071
    %v1073 = vpop.xlane.xlu0 %1072
    %v1074 = vsel %vm313, %v1068, 0.0
    %1075 = vadd.xlane.f32.xlu0 %v1074
    %v1076 = vpop.xlane.xlu0 %1075
    %v1077 = vrcp.pop 32.0
    %v1078 = vmul.f32 %v1073, %v1077
    %v1079 = vmul.f32 %v1076, %v1077
    %v1080 = vsub.f32 %v1067, %v1078
    %v1081 = vsub.f32 %v1068, %v1079
    %v1082 = vmul.f32 %v1080, %v1080
    %v1083 = vmul.f32 %v1081, %v1081
    %v1084 = vsel %vm313, %v1082, 0.0
    %1085 = vadd.xlane.f32.xlu0 %v1084
    %v1086 = vpop.xlane.xlu0 %1085
    %v1087 = vsel %vm313, %v1083, 0.0
    %1088 = vadd.xlane.f32.xlu0 %v1087
    %v1089 = vpop.xlane.xlu0 %1088
    %v1090 = vmul.f32 %v1086, %v1077
    %v1091 = vmul.f32 %v1089, %v1077
    %v1092 = vadd.f32 %v1090, 1e-05
    %v1093 = vadd.f32 %v1091, 1e-05
    %v1094 = vrsqrt.pop %v1092
    %v1095 = vrsqrt.pop %v1093
    %v1096 = vmul.f32 %v1080, %v1094
    %v1097 = vmul.f32 %v1081, %v1095
    %v1099 = vlaneseq
    %v1100 = vshrl.u32 %v1099, 7
    %v1101 = vsub.s32 0, %v1100
    %v1102 = vrot.slane %v1069, %v1101
    %v1104 = vmul.f32 %v1096, %v1102
    %v1105 = vmul.f32 %v1097, %v1102
    %v1107 = vlaneseq
    %v1108 = vshrl.u32 %v1107, 7
    %v1109 = vsub.s32 0, %v1108
    %v1110 = vrot.slane %v1070, %v1109
    %v1112 = vadd.f32 %v1104, %v1110
    %v1113 = vadd.f32 %v1105, %v1110
    %v1114 = vpack.c.bf16 %v1063, %v1060
    %v1115 = vld [vmem:[#allocation16] sm:$0xf]
    %v1116 = vld [vmem:[#allocation16 + $0x4] sm:$0xf]
    %v1117 = vld [vmem:[#allocation16 + $0x8] sm:$0xf]
    %v1118 = vld [vmem:[#allocation16 + $0xc] sm:$0xf]
    %v1119 = vld [vmem:[#allocation17] sm:$0x1]
    %v1121 = vlaneseq
    %v1122 = vshrl.u32 %v1121, 7
    %v1123 = vsub.s32 0, %v1122
    %v1124 = vrot.slane %v1119, %v1123
    %v1130 = vunpack.c.l.b16 %v1115
    %v1131 = vunpack.c.l.b16 %v1116
    %v1132 = vunpack.c.l.b16 %v1117
    %v1133 = vunpack.c.l.b16 %v1118
    %v1134 = vpack.c.b16 %v1131, %v1130
    %v1135 = vpack.c.b16 %v1133, %v1132
    %v1139 = vsel %vm313, %v1114, 0
    %1141 = vmatprep.subr.bf16.mxu0 0
    %1142 = vmatpush1.bf16.msra.mxu0 %v1134
    %1143 = vmatprep.subr.bf16.mxu0 0
    %1144 = vmatpush1.bf16.msra.mxu0 %v1135
    %1145 = vmatprep.subr.bf16.mxu0 0
    %1146 = vmatpush1.bf16.msra.mxu0 0
    %1147 = vmatprep.subr.bf16.mxu0 0
    %1148 = vmatpush1.bf16.msra.mxu0 0
    %1149 = vmatprep.subr.bf16.mxu0 0
    %1150 = vmatpush1.bf16.msra.mxu0 0
    %1151 = vmatprep.subr.bf16.mxu0 0
    %1152 = vmatpush1.bf16.msra.mxu0 0
    %1153 = vmatprep.subr.bf16.mxu0 0
    %1154 = vmatpush1.bf16.msra.mxu0 0
    %1155 = vmatprep.subr.bf16.mxu0 0
    %1156 = vmatpush1.bf16.msra.mxu0 0
    %1157 = vmatprep.subr.bf16.mxu0 0
    %1158 = vmatpush1.bf16.msra.mxu0 0
    %1159 = vmatprep.subr.bf16.mxu0 0
    %1160 = vmatpush1.bf16.msra.mxu0 0
    %1161 = vmatprep.subr.bf16.mxu0 0
    %1162 = vmatpush1.bf16.msra.mxu0 0
    %1163 = vmatprep.subr.bf16.mxu0 0
    %1164 = vmatpush1.bf16.msra.mxu0 0
    %1165 = vmatprep.subr.bf16.mxu0 0
    %1166 = vmatpush1.bf16.msra.mxu0 0
    %1167 = vmatprep.subr.bf16.mxu0 0
    %1168 = vmatpush1.bf16.msra.mxu0 0
    %1169 = vmatprep.subr.bf16.mxu0 0
    %1170 = vmatpush1.bf16.msra.mxu0 0
    %1171 = vmatprep.subr.bf16.mxu0 0
    %1172 = vmatpush1.bf16.msra.mxu0 0
    %1173 = vmatprep.mubr.bf16.mxu0 0
    %1174 = vmatmul.mubr.bf16.gmra.mrb[0].mxu0 %v1139
    %v1175 = vpop.f32.mrb[0].mxu0
    %v1176 = vadd.f32 %v1124, %v1175
    %v1177 = vpop.f32.mrb[0].mxu0
    %v1178 = vpop.f32.mrb[0].mxu0
    %v1179 = vadd.f32 %v1124, %v1178
    %v1180 = vpop.f32.mrb[0].mxu0
    %1181 = vdwg.mxu0
    %v1182 = vld [vmem:[%s29] sm:$0xf]
    %v1183 = vld [vmem:[%s29 + $0x4] sm:$0xf]
    %v1184 = vld [vmem:[%s29 + $0x8] sm:$0xf]
    %v1185 = vld [vmem:[%s29 + $0xc] sm:$0xf]
    %v1186 = vld [vmem:[#allocation19] sm:$0x1]
    %v1188 = vlaneseq
    %v1189 = vshrl.u32 %v1188, 7
    %v1190 = vsub.s32 0, %v1189
    %v1191 = vrot.slane %v1186, %v1190
    %v1197 = vunpack.c.l.b16 %v1182
    %v1198 = vunpack.c.l.b16 %v1183
    %v1199 = vunpack.c.l.b16 %v1184
    %v1200 = vunpack.c.l.b16 %v1185
    %v1201 = vpack.c.b16 %v1198, %v1197
    %v1202 = vpack.c.b16 %v1200, %v1199
    %1205 = vmatprep.subr.bf16.mxu0 0
    %1206 = vmatpush1.bf16.msra.mxu0 %v1201
    %1207 = vmatprep.subr.bf16.mxu0 0
    %1208 = vmatpush1.bf16.msra.mxu0 %v1202
    %1209 = vmatprep.subr.bf16.mxu0 0
    %1210 = vmatpush1.bf16.msra.mxu0 0
    %1211 = vmatprep.subr.bf16.mxu0 0
    %1212 = vmatpush1.bf16.msra.mxu0 0
    %1213 = vmatprep.subr.bf16.mxu0 0
    %1214 = vmatpush1.bf16.msra.mxu0 0
    %1215 = vmatprep.subr.bf16.mxu0 0
    %1216 = vmatpush1.bf16.msra.mxu0 0
    %1217 = vmatprep.subr.bf16.mxu0 0
    %1218 = vmatpush1.bf16.msra.mxu0 0
    %1219 = vmatprep.subr.bf16.mxu0 0
    %1220 = vmatpush1.bf16.msra.mxu0 0
    %1221 = vmatprep.subr.bf16.mxu0 0
    %1222 = vmatpush1.bf16.msra.mxu0 0
    %1223 = vmatprep.subr.bf16.mxu0 0
    %1224 = vmatpush1.bf16.msra.mxu0 0
    %1225 = vmatprep.subr.bf16.mxu0 0
    %1226 = vmatpush1.bf16.msra.mxu0 0
    %1227 = vmatprep.subr.bf16.mxu0 0
    %1228 = vmatpush1.bf16.msra.mxu0 0
    %1229 = vmatprep.subr.bf16.mxu0 0
    %1230 = vmatpush1.bf16.msra.mxu0 0
    %1231 = vmatprep.subr.bf16.mxu0 0
    %1232 = vmatpush1.bf16.msra.mxu0 0
    %1233 = vmatprep.subr.bf16.mxu0 0
    %1234 = vmatpush1.bf16.msra.mxu0 0
    %1235 = vmatprep.subr.bf16.mxu0 0
    %1236 = vmatpush1.bf16.msra.mxu0 0
    %1237 = vmatprep.mubr.bf16.mxu0 0
    %1238 = vmatmul.mubr.bf16.gmra.mrb[0].mxu0 %v1139
    %v1239 = vpop.f32.mrb[0].mxu0
    %v1240 = vadd.f32 %v1191, %v1239
    %v1241 = vpop.f32.mrb[0].mxu0
    %v1242 = vpop.f32.mrb[0].mxu0
    %v1243 = vadd.f32 %v1191, %v1242
    %v1244 = vpop.f32.mrb[0].mxu0
    %1245 = vdwg.mxu0
    %v1246 = vpack.c.bf16 %v486, %v486
    %v1247 = vpack.c.bf16 %v1176, %v1176
    %v1248 = vpack.c.bf16 %v1240, %v1240
    %v1250 = vsel %vm558, %v1246, 0
    %v1253 = vsel %vm558, %v1247, 0
    %1255 = vmatprep.subr.bf16.mxu0 0
    %1256 = vmatpush1.bf16.xpose.msra.mxu0 %v1253
    %1257 = vmatprep.subr.bf16.mxu0 0
    %1258 = vmatpush1.bf16.xpose.msra.mxu0 0
    %1259 = vmatprep.subr.bf16.mxu0 0
    %1260 = vmatpush1.bf16.xpose.msra.mxu0 0
    %1261 = vmatprep.subr.bf16.mxu0 0
    %1262 = vmatpush1.bf16.xpose.msra.mxu0 0
    %1263 = vmatprep.subr.bf16.mxu0 0
    %1264 = vmatpush1.bf16.xpose.msra.mxu0 0
    %1265 = vmatprep.subr.bf16.mxu0 0
    %1266 = vmatpush1.bf16.xpose.msra.mxu0 0
    %1267 = vmatprep.subr.bf16.mxu0 0
    %1268 = vmatpush1.bf16.xpose.msra.mxu0 0
    %1269 = vmatprep.subr.bf16.mxu0 0
    %1270 = vmatpush1.bf16.xpose.msra.mxu0 0
    %1271 = vmatprep.subr.bf16.mxu0 0
    %1272 = vmatpush1.bf16.xpose.msra.mxu0 0
    %1273 = vmatprep.subr.bf16.mxu0 0
    %1274 = vmatpush1.bf16.xpose.msra.mxu0 0
    %1275 = vmatprep.subr.bf16.mxu0 0
    %1276 = vmatpush1.bf16.xpose.msra.mxu0 0
    %1277 = vmatprep.subr.bf16.mxu0 0
    %1278 = vmatpush1.bf16.xpose.msra.mxu0 0
    %1279 = vmatprep.subr.bf16.mxu0 0
    %1280 = vmatpush1.bf16.xpose.msra.mxu0 0
    %1281 = vmatprep.subr.bf16.mxu0 0
    %1282 = vmatpush1.bf16.xpose.msra.mxu0 0
    %1283 = vmatprep.subr.bf16.mxu0 0
    %1284 = vmatpush1.bf16.xpose.msra.mxu0 0
    %1285 = vmatprep.subr.bf16.mxu0 0
    %1286 = vmatpush1.bf16.xpose.msra.mxu0 0
    %1287 = vmatprep.mubr.bf16.mxu0 0
    %1288 = vmatmul.mubr.bf16.gmra.mrb[0].mxu0 %v1250
    %v1289 = vpop.f32.mrb[0].mxu0
    %v1290 = vadd.f32 0.0, %v1289
    %v1291 = vpop.f32.mrb[0].mxu0
    %v1292 = vpop.f32.mrb[0].mxu0
    %v1293 = vpop.f32.mrb[0].mxu0
    %1294 = vdwg.mxu0
    %v1295 = vsel %vm605, %v1290, -inf
    %1296 = vmax.xlane.f32.xlu0 %v1295
    %v1297 = vpop.xlane.xlu0 %1296
    %v1298 = vsub.f32 %v1290, %v1297
    %v1299 = vmul.f32 %v1298, 1.442695
    %v1300 = vpow.pop %v1299
    %v1301 = vsel %vm605, %v1300, 0.0
    %1302 = vadd.xlane.f32.xlu0 %v1301
    %v1303 = vpop.xlane.xlu0 %1302
    %v1304 = vrcp.pop %v1303
    %v1305 = vmul.f32 %v1300, %v1304
    %v1306 = vpack.c.bf16 %v1305, %v1305
    %v1308 = vsel %vm605, %v1306, 0
    %v1311 = vsel %vm621, %v1248, 0
    %1313 = vmatprep.subr.bf16.mxu0 0
    %1314 = vmatpush1.bf16.msra.mxu0 %v1311
    %1315 = vmatprep.subr.bf16.mxu0 0
    %1316 = vmatpush1.bf16.msra.mxu0 0
    %1317 = vmatprep.subr.bf16.mxu0 0
    %1318 = vmatpush1.bf16.msra.mxu0 0
    %1319 = vmatprep.subr.bf16.mxu0 0
    %1320 = vmatpush1.bf16.msra.mxu0 0
    %1321 = vmatprep.subr.bf16.mxu0 0
    %1322 = vmatpush1.bf16.msra.mxu0 0
    %1323 = vmatprep.subr.bf16.mxu0 0
    %1324 = vmatpush1.bf16.msra.mxu0 0
    %1325 = vmatprep.subr.bf16.mxu0 0
    %1326 = vmatpush1.bf16.msra.mxu0 0
    %1327 = vmatprep.subr.bf16.mxu0 0
    %1328 = vmatpush1.bf16.msra.mxu0 0
    %1329 = vmatprep.subr.bf16.mxu0 0
    %1330 = vmatpush1.bf16.msra.mxu0 0
    %1331 = vmatprep.subr.bf16.mxu0 0
    %1332 = vmatpush1.bf16.msra.mxu0 0
    %1333 = vmatprep.subr.bf16.mxu0 0
    %1334 = vmatpush1.bf16.msra.mxu0 0
    %1335 = vmatprep.subr.bf16.mxu0 0
    %1336 = vmatpush1.bf16.msra.mxu0 0
    %1337 = vmatprep.subr.bf16.mxu0 0
    %1338 = vmatpush1.bf16.msra.mxu0 0
    %1339 = vmatprep.subr.bf16.mxu0 0
    %1340 = vmatpush1.bf16.msra.mxu0 0
    %1341 = vmatprep.subr.bf16.mxu0 0
    %1342 = vmatpush1.bf16.msra.mxu0 0
    %1343 = vmatprep.subr.bf16.mxu0 0
    %1344 = vmatpush1.bf16.msra.mxu0 0
    %1345 = vmatprep.mubr.bf16.mxu0 0
    %1346 = vmatmul.mubr.bf16.gmra.mrb[0].mxu0 %v1308
    %v1347 = vpop.f32.mrb[0].mxu0
    %v1348 = vadd.f32 0.0, %v1347
    %v1349 = vpop.f32.mrb[0].mxu0
    %v1350 = vpop.f32.mrb[0].mxu0
    %v1351 = vpop.f32.mrb[0].mxu0
    %1352 = vdwg.mxu0
    %1354 = vrot.lane.b32.xlu0 %v1246, 112
    %v1355 = vpop.permute.xlu0 %1354
    %1357 = vrot.lane.b32.xlu0 %v1247, 112
    %v1358 = vpop.permute.xlu0 %1357
    %v1360 = vsel %vm558, %v1355, 0
    %v1363 = vsel %vm558, %v1358, 0
    %1365 = vmatprep.subr.bf16.mxu0 0
    %1366 = vmatpush1.bf16.xpose.msra.mxu0 %v1363
    %1367 = vmatprep.subr.bf16.mxu0 0
    %1368 = vmatpush1.bf16.xpose.msra.mxu0 0
    %1369 = vmatprep.subr.bf16.mxu0 0
    %1370 = vmatpush1.bf16.xpose.msra.mxu0 0
    %1371 = vmatprep.subr.bf16.mxu0 0
    %1372 = vmatpush1.bf16.xpose.msra.mxu0 0
    %1373 = vmatprep.subr.bf16.mxu0 0
    %1374 = vmatpush1.bf16.xpose.msra.mxu0 0
    %1375 = vmatprep.subr.bf16.mxu0 0
    %1376 = vmatpush1.bf16.xpose.msra.mxu0 0
    %1377 = vmatprep.subr.bf16.mxu0 0
    %1378 = vmatpush1.bf16.xpose.msra.mxu0 0
    %1379 = vmatprep.subr.bf16.mxu0 0
    %1380 = vmatpush1.bf16.xpose.msra.mxu0 0
    %1381 = vmatprep.subr.bf16.mxu0 0
    %1382 = vmatpush1.bf16.xpose.msra.mxu0 0
    %1383 = vmatprep.subr.bf16.mxu0 0
    %1384 = vmatpush1.bf16.xpose.msra.mxu0 0
    %1385 = vmatprep.subr.bf16.mxu0 0
    %1386 = vmatpush1.bf16.xpose.msra.mxu0 0
    %1387 = vmatprep.subr.bf16.mxu0 0
    %1388 = vmatpush1.bf16.xpose.msra.mxu0 0
    %1389 = vmatprep.subr.bf16.mxu0 0
    %1390 = vmatpush1.bf16.xpose.msra.mxu0 0
    %1391 = vmatprep.subr.bf16.mxu0 0
    %1392 = vmatpush1.bf16.xpose.msra.mxu0 0
    %1393 = vmatprep.subr.bf16.mxu0 0
    %1394 = vmatpush1.bf16.xpose.msra.mxu0 0
    %1395 = vmatprep.subr.bf16.mxu0 0
    %1396 = vmatpush1.bf16.xpose.msra.mxu0 0
    %1397 = vmatprep.mubr.bf16.mxu0 0
    %1398 = vmatmul.mubr.bf16.gmra.mrb[0].mxu0 %v1360
    %v1399 = vpop.f32.mrb[0].mxu0
    %v1400 = vadd.f32 0.0, %v1399
    %v1401 = vpop.f32.mrb[0].mxu0
    %v1402 = vpop.f32.mrb[0].mxu0
    %v1403 = vpop.f32.mrb[0].mxu0
    %1404 = vdwg.mxu0
    %v1405 = vsel %vm605, %v1400, -inf
    %1406 = vmax.xlane.f32.xlu0 %v1405
    %v1407 = vpop.xlane.xlu0 %1406
    %v1408 = vsub.f32 %v1400, %v1407
    %v1409 = vmul.f32 %v1408, 1.442695
    %v1410 = vpow.pop %v1409
    %v1411 = vsel %vm605, %v1410, 0.0
    %1412 = vadd.xlane.f32.xlu0 %v1411
    %v1413 = vpop.xlane.xlu0 %1412
    %v1414 = vrcp.pop %v1413
    %v1415 = vmul.f32 %v1410, %v1414
    %v1416 = vpack.c.bf16 %v1415, %v1415
    %1418 = vrot.lane.b32.xlu0 %v1248, 112
    %v1419 = vpop.permute.xlu0 %1418
    %v1421 = vsel %vm605, %v1416, 0
    %v1424 = vsel %vm621, %v1419, 0
    %1426 = vmatprep.subr.bf16.mxu0 0
    %1427 = vmatpush1.bf16.msra.mxu0 %v1424
    %1428 = vmatprep.subr.bf16.mxu0 0
    %1429 = vmatpush1.bf16.msra.mxu0 0
    %1430 = vmatprep.subr.bf16.mxu0 0
    %1431 = vmatpush1.bf16.msra.mxu0 0
    %1432 = vmatprep.subr.bf16.mxu0 0
    %1433 = vmatpush1.bf16.msra.mxu0 0
    %1434 = vmatprep.subr.bf16.mxu0 0
    %1435 = vmatpush1.bf16.msra.mxu0 0
    %1436 = vmatprep.subr.bf16.mxu0 0
    %1437 = vmatpush1.bf16.msra.mxu0 0
    %1438 = vmatprep.subr.bf16.mxu0 0
    %1439 = vmatpush1.bf16.msra.mxu0 0
    %1440 = vmatprep.subr.bf16.mxu0 0
    %1441 = vmatpush1.bf16.msra.mxu0 0
    %1442 = vmatprep.subr.bf16.mxu0 0
    %1443 = vmatpush1.bf16.msra.mxu0 0
    %1444 = vmatprep.subr.bf16.mxu0 0
    %1445 = vmatpush1.bf16.msra.mxu0 0
    %1446 = vmatprep.subr.bf16.mxu0 0
    %1447 = vmatpush1.bf16.msra.mxu0 0
    %1448 = vmatprep.subr.bf16.mxu0 0
    %1449 = vmatpush1.bf16.msra.mxu0 0
    %1450 = vmatprep.subr.bf16.mxu0 0
    %1451 = vmatpush1.bf16.msra.mxu0 0
    %1452 = vmatprep.subr.bf16.mxu0 0
    %1453 = vmatpush1.bf16.msra.mxu0 0
    %1454 = vmatprep.subr.bf16.mxu0 0
    %1455 = vmatpush1.bf16.msra.mxu0 0
    %1456 = vmatprep.subr.bf16.mxu0 0
    %1457 = vmatpush1.bf16.msra.mxu0 0
    %1458 = vmatprep.mubr.bf16.mxu0 0
    %1459 = vmatmul.mubr.bf16.gmra.mrb[0].mxu0 %v1421
    %v1460 = vpop.f32.mrb[0].mxu0
    %v1461 = vadd.f32 0.0, %v1460
    %v1462 = vpop.f32.mrb[0].mxu0
    %v1463 = vpop.f32.mrb[0].mxu0
    %v1464 = vpop.f32.mrb[0].mxu0
    %1465 = vdwg.mxu0
    %1467 = vrot.lane.b32.xlu0 %v1461, 16
    %v1468 = vpop.permute.xlu0 %1467
    %v1470 = vsel %vm558, %v1348, %v1468
    %v1471 = vpack.c.bf16 %v487, %v487
    %v1472 = vpack.c.bf16 %v1179, %v1179
    %v1473 = vpack.c.bf16 %v1243, %v1243
    %v1475 = vsel %vm558, %v1471, 0
    %v1478 = vsel %vm558, %v1472, 0
    %1480 = vmatprep.subr.bf16.mxu0 0
    %1481 = vmatpush1.bf16.xpose.msra.mxu0 %v1478
    %1482 = vmatprep.subr.bf16.mxu0 0
    %1483 = vmatpush1.bf16.xpose.msra.mxu0 0
    %1484 = vmatprep.subr.bf16.mxu0 0
    %1485 = vmatpush1.bf16.xpose.msra.mxu0 0
    %1486 = vmatprep.subr.bf16.mxu0 0
    %1487 = vmatpush1.bf16.xpose.msra.mxu0 0
    %1488 = vmatprep.subr.bf16.mxu0 0
    %1489 = vmatpush1.bf16.xpose.msra.mxu0 0
    %1490 = vmatprep.subr.bf16.mxu0 0
    %1491 = vmatpush1.bf16.xpose.msra.mxu0 0
    %1492 = vmatprep.subr.bf16.mxu0 0
    %1493 = vmatpush1.bf16.xpose.msra.mxu0 0
    %1494 = vmatprep.subr.bf16.mxu0 0
    %1495 = vmatpush1.bf16.xpose.msra.mxu0 0
    %1496 = vmatprep.subr.bf16.mxu0 0
    %1497 = vmatpush1.bf16.xpose.msra.mxu0 0
    %1498 = vmatprep.subr.bf16.mxu0 0
    %1499 = vmatpush1.bf16.xpose.msra.mxu0 0
    %1500 = vmatprep.subr.bf16.mxu0 0
    %1501 = vmatpush1.bf16.xpose.msra.mxu0 0
    %1502 = vmatprep.subr.bf16.mxu0 0
    %1503 = vmatpush1.bf16.xpose.msra.mxu0 0
    %1504 = vmatprep.subr.bf16.mxu0 0
    %1505 = vmatpush1.bf16.xpose.msra.mxu0 0
    %1506 = vmatprep.subr.bf16.mxu0 0
    %1507 = vmatpush1.bf16.xpose.msra.mxu0 0
    %1508 = vmatprep.subr.bf16.mxu0 0
    %1509 = vmatpush1.bf16.xpose.msra.mxu0 0
    %1510 = vmatprep.subr.bf16.mxu0 0
    %1511 = vmatpush1.bf16.xpose.msra.mxu0 0
    %1512 = vmatprep.mubr.bf16.mxu0 0
    %1513 = vmatmul.mubr.bf16.gmra.mrb[0].mxu0 %v1475
    %v1514 = vpop.f32.mrb[0].mxu0
    %v1515 = vadd.f32 0.0, %v1514
    %v1516 = vpop.f32.mrb[0].mxu0
    %v1517 = vpop.f32.mrb[0].mxu0
    %v1518 = vpop.f32.mrb[0].mxu0
    %1519 = vdwg.mxu0
    %v1520 = vsel %vm605, %v1515, -inf
    %1521 = vmax.xlane.f32.xlu0 %v1520
    %v1522 = vpop.xlane.xlu0 %1521
    %v1523 = vsub.f32 %v1515, %v1522
    %v1524 = vmul.f32 %v1523, 1.442695
    %v1525 = vpow.pop %v1524
    %v1526 = vsel %vm605, %v1525, 0.0
    %1527 = vadd.xlane.f32.xlu0 %v1526
    %v1528 = vpop.xlane.xlu0 %1527
    %v1529 = vrcp.pop %v1528
    %v1530 = vmul.f32 %v1525, %v1529
    %v1531 = vpack.c.bf16 %v1530, %v1530
    %v1533 = vsel %vm605, %v1531, 0
    %v1536 = vsel %vm621, %v1473, 0
    %1538 = vmatprep.subr.bf16.mxu0 0
    %1539 = vmatpush1.bf16.msra.mxu0 %v1536
    %1540 = vmatprep.subr.bf16.mxu0 0
    %1541 = vmatpush1.bf16.msra.mxu0 0
    %1542 = vmatprep.subr.bf16.mxu0 0
    %1543 = vmatpush1.bf16.msra.mxu0 0
    %1544 = vmatprep.subr.bf16.mxu0 0
    %1545 = vmatpush1.bf16.msra.mxu0 0
    %1546 = vmatprep.subr.bf16.mxu0 0
    %1547 = vmatpush1.bf16.msra.mxu0 0
    %1548 = vmatprep.subr.bf16.mxu0 0
    %1549 = vmatpush1.bf16.msra.mxu0 0
    %1550 = vmatprep.subr.bf16.mxu0 0
    %1551 = vmatpush1.bf16.msra.mxu0 0
    %1552 = vmatprep.subr.bf16.mxu0 0
    %1553 = vmatpush1.bf16.msra.mxu0 0
    %1554 = vmatprep.subr.bf16.mxu0 0
    %1555 = vmatpush1.bf16.msra.mxu0 0
    %1556 = vmatprep.subr.bf16.mxu0 0
    %1557 = vmatpush1.bf16.msra.mxu0 0
    %1558 = vmatprep.subr.bf16.mxu0 0
    %1559 = vmatpush1.bf16.msra.mxu0 0
    %1560 = vmatprep.subr.bf16.mxu0 0
    %1561 = vmatpush1.bf16.msra.mxu0 0
    %1562 = vmatprep.subr.bf16.mxu0 0
    %1563 = vmatpush1.bf16.msra.mxu0 0
    %1564 = vmatprep.subr.bf16.mxu0 0
    %1565 = vmatpush1.bf16.msra.mxu0 0
    %1566 = vmatprep.subr.bf16.mxu0 0
    %1567 = vmatpush1.bf16.msra.mxu0 0
    %1568 = vmatprep.subr.bf16.mxu0 0
    %1569 = vmatpush1.bf16.msra.mxu0 0
    %1570 = vmatprep.mubr.bf16.mxu0 0
    %1571 = vmatmul.mubr.bf16.gmra.mrb[0].mxu0 %v1533
    %v1572 = vpop.f32.mrb[0].mxu0
    %v1573 = vadd.f32 0.0, %v1572
    %v1574 = vpop.f32.mrb[0].mxu0
    %v1575 = vpop.f32.mrb[0].mxu0
    %v1576 = vpop.f32.mrb[0].mxu0
    %1577 = vdwg.mxu0
    %1579 = vrot.lane.b32.xlu0 %v1471, 112
    %v1580 = vpop.permute.xlu0 %1579
    %1582 = vrot.lane.b32.xlu0 %v1472, 112
    %v1583 = vpop.permute.xlu0 %1582
    %v1585 = vsel %vm558, %v1580, 0
    %v1588 = vsel %vm558, %v1583, 0
    %1590 = vmatprep.subr.bf16.mxu0 0
    %1591 = vmatpush1.bf16.xpose.msra.mxu0 %v1588
    %1592 = vmatprep.subr.bf16.mxu0 0
    %1593 = vmatpush1.bf16.xpose.msra.mxu0 0
    %1594 = vmatprep.subr.bf16.mxu0 0
    %1595 = vmatpush1.bf16.xpose.msra.mxu0 0
    %1596 = vmatprep.subr.bf16.mxu0 0
    %1597 = vmatpush1.bf16.xpose.msra.mxu0 0
    %1598 = vmatprep.subr.bf16.mxu0 0
    %1599 = vmatpush1.bf16.xpose.msra.mxu0 0
    %1600 = vmatprep.subr.bf16.mxu0 0
    %1601 = vmatpush1.bf16.xpose.msra.mxu0 0
    %1602 = vmatprep.subr.bf16.mxu0 0
    %1603 = vmatpush1.bf16.xpose.msra.mxu0 0
    %1604 = vmatprep.subr.bf16.mxu0 0
    %1605 = vmatpush1.bf16.xpose.msra.mxu0 0
    %1606 = vmatprep.subr.bf16.mxu0 0
    %1607 = vmatpush1.bf16.xpose.msra.mxu0 0
    %1608 = vmatprep.subr.bf16.mxu0 0
    %1609 = vmatpush1.bf16.xpose.msra.mxu0 0
    %1610 = vmatprep.subr.bf16.mxu0 0
    %1611 = vmatpush1.bf16.xpose.msra.mxu0 0
    %1612 = vmatprep.subr.bf16.mxu0 0
    %1613 = vmatpush1.bf16.xpose.msra.mxu0 0
    %1614 = vmatprep.subr.bf16.mxu0 0
    %1615 = vmatpush1.bf16.xpose.msra.mxu0 0
    %1616 = vmatprep.subr.bf16.mxu0 0
    %1617 = vmatpush1.bf16.xpose.msra.mxu0 0
    %1618 = vmatprep.subr.bf16.mxu0 0
    %1619 = vmatpush1.bf16.xpose.msra.mxu0 0
    %1620 = vmatprep.subr.bf16.mxu0 0
    %1621 = vmatpush1.bf16.xpose.msra.mxu0 0
    %1622 = vmatprep.mubr.bf16.mxu0 0
    %1623 = vmatmul.mubr.bf16.gmra.mrb[0].mxu0 %v1585
    %v1624 = vpop.f32.mrb[0].mxu0
    %v1625 = vadd.f32 0.0, %v1624
    %v1626 = vpop.f32.mrb[0].mxu0
    %v1627 = vpop.f32.mrb[0].mxu0
    %v1628 = vpop.f32.mrb[0].mxu0
    %1629 = vdwg.mxu0
    %v1630 = vsel %vm605, %v1625, -inf
    %1631 = vmax.xlane.f32.xlu0 %v1630
    %v1632 = vpop.xlane.xlu0 %1631
    %v1633 = vsub.f32 %v1625, %v1632
    %v1634 = vmul.f32 %v1633, 1.442695
    %v1635 = vpow.pop %v1634
    %v1636 = vsel %vm605, %v1635, 0.0
    %1637 = vadd.xlane.f32.xlu0 %v1636
    %v1638 = vpop.xlane.xlu0 %1637
    %v1639 = vrcp.pop %v1638
    %v1640 = vmul.f32 %v1635, %v1639
    %v1641 = vpack.c.bf16 %v1640, %v1640
    %1643 = vrot.lane.b32.xlu0 %v1473, 112
    %v1644 = vpop.permute.xlu0 %1643
    %v1646 = vsel %vm605, %v1641, 0
    %v1649 = vsel %vm621, %v1644, 0
    %1651 = vmatprep.subr.bf16.mxu0 0
    %1652 = vmatpush1.bf16.msra.mxu0 %v1649
    %1653 = vmatprep.subr.bf16.mxu0 0
    %1654 = vmatpush1.bf16.msra.mxu0 0
    %1655 = vmatprep.subr.bf16.mxu0 0
    %1656 = vmatpush1.bf16.msra.mxu0 0
    %1657 = vmatprep.subr.bf16.mxu0 0
    %1658 = vmatpush1.bf16.msra.mxu0 0
    %1659 = vmatprep.subr.bf16.mxu0 0
    %1660 = vmatpush1.bf16.msra.mxu0 0
    %1661 = vmatprep.subr.bf16.mxu0 0
    %1662 = vmatpush1.bf16.msra.mxu0 0
    %1663 = vmatprep.subr.bf16.mxu0 0
    %1664 = vmatpush1.bf16.msra.mxu0 0
    %1665 = vmatprep.subr.bf16.mxu0 0
    %1666 = vmatpush1.bf16.msra.mxu0 0
    %1667 = vmatprep.subr.bf16.mxu0 0
    %1668 = vmatpush1.bf16.msra.mxu0 0
    %1669 = vmatprep.subr.bf16.mxu0 0
    %1670 = vmatpush1.bf16.msra.mxu0 0
    %1671 = vmatprep.subr.bf16.mxu0 0
    %1672 = vmatpush1.bf16.msra.mxu0 0
    %1673 = vmatprep.subr.bf16.mxu0 0
    %1674 = vmatpush1.bf16.msra.mxu0 0
    %1675 = vmatprep.subr.bf16.mxu0 0
    %1676 = vmatpush1.bf16.msra.mxu0 0
    %1677 = vmatprep.subr.bf16.mxu0 0
    %1678 = vmatpush1.bf16.msra.mxu0 0
    %1679 = vmatprep.subr.bf16.mxu0 0
    %1680 = vmatpush1.bf16.msra.mxu0 0
    %1681 = vmatprep.subr.bf16.mxu0 0
    %1682 = vmatpush1.bf16.msra.mxu0 0
    %1683 = vmatprep.mubr.bf16.mxu0 0
    %1684 = vmatmul.mubr.bf16.gmra.mrb[0].mxu0 %v1646
    %v1685 = vpop.f32.mrb[0].mxu0
    %v1686 = vadd.f32 0.0, %v1685
    %v1687 = vpop.f32.mrb[0].mxu0
    %v1688 = vpop.f32.mrb[0].mxu0
    %v1689 = vpop.f32.mrb[0].mxu0
    %1690 = vdwg.mxu0
    %1692 = vrot.lane.b32.xlu0 %v1686, 16
    %v1693 = vpop.permute.xlu0 %1692
    %v1695 = vsel %vm558, %v1573, %v1693
    %v1696 = vpack.c.bf16 %v1695, %v1470
    %v1697 = vld [vmem:[#allocation20] sm:$0xf]
    %v1698 = vld [vmem:[#allocation20 + $0x4] sm:$0xf]
    %v1699 = vld [vmem:[#allocation20 + $0x8] sm:$0xf]
    %v1700 = vld [vmem:[#allocation20 + $0xc] sm:$0xf]
    %v1701 = vld [vmem:[#allocation22] sm:$0x1]
    %v1703 = vlaneseq
    %v1704 = vshrl.u32 %v1703, 7
    %v1705 = vsub.s32 0, %v1704
    %v1706 = vrot.slane %v1701, %v1705
    %v1712 = vunpack.c.l.b16 %v1697
    %v1713 = vunpack.c.l.b16 %v1698
    %v1714 = vunpack.c.l.b16 %v1699
    %v1715 = vunpack.c.l.b16 %v1700
    %v1716 = vpack.c.b16 %v1713, %v1712
    %v1717 = vpack.c.b16 %v1715, %v1714
    %v1721 = vsel %vm313, %v1696, 0
    %1723 = vmatprep.subr.bf16.mxu0 0
    %1724 = vmatpush1.bf16.msra.mxu0 %v1716
    %1725 = vmatprep.subr.bf16.mxu0 0
    %1726 = vmatpush1.bf16.msra.mxu0 %v1717
    %1727 = vmatprep.subr.bf16.mxu0 0
    %1728 = vmatpush1.bf16.msra.mxu0 0
    %1729 = vmatprep.subr.bf16.mxu0 0
    %1730 = vmatpush1.bf16.msra.mxu0 0
    %1731 = vmatprep.subr.bf16.mxu0 0
    %1732 = vmatpush1.bf16.msra.mxu0 0
    %1733 = vmatprep.subr.bf16.mxu0 0
    %1734 = vmatpush1.bf16.msra.mxu0 0
    %1735 = vmatprep.subr.bf16.mxu0 0
    %1736 = vmatpush1.bf16.msra.mxu0 0
    %1737 = vmatprep.subr.bf16.mxu0 0
    %1738 = vmatpush1.bf16.msra.mxu0 0
    %1739 = vmatprep.subr.bf16.mxu0 0
    %1740 = vmatpush1.bf16.msra.mxu0 0
    %1741 = vmatprep.subr.bf16.mxu0 0
    %1742 = vmatpush1.bf16.msra.mxu0 0
    %1743 = vmatprep.subr.bf16.mxu0 0
    %1744 = vmatpush1.bf16.msra.mxu0 0
    %1745 = vmatprep.subr.bf16.mxu0 0
    %1746 = vmatpush1.bf16.msra.mxu0 0
    %1747 = vmatprep.subr.bf16.mxu0 0
    %1748 = vmatpush1.bf16.msra.mxu0 0
    %1749 = vmatprep.subr.bf16.mxu0 0
    %1750 = vmatpush1.bf16.msra.mxu0 0
    %1751 = vmatprep.subr.bf16.mxu0 0
    %1752 = vmatpush1.bf16.msra.mxu0 0
    %1753 = vmatprep.subr.bf16.mxu0 0
    %1754 = vmatpush1.bf16.msra.mxu0 0
    %1755 = vmatprep.mubr.bf16.mxu0 0
    %1756 = vmatmul.mubr.bf16.gmra.mrb[0].mxu0 %v1721
    %v1757 = vpop.f32.mrb[0].mxu0
    %v1758 = vadd.f32 %v1706, %v1757
    %v1759 = vpop.f32.mrb[0].mxu0
    %v1760 = vpop.f32.mrb[0].mxu0
    %v1761 = vadd.f32 %v1706, %v1760
    %v1762 = vpop.f32.mrb[0].mxu0
    %1763 = vdwg.mxu0
    %v1764 = vunpack.c.l.bf16 %v282
    %v1765 = vunpack.c.l.bf16 %v283
    %v1766 = vadd.f32 %v1764, %v1758
    %v1767 = vadd.f32 %v1765, %v1761
    %v1768 = vld [vmem:[%s41] sm:$0x1]
    %v1769 = vld [vmem:[%s43] sm:$0x1]
    %v1770 = vsel %vm313, %v1766, 0.0
    %1771 = vadd.xlane.f32.xlu0 %v1770
    %v1772 = vpop.xlane.xlu0 %1771
    %v1773 = vsel %vm313, %v1767, 0.0
    %1774 = vadd.xlane.f32.xlu0 %v1773
    %v1775 = vpop.xlane.xlu0 %1774
    %v1776 = vmul.f32 %v1772, %v1077
    %v1777 = vmul.f32 %v1775, %v1077
    %v1778 = vsub.f32 %v1766, %v1776
    %v1779 = vsub.f32 %v1767, %v1777
    %v1780 = vmul.f32 %v1778, %v1778
    %v1781 = vmul.f32 %v1779, %v1779
    %v1782 = vsel %vm313, %v1780, 0.0
    %1783 = vadd.xlane.f32.xlu0 %v1782
    %v1784 = vpop.xlane.xlu0 %1783
    %v1785 = vsel %vm313, %v1781, 0.0
    %1786 = vadd.xlane.f32.xlu0 %v1785
    %v1787 = vpop.xlane.xlu0 %1786
    %v1788 = vmul.f32 %v1784, %v1077
    %v1789 = vmul.f32 %v1787, %v1077
    %v1790 = vadd.f32 %v1788, 1e-05
    %v1791 = vadd.f32 %v1789, 1e-05
    %v1792 = vrsqrt.pop %v1790
    %v1793 = vrsqrt.pop %v1791
    %v1794 = vmul.f32 %v1778, %v1792
    %v1795 = vmul.f32 %v1779, %v1793
    %v1797 = vlaneseq
    %v1798 = vshrl.u32 %v1797, 7
    %v1799 = vsub.s32 0, %v1798
    %v1800 = vrot.slane %v1768, %v1799
    %v1802 = vmul.f32 %v1794, %v1800
    %v1803 = vmul.f32 %v1795, %v1800
    %v1805 = vlaneseq
    %v1806 = vshrl.u32 %v1805, 7
    %v1807 = vsub.s32 0, %v1806
    %v1808 = vrot.slane %v1769, %v1807
    %v1810 = vadd.f32 %v1802, %v1808
    %v1811 = vadd.f32 %v1803, %v1808
    %v1812 = vpack.c.bf16 %v1811, %v1810
    %v1813 = vld [vmem:[%s45] sm:$0xf]
    %v1814 = vld [vmem:[%s45 + $0x4] sm:$0xf]
    %v1815 = vld [vmem:[%s45 + $0x8] sm:$0xf]
    %v1816 = vld [vmem:[%s45 + $0xc] sm:$0xf]
    %v1817 = vld [vmem:[%s47] sm:$0x1]
    %v1819 = vlaneseq
    %v1820 = vshrl.u32 %v1819, 7
    %v1821 = vsub.s32 0, %v1820
    %v1822 = vrot.slane %v1817, %v1821
    %v1828 = vunpack.c.l.b16 %v1813
    %v1829 = vunpack.c.l.b16 %v1814
    %v1830 = vunpack.c.l.b16 %v1815
    %v1831 = vunpack.c.l.b16 %v1816
    %v1832 = vpack.c.b16 %v1829, %v1828
    %v1833 = vpack.c.b16 %v1831, %v1830
    %v1837 = vsel %vm313, %v1812, 0
    %1839 = vmatprep.subr.bf16.mxu0 0
    %1840 = vmatpush1.bf16.msra.mxu0 %v1832
    %1841 = vmatprep.subr.bf16.mxu0 0
    %1842 = vmatpush1.bf16.msra.mxu0 %v1833
    %1843 = vmatprep.subr.bf16.mxu0 0
    %1844 = vmatpush1.bf16.msra.mxu0 0
    %1845 = vmatprep.subr.bf16.mxu0 0
    %1846 = vmatpush1.bf16.msra.mxu0 0
    %1847 = vmatprep.subr.bf16.mxu0 0
    %1848 = vmatpush1.bf16.msra.mxu0 0
    %1849 = vmatprep.subr.bf16.mxu0 0
    %1850 = vmatpush1.bf16.msra.mxu0 0
    %1851 = vmatprep.subr.bf16.mxu0 0
    %1852 = vmatpush1.bf16.msra.mxu0 0
    %1853 = vmatprep.subr.bf16.mxu0 0
    %1854 = vmatpush1.bf16.msra.mxu0 0
    %1855 = vmatprep.subr.bf16.mxu0 0
    %1856 = vmatpush1.bf16.msra.mxu0 0
    %1857 = vmatprep.subr.bf16.mxu0 0
    %1858 = vmatpush1.bf16.msra.mxu0 0
    %1859 = vmatprep.subr.bf16.mxu0 0
    %1860 = vmatpush1.bf16.msra.mxu0 0
    %1861 = vmatprep.subr.bf16.mxu0 0
    %1862 = vmatpush1.bf16.msra.mxu0 0
    %1863 = vmatprep.subr.bf16.mxu0 0
    %1864 = vmatpush1.bf16.msra.mxu0 0
    %1865 = vmatprep.subr.bf16.mxu0 0
    %1866 = vmatpush1.bf16.msra.mxu0 0
    %1867 = vmatprep.subr.bf16.mxu0 0
    %1868 = vmatpush1.bf16.msra.mxu0 0
    %1869 = vmatprep.subr.bf16.mxu0 0
    %1870 = vmatpush1.bf16.msra.mxu0 0
    %1871 = vmatprep.mubr.bf16.mxu0 0
    %1872 = vmatmul.mubr.bf16.gmra.mrb[0].mxu0 %v1837
    %v1873 = vpop.f32.mrb[0].mxu0
    %v1874 = vadd.f32 %v1822, %v1873
    %v1875 = vpop.f32.mrb[0].mxu0
    %v1876 = vpop.f32.mrb[0].mxu0
    %v1877 = vadd.f32 %v1822, %v1876
    %v1878 = vpop.f32.mrb[0].mxu0
    %1879 = vdwg.mxu0
    %v1880 = vmax.f32 %v1874, 0.0
    %v1881 = vmax.f32 %v1877, 0.0
    %v1882 = vpack.c.bf16 %v1881, %v1880
    %v1883 = vld [vmem:[%s49] sm:$0xf]
    %v1884 = vld [vmem:[%s49 + $0x4] sm:$0xf]
    %v1885 = vld [vmem:[%s49 + $0x8] sm:$0xf]
    %v1886 = vld [vmem:[%s49 + $0xc] sm:$0xf]
    %v1887 = vld [vmem:[%s49 + $0x10] sm:$0xf]
    %v1888 = vld [vmem:[%s49 + $0x14] sm:$0xf]
    %v1889 = vld [vmem:[%s49 + $0x18] sm:$0xf]
    %v1890 = vld [vmem:[%s49 + $0x1c] sm:$0xf]
    %v1891 = vld [vmem:[%s51] sm:$0x1]
    %v1893 = vlaneseq
    %v1894 = vshrl.u32 %v1893, 7
    %v1895 = vsub.s32 0, %v1894
    %v1896 = vrot.slane %v1891, %v1895
    %v1906 = vunpack.c.l.b16 %v1883
    %v1907 = vunpack.c.l.b16 %v1884
    %v1908 = vunpack.c.l.b16 %v1885
    %v1909 = vunpack.c.l.b16 %v1886
    %v1910 = vunpack.c.l.b16 %v1887
    %v1911 = vunpack.c.l.b16 %v1888
    %v1912 = vunpack.c.l.b16 %v1889
    %v1913 = vunpack.c.l.b16 %v1890
    %v1914 = vpack.c.b16 %v1907, %v1906
    %v1915 = vpack.c.b16 %v1909, %v1908
    %v1916 = vpack.c.b16 %v1911, %v1910
    %v1917 = vpack.c.b16 %v1913, %v1912
    %vm1922 = vcmask 523264
    %v1924 = vsel %vm1922, %v1882, 0
    %1926 = vmatprep.subr.bf16.mxu0 0
    %1927 = vmatpush1.bf16.msra.mxu0 %v1914
    %1928 = vmatprep.subr.bf16.mxu0 0
    %1929 = vmatpush1.bf16.msra.mxu0 %v1915
    %1930 = vmatprep.subr.bf16.mxu0 0
    %1931 = vmatpush1.bf16.msra.mxu0 %v1916
    %1932 = vmatprep.subr.bf16.mxu0 0
    %1933 = vmatpush1.bf16.msra.mxu0 %v1917
    %1934 = vmatprep.subr.bf16.mxu0 0
    %1935 = vmatpush1.bf16.msra.mxu0 0
    %1936 = vmatprep.subr.bf16.mxu0 0
    %1937 = vmatpush1.bf16.msra.mxu0 0
    %1938 = vmatprep.subr.bf16.mxu0 0
    %1939 = vmatpush1.bf16.msra.mxu0 0
    %1940 = vmatprep.subr.bf16.mxu0 0
    %1941 = vmatpush1.bf16.msra.mxu0 0
    %1942 = vmatprep.subr.bf16.mxu0 0
    %1943 = vmatpush1.bf16.msra.mxu0 0
    %1944 = vmatprep.subr.bf16.mxu0 0
    %1945 = vmatpush1.bf16.msra.mxu0 0
    %1946 = vmatprep.subr.bf16.mxu0 0
    %1947 = vmatpush1.bf16.msra.mxu0 0
    %1948 = vmatprep.subr.bf16.mxu0 0
    %1949 = vmatpush1.bf16.msra.mxu0 0
    %1950 = vmatprep.subr.bf16.mxu0 0
    %1951 = vmatpush1.bf16.msra.mxu0 0
    %1952 = vmatprep.subr.bf16.mxu0 0
    %1953 = vmatpush1.bf16.msra.mxu0 0
    %1954 = vmatprep.subr.bf16.mxu0 0
    %1955 = vmatpush1.bf16.msra.mxu0 0
    %1956 = vmatprep.subr.bf16.mxu0 0
    %1957 = vmatpush1.bf16.msra.mxu0 0
    %1958 = vmatprep.mubr.bf16.mxu0 0
    %1959 = vmatmul.mubr.bf16.gmra.mrb[0].mxu0 %v1924
    %v1960 = vpop.f32.mrb[0].mxu0
    %v1961 = vadd.f32 %v1896, %v1960
    %v1962 = vpop.f32.mrb[0].mxu0
    %v1963 = vpop.f32.mrb[0].mxu0
    %v1964 = vadd.f32 %v1896, %v1963
    %v1965 = vpop.f32.mrb[0].mxu0
    %1966 = vdwg.mxu0
    %v1967 = vadd.f32 %v1810, %v1961
    %v1968 = vadd.f32 %v1811, %v1964
    %v1969 = vld [vmem:[%s53] sm:$0x1]
    %v1970 = vld [vmem:[%s55] sm:$0x1]
    %v1971 = vsel %vm313, %v1967, 0.0
    %1972 = vadd.xlane.f32.xlu0 %v1971
    %v1973 = vpop.xlane.xlu0 %1972
    %v1974 = vsel %vm313, %v1968, 0.0
    %1975 = vadd.xlane.f32.xlu0 %v1974
    %v1976 = vpop.xlane.xlu0 %1975
    %v1977 = vmul.f32 %v1973, %v1077
    %v1978 = vmul.f32 %v1976, %v1077
    %v1979 = vsub.f32 %v1967, %v1977
    %v1980 = vsub.f32 %v1968, %v1978
    %v1981 = vmul.f32 %v1979, %v1979
    %v1982 = vmul.f32 %v1980, %v1980
    %v1983 = vsel %vm313, %v1981, 0.0
    %1984 = vadd.xlane.f32.xlu0 %v1983
    %v1985 = vpop.xlane.xlu0 %1984
    %v1986 = vsel %vm313, %v1982, 0.0
    %1987 = vadd.xlane.f32.xlu0 %v1986
    %v1988 = vpop.xlane.xlu0 %1987
    %v1989 = vmul.f32 %v1985, %v1077
    %v1990 = vmul.f32 %v1988, %v1077
    %v1991 = vadd.f32 %v1989, 1e-05
    %v1992 = vadd.f32 %v1990, 1e-05
    %v1993 = vrsqrt.pop %v1991
    %v1994 = vrsqrt.pop %v1992
    %v1995 = vmul.f32 %v1979, %v1993
    %v1996 = vmul.f32 %v1980, %v1994
    %v1998 = vlaneseq
    %v1999 = vshrl.u32 %v1998, 7
    %v2000 = vsub.s32 0, %v1999
    %v2001 = vrot.slane %v1969, %v2000
    %v2003 = vmul.f32 %v1995, %v2001
    %v2004 = vmul.f32 %v1996, %v2001
    %v2006 = vlaneseq
    %v2007 = vshrl.u32 %v2006, 7
    %v2008 = vsub.s32 0, %v2007
    %v2009 = vrot.slane %v1970, %v2008
    %v2011 = vadd.f32 %v2003, %v2009
    %v2012 = vadd.f32 %v2004, %v2009
    %v2013 = vpack.c.bf16 %v2012, %v2011
    %v2015 = vunpack.c.l.b16 %v2013
    %v2016 = vunpack.c.h.b16 %v2013
    %v2017 = vpack.c.b16 %v2015, %v2015
    %v2018 = vpack.c.b16 %v2016, %v2016
    %vm2021 = vcmask 257024
    %2022 = vst.msk [vmem:[#allocation23] sm:$0xf] %vm2021, %v2017
    %2023 = vst.msk [vmem:[#allocation23 + $0x4] sm:$0xf] %vm2021, %v2018
    %v2024 = vpack.c.bf16 %v1113, %v1112
    %v2026 = vunpack.c.l.b16 %v2024
    %v2027 = vunpack.c.h.b16 %v2024
    %v2028 = vpack.c.b16 %v2026, %v2026
    %v2029 = vpack.c.b16 %v2027, %v2027
    %2032 = vst.msk [vmem:[#allocation24] sm:$0xf] %vm2021, %v2028
    %2033 = vst.msk [vmem:[#allocation24 + $0x4] sm:$0xf] %vm2021, %v2029
    // Predicated region
    $region166: #{tpu_custom_call.1} parent=1 // pred_check
      _
    $region167: #{tpu_custom_call.1} parent=1 // pred_check_branch
      %2035 = sbr.rel (0) target = $region169
    $region168: #{tpu_custom_call.1} parent=1 // pred_region
      %s2037 = ssub.s32 128, 128
      %2038 = vsyncadd [#allocation4], %s2037
      %s2039 = sshll.u32 [#allocation23], 4
      %s2040 = int_to_ptr.vmem [resolvable:$true] %s2039
      %2045 = dma.vmem_to_hbm [thread:$0]  %s2040, 128, %s57, [#allocation4], 64, 64, 4
    $region169: #{tpu_custom_call.1} parent=1 // pred_fallthru
      _
    // Predicated region
    $region170: #{tpu_custom_call.1} parent=1 // pred_check
      _
    $region171: #{tpu_custom_call.1} parent=1 // pred_check_branch
      %2047 = sbr.rel (0) target = $region173
    $region172: #{tpu_custom_call.1} parent=1 // pred_region
      %s2049 = ssub.s32 128, 128
      %2050 = vsyncadd [#allocation25], %s2049
      %s2051 = sshll.u32 [#allocation24], 4
      %s2052 = int_to_ptr.vmem [resolvable:$true] %s2051
      %2057 = dma.vmem_to_hbm [thread:$0]  %s2052, 128, %s59, [#allocation25], 64, 64, 4
    $region173: #{tpu_custom_call.1} parent=1 // pred_fallthru
      _
    // Predicated region
    $region174: #{tpu_custom_call.1} parent=1 // pred_check
      _
    $region175: #{tpu_custom_call.1} parent=1 // pred_check_branch
      %2059 = sbr.rel (0) target = $region177
    $region176: #{tpu_custom_call.1} parent=1 // pred_region
      %2060 = dma.done [#allocation4], 128
    $region177: #{tpu_custom_call.1} parent=1 // pred_fallthru
      _
    // Predicated region
    $region178: #{tpu_custom_call.1} parent=1 // pred_check
      _
    $region179: #{tpu_custom_call.1} parent=1 // pred_check_branch
      %2062 = sbr.rel (0) target = $region181
    $region180: #{tpu_custom_call.1} parent=1 // pred_region
      %2063 = dma.done [#allocation25], 128
    $region181: #{tpu_custom_call.1} parent=1 // pred_fallthru
      _
    %2064 = vsyncpa [#allocation3], 1
    %2065 = vsyncpa [#allocation6], 1
    %2066 = vsyncpa [#allocation9], 1
    %2067 = vsyncpa [#allocation12], 1
    %2068 = vsyncpa [#allocation15], 1
    %2069 = vsyncpa [#allocation18], 1
    %2070 = vsyncpa [#allocation21], 1
    %2071 = vsyncpa [#allocation4], 1
    %2072 = vsyncpa [#allocation25], 1

</llo_original>
